<compile_context>
chip_gen: v7x
topology: tpu7x:2x2x1
jax: 0.10.0
libtpu: 0.0.40
codegen_flags: <defaults>
</compile_context>

<pallas_src>
import jax
import jax.numpy as jnp
from jax.experimental import pallas as pl
from jax.experimental.pallas import tpu as pltpu


def leaf_jet_classifier_kernel(
    jets_ref,   # (P, F, BT) bf16   per-particle features, batch in lanes
    pw_ref,     # (P, BT)    f32    pooling weights = mask / clamp(count, 1)
    we_t_ref,   # (H, F)     bf16   embedding weight (transposed)
    be_ref,     # (H, 1)     f32    embedding bias (column)
    w1_t_ref,   # (H, H)     bf16
    b1_ref,     # (H, 1)     f32
    w2_t_ref,   # (H, H)     bf16
    b2_ref,     # (H, 1)     f32
    w3_ref,     # (H, 1)     f32    final layer weight (column)
    b3_ref,     # (1, 1)     f32    scalar bias in SMEM
    out_ref,    # (1, 1, BT) f32    lane-dense output row
):
    num_p = jets_ref.shape[0]
    bt = jets_ref.shape[2]
    h_dim = w1_t_ref.shape[0]

    we_t = we_t_ref[...]          # resident, hoisted out of the particle loop
    be = be_ref[...]

    # --- transform: per-particle embedding + ReLU, fused with masked-mean ---
    # pooled[h, b] = sum_p pw[p, b] * relu(we^T @ jets[p] + be)[h, b]
    pooled = jnp.zeros((h_dim, bt), jnp.float32)
    for p in range(num_p):                       # static unroll (P small)
        h_p = jnp.dot(we_t, jets_ref[p],
                      preferred_element_type=jnp.float32)        # (H, BT) f32
        h_p = jnp.maximum(h_p + be, 0.0)
        pooled = pooled + pw_ref[p:p + 1, :] * h_p               # f32 accum

    # --- predictor: MLP classifier head (transposed, batch in lanes) --------
    h1 = jnp.maximum(
        jnp.dot(w1_t_ref[...], pooled.astype(jnp.bfloat16),
                preferred_element_type=jnp.float32) + b1_ref[...], 0.0)
    h2 = jnp.maximum(
        jnp.dot(w2_t_ref[...], h1.astype(jnp.bfloat16),
                preferred_element_type=jnp.float32) + b2_ref[...], 0.0)

    # final Linear(H, 1): dot product per jet, done in f32 (exact) as a
    # multiply + sublane reduction -> lane-dense (1, BT) row.
    logits = jnp.sum(h2 * w3_ref[...], axis=0, keepdims=True) + b3_ref[0, 0]
    out_ref[...] = jax.nn.sigmoid(logits).reshape(1, 1, bt)


def _round_up(x, m):
    return ((x + m - 1) // m) * m


def _vmem_limit_bytes(b_tile, P, F, H):
    # Per-step footprint estimate (double-buffered inputs + live intermediates),
    # with 2x margin; capped at 48 MiB so it is safe on v7x's 64 MiB per TC.
    f_pad = max(F, 16)                       # bf16 sublane padding of F
    jets_buf = P * f_pad * b_tile * 2
    poolw_buf = max(P, 8) * b_tile * 4
    weights = 2 * H * H * 2 + H * f_pad * 2 + 4 * H * 128 * 4
    out_buf = 8 * b_tile * 4
    io = 2 * (jets_buf + poolw_buf + weights + out_buf)
    interm = (P + 6) * H * b_tile * 4        # h_p live set + pooled + MLP temps
    total = 2 * (io + interm)
    return int(min(max(total, 16 * 1024 * 1024), 48 * 1024 * 1024))


def leaf_jet_classifier(jets, mask, params, *, b_tile=512):
    B, P, F = jets.shape
    H = params["we"].shape[1]

    # Tile size: multiple of 128 (lane width), no larger than the padded batch.
    b_tile = max(128, (min(b_tile, _round_up(B, 128)) // 128) * 128)
    num_tiles = pl.cdiv(B, b_tile)
    b_pad = num_tiles * b_tile

    # --- host-side layout plumbing (cheap XLA ops, keeps the kernel copy-free)
    jets_t = jnp.transpose(jets.astype(jnp.bfloat16), (1, 2, 0))   # (P, F, B)
    mask_f = mask.astype(jnp.float32)
    cnt = jnp.maximum(jnp.sum(mask_f, axis=1, keepdims=True), 1.0)
    pool_w_t = jnp.transpose(mask_f / cnt, (1, 0))                 # (P, B)

    if b_pad != B:
        # Padded jets/pool-weights are zero -> padded outputs are finite junk
        # (no division in-kernel) and are sliced away below.
        jets_t = jnp.pad(jets_t, ((0, 0), (0, 0), (0, b_pad - B)))
        pool_w_t = jnp.pad(pool_w_t, ((0, 0), (0, b_pad - B)))

    # bf16 for MXU operands; f32 for biases / pooling weights / final layer.
    we_t = params["we"].T.astype(jnp.bfloat16)     # (H, F)
    w1_t = params["w1"].T.astype(jnp.bfloat16)     # (H, H)
    w2_t = params["w2"].T.astype(jnp.bfloat16)     # (H, H)
    w3 = params["w3"].astype(jnp.float32)          # (H, 1)
    be = params["be"].T.astype(jnp.float32)        # (H, 1)
    b1 = params["b1"].T.astype(jnp.float32)        # (H, 1)
    b2 = params["b2"].T.astype(jnp.float32)        # (H, 1)
    b3 = params["b3"].astype(jnp.float32)          # (1, 1)

    def const_spec(shape):
        # Full-array block, same block index every grid step -> stays resident.
        return pl.BlockSpec(shape, lambda i: (0, 0))

    out = pl.pallas_call(
        leaf_jet_classifier_kernel,
        out_shape=jax.ShapeDtypeStruct((num_tiles, 1, b_tile), jnp.float32),
        grid=(num_tiles,),
        in_specs=[
            pl.BlockSpec((P, F, b_tile), lambda i: (0, 0, i)),   # jets tile
            pl.BlockSpec((P, b_tile), lambda i: (0, i)),         # pool weights
            const_spec((H, F)),                                  # we^T
            const_spec((H, 1)),                                  # be
            const_spec((H, H)),                                  # w1^T
            const_spec((H, 1)),                                  # b1
            const_spec((H, H)),                                  # w2^T
            const_spec((H, 1)),                                  # b2
            const_spec((H, 1)),                                  # w3
            pl.BlockSpec(memory_space=pltpu.MemorySpace.SMEM),   # b3 scalar
        ],
        out_specs=pl.BlockSpec((1, 1, b_tile), lambda i: (i, 0, 0)),
        compiler_params=pltpu.CompilerParams(
            dimension_semantics=("parallel",),       # batch tiles independent
            vmem_limit_bytes=_vmem_limit_bytes(b_tile, P, F, H),
        ),
    )(jets_t, pool_w_t, we_t, be, w1_t, b1, w2_t, b2, w3, b3)

    return out.reshape(b_pad, 1)[:B]


def init_params(key, features, hidden):
    ks = jax.random.split(key, 4)

    def lin(k, fan_in, fan_out):
        scale = 1.0 / jnp.sqrt(jnp.float32(fan_in))
        w = jax.random.uniform(k, (fan_in, fan_out), jnp.float32, -scale, scale)
        b = jnp.zeros((1, fan_out), jnp.float32)
        return w, b

    we, be = lin(ks[0], features, hidden)
    w1, b1 = lin(ks[1], hidden, hidden)
    w2, b2 = lin(ks[2], hidden, hidden)
    w3, b3 = lin(ks[3], hidden, 1)
    return dict(we=we, be=be, w1=w1, b1=b1, w2=w2, b2=b2, w3=w3, b3=b3)


def _bf16_round(x):
    return x.astype(jnp.bfloat16).astype(jnp.float32)


def reference_forward(jets, mask, p):
    # Pure-JAX reference mirroring the kernel's precision policy
    # (bf16 matmul operands + f32 accumulate; f32 pooling, biases, final layer).
    jb = _bf16_round(jets)
    we = _bf16_round(p["we"])
    w1 = _bf16_round(p["w1"])
    w2 = _bf16_round(p["w2"])
    h = jnp.maximum(jnp.einsum("bpf,fh->bph", jb, we) + p["be"][None], 0.0)
    cnt = jnp.maximum(jnp.sum(mask, axis=1, keepdims=True), 1.0)
    pw = mask / cnt
    pooled = jnp.einsum("bp,bph->bh", pw, h)
    h1 = jnp.maximum(_bf16_round(pooled) @ w1 + p["b1"], 0.0)
    h2 = jnp.maximum(_bf16_round(h1) @ w2 + p["b2"], 0.0)
    logits = h2 @ p["w3"] + p["b3"]          # final layer in f32 (as in kernel)
    return jax.nn.sigmoid(logits)


if __name__ == "__main__":
    # batch, particles per jet, per-particle features, hidden width
    B, P, F, H = 256, 16, 4, 128

    key = jax.random.PRNGKey(0)
    k_jets, k_valid, k_params = jax.random.split(key, 3)

    jets = jax.random.normal(k_jets, (B, P, F), jnp.float32)
    valid = jax.random.randint(k_valid, (B,), 1, P + 1)
    mask = (jnp.arange(P)[None, :] < valid[:, None]).astype(jnp.float32)

    params = init_params(k_params, F, H)

    # b_tile=128 here so the demo exercises a multi-step grid; default is 512.
    out = jax.block_until_ready(
        leaf_jet_classifier(jets, mask, params, b_tile=128))
    ref = reference_forward(jets, mask, params)

    assert out.shape == (B, 1)
    assert jnp.all(jnp.isfinite(out))
    assert jnp.allclose(out, ref, atol=2e-3, rtol=1e-3), (
        float(jnp.max(jnp.abs(out - ref))))

    print("KERNEL_OK")
</pallas_src>

<mosaic_0001>
module attributes {stable_mosaic.version = 11 : i64} {
  func.func @leaf_jet_classifier_kernel(%arg0: i32, %arg1: memref<16x4x128xbf16, #tpu.memory_space<vmem>>, %arg2: memref<16x128xf32, #tpu.memory_space<vmem>>, %arg3: memref<128x4xbf16, #tpu.memory_space<vmem>>, %arg4: memref<128x1xf32, #tpu.memory_space<vmem>>, %arg5: memref<128x128xbf16, #tpu.memory_space<vmem>>, %arg6: memref<128x1xf32, #tpu.memory_space<vmem>>, %arg7: memref<128x128xbf16, #tpu.memory_space<vmem>>, %arg8: memref<128x1xf32, #tpu.memory_space<vmem>>, %arg9: memref<128x1xf32, #tpu.memory_space<vmem>>, %arg10: memref<1x1xf32, #tpu.memory_space<smem>>, %arg11: memref<1x1x128xf32, #tpu.memory_space<vmem>>) attributes {dimension_semantics = [#tpu.dimension_semantics<parallel>], iteration_bounds = array<i64: 2>, scalar_prefetch = 0 : i64, scratch_operands = 0 : i64, tpu.core_type = #tpu.core_type<tc>, window_params = [{transform_indices = @transform_0, window_bounds = array<i64: 16, 4, 128>}, {transform_indices = @transform_1, window_bounds = array<i64: 16, 128>}, {pipeline_mode = #tpu.pipeline_mode<synchronous>, transform_indices = @transform_2, window_bounds = array<i64: 128, 4>}, {pipeline_mode = #tpu.pipeline_mode<synchronous>, transform_indices = @transform_3, window_bounds = array<i64: 128, 1>}, {pipeline_mode = #tpu.pipeline_mode<synchronous>, transform_indices = @transform_4, window_bounds = array<i64: 128, 128>}, {pipeline_mode = #tpu.pipeline_mode<synchronous>, transform_indices = @transform_5, window_bounds = array<i64: 128, 1>}, {pipeline_mode = #tpu.pipeline_mode<synchronous>, transform_indices = @transform_6, window_bounds = array<i64: 128, 128>}, {pipeline_mode = #tpu.pipeline_mode<synchronous>, transform_indices = @transform_7, window_bounds = array<i64: 128, 1>}, {pipeline_mode = #tpu.pipeline_mode<synchronous>, transform_indices = @transform_8, window_bounds = array<i64: 128, 1>}, {transform_indices = @transform_9, window_bounds = array<i64: 1, 1>}, {transform_indices = @transform_10, window_bounds = array<i64: 1, 1, 128>}]} {
    %c0 = arith.constant 0 : index
    %c0_0 = arith.constant 0 : index
    %0 = vector.load %arg3[%c0, %c0_0] : memref<128x4xbf16, #tpu.memory_space<vmem>>, vector<128x4xbf16>
    %c0_1 = arith.constant 0 : index
    %c0_2 = arith.constant 0 : index
    %1 = vector.load %arg4[%c0_1, %c0_2] : memref<128x1xf32, #tpu.memory_space<vmem>>, vector<128x1xf32>
    %cst = arith.constant 0.000000e+00 : f32
    %2 = vector.broadcast %cst : f32 to vector<128x128xf32>
    %c0_3 = arith.constant 0 : index
    %c0_4 = arith.constant 0 : index
    %c0_5 = arith.constant 0 : index
    %3 = vector.load %arg1[%c0_3, %c0_4, %c0_5] : memref<16x4x128xbf16, #tpu.memory_space<vmem>>, vector<1x4x128xbf16>
    %4 = vector.shape_cast %3 : vector<1x4x128xbf16> to vector<4x128xbf16>
    %cst_6 = arith.constant dense<0.000000e+00> : vector<128x128xf32>
    %5 = tpu.matmul %0, %4, %cst_6 {dimension_numbers = #tpu.dot_dimension_numbers<[1], [0], [0], [1], [0, 0, 1, 1], [], []>} : vector<128x4xbf16>, vector<4x128xbf16>, vector<128x128xf32> -> vector<128x128xf32>
    %6 = vector.broadcast %1 : vector<128x1xf32> to vector<128x128xf32>
    %7 = arith.addf %5, %6 : vector<128x128xf32>
    %cst_7 = arith.constant 0.000000e+00 : f32
    %8 = vector.broadcast %cst_7 : f32 to vector<128x128xf32>
    %9 = arith.maximumf %7, %8 : vector<128x128xf32>
    %c0_8 = arith.constant 0 : index
    %c0_9 = arith.constant 0 : index
    %10 = vector.load %arg2[%c0_8, %c0_9] : memref<16x128xf32, #tpu.memory_space<vmem>>, vector<1x128xf32>
    %11 = vector.broadcast %10 : vector<1x128xf32> to vector<128x128xf32>
    %12 = arith.mulf %11, %9 : vector<128x128xf32>
    %13 = arith.addf %2, %12 : vector<128x128xf32>
    %c1 = arith.constant 1 : index
    %c0_10 = arith.constant 0 : index
    %c0_11 = arith.constant 0 : index
    %14 = vector.load %arg1[%c1, %c0_10, %c0_11] : memref<16x4x128xbf16, #tpu.memory_space<vmem>>, vector<1x4x128xbf16>
    %15 = vector.shape_cast %14 : vector<1x4x128xbf16> to vector<4x128xbf16>
    %cst_12 = arith.constant dense<0.000000e+00> : vector<128x128xf32>
    %16 = tpu.matmul %0, %15, %cst_12 {dimension_numbers = #tpu.dot_dimension_numbers<[1], [0], [0], [1], [0, 0, 1, 1], [], []>} : vector<128x4xbf16>, vector<4x128xbf16>, vector<128x128xf32> -> vector<128x128xf32>
    %17 = vector.broadcast %1 : vector<128x1xf32> to vector<128x128xf32>
    %18 = arith.addf %16, %17 : vector<128x128xf32>
    %cst_13 = arith.constant 0.000000e+00 : f32
    %19 = vector.broadcast %cst_13 : f32 to vector<128x128xf32>
    %20 = arith.maximumf %18, %19 : vector<128x128xf32>
    %c1_14 = arith.constant 1 : index
    %c0_15 = arith.constant 0 : index
    %21 = vector.load %arg2[%c1_14, %c0_15] : memref<16x128xf32, #tpu.memory_space<vmem>>, vector<1x128xf32>
    %22 = vector.broadcast %21 : vector<1x128xf32> to vector<128x128xf32>
    %23 = arith.mulf %22, %20 : vector<128x128xf32>
    %24 = arith.addf %13, %23 : vector<128x128xf32>
    %c2 = arith.constant 2 : index
    %c0_16 = arith.constant 0 : index
    %c0_17 = arith.constant 0 : index
    %25 = vector.load %arg1[%c2, %c0_16, %c0_17] : memref<16x4x128xbf16, #tpu.memory_space<vmem>>, vector<1x4x128xbf16>
    %26 = vector.shape_cast %25 : vector<1x4x128xbf16> to vector<4x128xbf16>
    %cst_18 = arith.constant dense<0.000000e+00> : vector<128x128xf32>
    %27 = tpu.matmul %0, %26, %cst_18 {dimension_numbers = #tpu.dot_dimension_numbers<[1], [0], [0], [1], [0, 0, 1, 1], [], []>} : vector<128x4xbf16>, vector<4x128xbf16>, vector<128x128xf32> -> vector<128x128xf32>
    %28 = vector.broadcast %1 : vector<128x1xf32> to vector<128x128xf32>
    %29 = arith.addf %27, %28 : vector<128x128xf32>
    %cst_19 = arith.constant 0.000000e+00 : f32
    %30 = vector.broadcast %cst_19 : f32 to vector<128x128xf32>
    %31 = arith.maximumf %29, %30 : vector<128x128xf32>
    %c2_20 = arith.constant 2 : index
    %c0_21 = arith.constant 0 : index
    %32 = vector.load %arg2[%c2_20, %c0_21] : memref<16x128xf32, #tpu.memory_space<vmem>>, vector<1x128xf32>
    %33 = vector.broadcast %32 : vector<1x128xf32> to vector<128x128xf32>
    %34 = arith.mulf %33, %31 : vector<128x128xf32>
    %35 = arith.addf %24, %34 : vector<128x128xf32>
    %c3 = arith.constant 3 : index
    %c0_22 = arith.constant 0 : index
    %c0_23 = arith.constant 0 : index
    %36 = vector.load %arg1[%c3, %c0_22, %c0_23] : memref<16x4x128xbf16, #tpu.memory_space<vmem>>, vector<1x4x128xbf16>
    %37 = vector.shape_cast %36 : vector<1x4x128xbf16> to vector<4x128xbf16>
    %cst_24 = arith.constant dense<0.000000e+00> : vector<128x128xf32>
    %38 = tpu.matmul %0, %37, %cst_24 {dimension_numbers = #tpu.dot_dimension_numbers<[1], [0], [0], [1], [0, 0, 1, 1], [], []>} : vector<128x4xbf16>, vector<4x128xbf16>, vector<128x128xf32> -> vector<128x128xf32>
    %39 = vector.broadcast %1 : vector<128x1xf32> to vector<128x128xf32>
    %40 = arith.addf %38, %39 : vector<128x128xf32>
    %cst_25 = arith.constant 0.000000e+00 : f32
    %41 = vector.broadcast %cst_25 : f32 to vector<128x128xf32>
    %42 = arith.maximumf %40, %41 : vector<128x128xf32>
    %c3_26 = arith.constant 3 : index
    %c0_27 = arith.constant 0 : index
    %43 = vector.load %arg2[%c3_26, %c0_27] : memref<16x128xf32, #tpu.memory_space<vmem>>, vector<1x128xf32>
    %44 = vector.broadcast %43 : vector<1x128xf32> to vector<128x128xf32>
    %45 = arith.mulf %44, %42 : vector<128x128xf32>
    %46 = arith.addf %35, %45 : vector<128x128xf32>
    %c4 = arith.constant 4 : index
    %c0_28 = arith.constant 0 : index
    %c0_29 = arith.constant 0 : index
    %47 = vector.load %arg1[%c4, %c0_28, %c0_29] : memref<16x4x128xbf16, #tpu.memory_space<vmem>>, vector<1x4x128xbf16>
    %48 = vector.shape_cast %47 : vector<1x4x128xbf16> to vector<4x128xbf16>
    %cst_30 = arith.constant dense<0.000000e+00> : vector<128x128xf32>
    %49 = tpu.matmul %0, %48, %cst_30 {dimension_numbers = #tpu.dot_dimension_numbers<[1], [0], [0], [1], [0, 0, 1, 1], [], []>} : vector<128x4xbf16>, vector<4x128xbf16>, vector<128x128xf32> -> vector<128x128xf32>
    %50 = vector.broadcast %1 : vector<128x1xf32> to vector<128x128xf32>
    %51 = arith.addf %49, %50 : vector<128x128xf32>
    %cst_31 = arith.constant 0.000000e+00 : f32
    %52 = vector.broadcast %cst_31 : f32 to vector<128x128xf32>
    %53 = arith.maximumf %51, %52 : vector<128x128xf32>
    %c4_32 = arith.constant 4 : index
    %c0_33 = arith.constant 0 : index
    %54 = vector.load %arg2[%c4_32, %c0_33] : memref<16x128xf32, #tpu.memory_space<vmem>>, vector<1x128xf32>
    %55 = vector.broadcast %54 : vector<1x128xf32> to vector<128x128xf32>
    %56 = arith.mulf %55, %53 : vector<128x128xf32>
    %57 = arith.addf %46, %56 : vector<128x128xf32>
    %c5 = arith.constant 5 : index
    %c0_34 = arith.constant 0 : index
    %c0_35 = arith.constant 0 : index
    %58 = vector.load %arg1[%c5, %c0_34, %c0_35] : memref<16x4x128xbf16, #tpu.memory_space<vmem>>, vector<1x4x128xbf16>
    %59 = vector.shape_cast %58 : vector<1x4x128xbf16> to vector<4x128xbf16>
    %cst_36 = arith.constant dense<0.000000e+00> : vector<128x128xf32>
    %60 = tpu.matmul %0, %59, %cst_36 {dimension_numbers = #tpu.dot_dimension_numbers<[1], [0], [0], [1], [0, 0, 1, 1], [], []>} : vector<128x4xbf16>, vector<4x128xbf16>, vector<128x128xf32> -> vector<128x128xf32>
    %61 = vector.broadcast %1 : vector<128x1xf32> to vector<128x128xf32>
    %62 = arith.addf %60, %61 : vector<128x128xf32>
    %cst_37 = arith.constant 0.000000e+00 : f32
    %63 = vector.broadcast %cst_37 : f32 to vector<128x128xf32>
    %64 = arith.maximumf %62, %63 : vector<128x128xf32>
    %c5_38 = arith.constant 5 : index
    %c0_39 = arith.constant 0 : index
    %65 = vector.load %arg2[%c5_38, %c0_39] : memref<16x128xf32, #tpu.memory_space<vmem>>, vector<1x128xf32>
    %66 = vector.broadcast %65 : vector<1x128xf32> to vector<128x128xf32>
    %67 = arith.mulf %66, %64 : vector<128x128xf32>
    %68 = arith.addf %57, %67 : vector<128x128xf32>
    %c6 = arith.constant 6 : index
    %c0_40 = arith.constant 0 : index
    %c0_41 = arith.constant 0 : index
    %69 = vector.load %arg1[%c6, %c0_40, %c0_41] : memref<16x4x128xbf16, #tpu.memory_space<vmem>>, vector<1x4x128xbf16>
    %70 = vector.shape_cast %69 : vector<1x4x128xbf16> to vector<4x128xbf16>
    %cst_42 = arith.constant dense<0.000000e+00> : vector<128x128xf32>
    %71 = tpu.matmul %0, %70, %cst_42 {dimension_numbers = #tpu.dot_dimension_numbers<[1], [0], [0], [1], [0, 0, 1, 1], [], []>} : vector<128x4xbf16>, vector<4x128xbf16>, vector<128x128xf32> -> vector<128x128xf32>
    %72 = vector.broadcast %1 : vector<128x1xf32> to vector<128x128xf32>
    %73 = arith.addf %71, %72 : vector<128x128xf32>
    %cst_43 = arith.constant 0.000000e+00 : f32
    %74 = vector.broadcast %cst_43 : f32 to vector<128x128xf32>
    %75 = arith.maximumf %73, %74 : vector<128x128xf32>
    %c6_44 = arith.constant 6 : index
    %c0_45 = arith.constant 0 : index
    %76 = vector.load %arg2[%c6_44, %c0_45] : memref<16x128xf32, #tpu.memory_space<vmem>>, vector<1x128xf32>
    %77 = vector.broadcast %76 : vector<1x128xf32> to vector<128x128xf32>
    %78 = arith.mulf %77, %75 : vector<128x128xf32>
    %79 = arith.addf %68, %78 : vector<128x128xf32>
    %c7 = arith.constant 7 : index
    %c0_46 = arith.constant 0 : index
    %c0_47 = arith.constant 0 : index
    %80 = vector.load %arg1[%c7, %c0_46, %c0_47] : memref<16x4x128xbf16, #tpu.memory_space<vmem>>, vector<1x4x128xbf16>
    %81 = vector.shape_cast %80 : vector<1x4x128xbf16> to vector<4x128xbf16>
    %cst_48 = arith.constant dense<0.000000e+00> : vector<128x128xf32>
    %82 = tpu.matmul %0, %81, %cst_48 {dimension_numbers = #tpu.dot_dimension_numbers<[1], [0], [0], [1], [0, 0, 1, 1], [], []>} : vector<128x4xbf16>, vector<4x128xbf16>, vector<128x128xf32> -> vector<128x128xf32>
    %83 = vector.broadcast %1 : vector<128x1xf32> to vector<128x128xf32>
    %84 = arith.addf %82, %83 : vector<128x128xf32>
    %cst_49 = arith.constant 0.000000e+00 : f32
    %85 = vector.broadcast %cst_49 : f32 to vector<128x128xf32>
    %86 = arith.maximumf %84, %85 : vector<128x128xf32>
    %c7_50 = arith.constant 7 : index
    %c0_51 = arith.constant 0 : index
    %87 = vector.load %arg2[%c7_50, %c0_51] : memref<16x128xf32, #tpu.memory_space<vmem>>, vector<1x128xf32>
    %88 = vector.broadcast %87 : vector<1x128xf32> to vector<128x128xf32>
    %89 = arith.mulf %88, %86 : vector<128x128xf32>
    %90 = arith.addf %79, %89 : vector<128x128xf32>
    %c8 = arith.constant 8 : index
    %c0_52 = arith.constant 0 : index
    %c0_53 = arith.constant 0 : index
    %91 = vector.load %arg1[%c8, %c0_52, %c0_53] : memref<16x4x128xbf16, #tpu.memory_space<vmem>>, vector<1x4x128xbf16>
    %92 = vector.shape_cast %91 : vector<1x4x128xbf16> to vector<4x128xbf16>
    %cst_54 = arith.constant dense<0.000000e+00> : vector<128x128xf32>
    %93 = tpu.matmul %0, %92, %cst_54 {dimension_numbers = #tpu.dot_dimension_numbers<[1], [0], [0], [1], [0, 0, 1, 1], [], []>} : vector<128x4xbf16>, vector<4x128xbf16>, vector<128x128xf32> -> vector<128x128xf32>
    %94 = vector.broadcast %1 : vector<128x1xf32> to vector<128x128xf32>
    %95 = arith.addf %93, %94 : vector<128x128xf32>
    %cst_55 = arith.constant 0.000000e+00 : f32
    %96 = vector.broadcast %cst_55 : f32 to vector<128x128xf32>
    %97 = arith.maximumf %95, %96 : vector<128x128xf32>
    %c8_56 = arith.constant 8 : index
    %c0_57 = arith.constant 0 : index
    %98 = vector.load %arg2[%c8_56, %c0_57] : memref<16x128xf32, #tpu.memory_space<vmem>>, vector<1x128xf32>
    %99 = vector.broadcast %98 : vector<1x128xf32> to vector<128x128xf32>
    %100 = arith.mulf %99, %97 : vector<128x128xf32>
    %101 = arith.addf %90, %100 : vector<128x128xf32>
    %c9 = arith.constant 9 : index
    %c0_58 = arith.constant 0 : index
    %c0_59 = arith.constant 0 : index
    %102 = vector.load %arg1[%c9, %c0_58, %c0_59] : memref<16x4x128xbf16, #tpu.memory_space<vmem>>, vector<1x4x128xbf16>
    %103 = vector.shape_cast %102 : vector<1x4x128xbf16> to vector<4x128xbf16>
    %cst_60 = arith.constant dense<0.000000e+00> : vector<128x128xf32>
    %104 = tpu.matmul %0, %103, %cst_60 {dimension_numbers = #tpu.dot_dimension_numbers<[1], [0], [0], [1], [0, 0, 1, 1], [], []>} : vector<128x4xbf16>, vector<4x128xbf16>, vector<128x128xf32> -> vector<128x128xf32>
    %105 = vector.broadcast %1 : vector<128x1xf32> to vector<128x128xf32>
    %106 = arith.addf %104, %105 : vector<128x128xf32>
    %cst_61 = arith.constant 0.000000e+00 : f32
    %107 = vector.broadcast %cst_61 : f32 to vector<128x128xf32>
    %108 = arith.maximumf %106, %107 : vector<128x128xf32>
    %c9_62 = arith.constant 9 : index
    %c0_63 = arith.constant 0 : index
    %109 = vector.load %arg2[%c9_62, %c0_63] : memref<16x128xf32, #tpu.memory_space<vmem>>, vector<1x128xf32>
    %110 = vector.broadcast %109 : vector<1x128xf32> to vector<128x128xf32>
    %111 = arith.mulf %110, %108 : vector<128x128xf32>
    %112 = arith.addf %101, %111 : vector<128x128xf32>
    %c10 = arith.constant 10 : index
    %c0_64 = arith.constant 0 : index
    %c0_65 = arith.constant 0 : index
    %113 = vector.load %arg1[%c10, %c0_64, %c0_65] : memref<16x4x128xbf16, #tpu.memory_space<vmem>>, vector<1x4x128xbf16>
    %114 = vector.shape_cast %113 : vector<1x4x128xbf16> to vector<4x128xbf16>
    %cst_66 = arith.constant dense<0.000000e+00> : vector<128x128xf32>
    %115 = tpu.matmul %0, %114, %cst_66 {dimension_numbers = #tpu.dot_dimension_numbers<[1], [0], [0], [1], [0, 0, 1, 1], [], []>} : vector<128x4xbf16>, vector<4x128xbf16>, vector<128x128xf32> -> vector<128x128xf32>
    %116 = vector.broadcast %1 : vector<128x1xf32> to vector<128x128xf32>
    %117 = arith.addf %115, %116 : vector<128x128xf32>
    %cst_67 = arith.constant 0.000000e+00 : f32
    %118 = vector.broadcast %cst_67 : f32 to vector<128x128xf32>
    %119 = arith.maximumf %117, %118 : vector<128x128xf32>
    %c10_68 = arith.constant 10 : index
    %c0_69 = arith.constant 0 : index
    %120 = vector.load %arg2[%c10_68, %c0_69] : memref<16x128xf32, #tpu.memory_space<vmem>>, vector<1x128xf32>
    %121 = vector.broadcast %120 : vector<1x128xf32> to vector<128x128xf32>
    %122 = arith.mulf %121, %119 : vector<128x128xf32>
    %123 = arith.addf %112, %122 : vector<128x128xf32>
    %c11 = arith.constant 11 : index
    %c0_70 = arith.constant 0 : index
    %c0_71 = arith.constant 0 : index
    %124 = vector.load %arg1[%c11, %c0_70, %c0_71] : memref<16x4x128xbf16, #tpu.memory_space<vmem>>, vector<1x4x128xbf16>
    %125 = vector.shape_cast %124 : vector<1x4x128xbf16> to vector<4x128xbf16>
    %cst_72 = arith.constant dense<0.000000e+00> : vector<128x128xf32>
    %126 = tpu.matmul %0, %125, %cst_72 {dimension_numbers = #tpu.dot_dimension_numbers<[1], [0], [0], [1], [0, 0, 1, 1], [], []>} : vector<128x4xbf16>, vector<4x128xbf16>, vector<128x128xf32> -> vector<128x128xf32>
    %127 = vector.broadcast %1 : vector<128x1xf32> to vector<128x128xf32>
    %128 = arith.addf %126, %127 : vector<128x128xf32>
    %cst_73 = arith.constant 0.000000e+00 : f32
    %129 = vector.broadcast %cst_73 : f32 to vector<128x128xf32>
    %130 = arith.maximumf %128, %129 : vector<128x128xf32>
    %c11_74 = arith.constant 11 : index
    %c0_75 = arith.constant 0 : index
    %131 = vector.load %arg2[%c11_74, %c0_75] : memref<16x128xf32, #tpu.memory_space<vmem>>, vector<1x128xf32>
    %132 = vector.broadcast %131 : vector<1x128xf32> to vector<128x128xf32>
    %133 = arith.mulf %132, %130 : vector<128x128xf32>
    %134 = arith.addf %123, %133 : vector<128x128xf32>
    %c12 = arith.constant 12 : index
    %c0_76 = arith.constant 0 : index
    %c0_77 = arith.constant 0 : index
    %135 = vector.load %arg1[%c12, %c0_76, %c0_77] : memref<16x4x128xbf16, #tpu.memory_space<vmem>>, vector<1x4x128xbf16>
    %136 = vector.shape_cast %135 : vector<1x4x128xbf16> to vector<4x128xbf16>
    %cst_78 = arith.constant dense<0.000000e+00> : vector<128x128xf32>
    %137 = tpu.matmul %0, %136, %cst_78 {dimension_numbers = #tpu.dot_dimension_numbers<[1], [0], [0], [1], [0, 0, 1, 1], [], []>} : vector<128x4xbf16>, vector<4x128xbf16>, vector<128x128xf32> -> vector<128x128xf32>
    %138 = vector.broadcast %1 : vector<128x1xf32> to vector<128x128xf32>
    %139 = arith.addf %137, %138 : vector<128x128xf32>
    %cst_79 = arith.constant 0.000000e+00 : f32
    %140 = vector.broadcast %cst_79 : f32 to vector<128x128xf32>
    %141 = arith.maximumf %139, %140 : vector<128x128xf32>
    %c12_80 = arith.constant 12 : index
    %c0_81 = arith.constant 0 : index
    %142 = vector.load %arg2[%c12_80, %c0_81] : memref<16x128xf32, #tpu.memory_space<vmem>>, vector<1x128xf32>
    %143 = vector.broadcast %142 : vector<1x128xf32> to vector<128x128xf32>
    %144 = arith.mulf %143, %141 : vector<128x128xf32>
    %145 = arith.addf %134, %144 : vector<128x128xf32>
    %c13 = arith.constant 13 : index
    %c0_82 = arith.constant 0 : index
    %c0_83 = arith.constant 0 : index
    %146 = vector.load %arg1[%c13, %c0_82, %c0_83] : memref<16x4x128xbf16, #tpu.memory_space<vmem>>, vector<1x4x128xbf16>
    %147 = vector.shape_cast %146 : vector<1x4x128xbf16> to vector<4x128xbf16>
    %cst_84 = arith.constant dense<0.000000e+00> : vector<128x128xf32>
    %148 = tpu.matmul %0, %147, %cst_84 {dimension_numbers = #tpu.dot_dimension_numbers<[1], [0], [0], [1], [0, 0, 1, 1], [], []>} : vector<128x4xbf16>, vector<4x128xbf16>, vector<128x128xf32> -> vector<128x128xf32>
    %149 = vector.broadcast %1 : vector<128x1xf32> to vector<128x128xf32>
    %150 = arith.addf %148, %149 : vector<128x128xf32>
    %cst_85 = arith.constant 0.000000e+00 : f32
    %151 = vector.broadcast %cst_85 : f32 to vector<128x128xf32>
    %152 = arith.maximumf %150, %151 : vector<128x128xf32>
    %c13_86 = arith.constant 13 : index
    %c0_87 = arith.constant 0 : index
    %153 = vector.load %arg2[%c13_86, %c0_87] : memref<16x128xf32, #tpu.memory_space<vmem>>, vector<1x128xf32>
    %154 = vector.broadcast %153 : vector<1x128xf32> to vector<128x128xf32>
    %155 = arith.mulf %154, %152 : vector<128x128xf32>
    %156 = arith.addf %145, %155 : vector<128x128xf32>
    %c14 = arith.constant 14 : index
    %c0_88 = arith.constant 0 : index
    %c0_89 = arith.constant 0 : index
    %157 = vector.load %arg1[%c14, %c0_88, %c0_89] : memref<16x4x128xbf16, #tpu.memory_space<vmem>>, vector<1x4x128xbf16>
    %158 = vector.shape_cast %157 : vector<1x4x128xbf16> to vector<4x128xbf16>
    %cst_90 = arith.constant dense<0.000000e+00> : vector<128x128xf32>
    %159 = tpu.matmul %0, %158, %cst_90 {dimension_numbers = #tpu.dot_dimension_numbers<[1], [0], [0], [1], [0, 0, 1, 1], [], []>} : vector<128x4xbf16>, vector<4x128xbf16>, vector<128x128xf32> -> vector<128x128xf32>
    %160 = vector.broadcast %1 : vector<128x1xf32> to vector<128x128xf32>
    %161 = arith.addf %159, %160 : vector<128x128xf32>
    %cst_91 = arith.constant 0.000000e+00 : f32
    %162 = vector.broadcast %cst_91 : f32 to vector<128x128xf32>
    %163 = arith.maximumf %161, %162 : vector<128x128xf32>
    %c14_92 = arith.constant 14 : index
    %c0_93 = arith.constant 0 : index
    %164 = vector.load %arg2[%c14_92, %c0_93] : memref<16x128xf32, #tpu.memory_space<vmem>>, vector<1x128xf32>
    %165 = vector.broadcast %164 : vector<1x128xf32> to vector<128x128xf32>
    %166 = arith.mulf %165, %163 : vector<128x128xf32>
    %167 = arith.addf %156, %166 : vector<128x128xf32>
    %c15 = arith.constant 15 : index
    %c0_94 = arith.constant 0 : index
    %c0_95 = arith.constant 0 : index
    %168 = vector.load %arg1[%c15, %c0_94, %c0_95] : memref<16x4x128xbf16, #tpu.memory_space<vmem>>, vector<1x4x128xbf16>
    %169 = vector.shape_cast %168 : vector<1x4x128xbf16> to vector<4x128xbf16>
    %cst_96 = arith.constant dense<0.000000e+00> : vector<128x128xf32>
    %170 = tpu.matmul %0, %169, %cst_96 {dimension_numbers = #tpu.dot_dimension_numbers<[1], [0], [0], [1], [0, 0, 1, 1], [], []>} : vector<128x4xbf16>, vector<4x128xbf16>, vector<128x128xf32> -> vector<128x128xf32>
    %171 = vector.broadcast %1 : vector<128x1xf32> to vector<128x128xf32>
    %172 = arith.addf %170, %171 : vector<128x128xf32>
    %cst_97 = arith.constant 0.000000e+00 : f32
    %173 = vector.broadcast %cst_97 : f32 to vector<128x128xf32>
    %174 = arith.maximumf %172, %173 : vector<128x128xf32>
    %c15_98 = arith.constant 15 : index
    %c0_99 = arith.constant 0 : index
    %175 = vector.load %arg2[%c15_98, %c0_99] : memref<16x128xf32, #tpu.memory_space<vmem>>, vector<1x128xf32>
    %176 = vector.broadcast %175 : vector<1x128xf32> to vector<128x128xf32>
    %177 = arith.mulf %176, %174 : vector<128x128xf32>
    %178 = arith.addf %167, %177 : vector<128x128xf32>
    %c0_100 = arith.constant 0 : index
    %c0_101 = arith.constant 0 : index
    %179 = vector.load %arg5[%c0_100, %c0_101] : memref<128x128xbf16, #tpu.memory_space<vmem>>, vector<128x128xbf16>
    %180 = arith.truncf %178 : vector<128x128xf32> to vector<128x128xbf16>
    %cst_102 = arith.constant dense<0.000000e+00> : vector<128x128xf32>
    %181 = tpu.matmul %179, %180, %cst_102 {dimension_numbers = #tpu.dot_dimension_numbers<[1], [0], [0], [1], [0, 0, 1, 1], [], []>} : vector<128x128xbf16>, vector<128x128xbf16>, vector<128x128xf32> -> vector<128x128xf32>
    %c0_103 = arith.constant 0 : index
    %c0_104 = arith.constant 0 : index
    %182 = vector.load %arg6[%c0_103, %c0_104] : memref<128x1xf32, #tpu.memory_space<vmem>>, vector<128x1xf32>
    %183 = vector.broadcast %182 : vector<128x1xf32> to vector<128x128xf32>
    %184 = arith.addf %181, %183 : vector<128x128xf32>
    %cst_105 = arith.constant 0.000000e+00 : f32
    %185 = vector.broadcast %cst_105 : f32 to vector<128x128xf32>
    %186 = arith.maximumf %184, %185 : vector<128x128xf32>
    %c0_106 = arith.constant 0 : index
    %c0_107 = arith.constant 0 : index
    %187 = vector.load %arg7[%c0_106, %c0_107] : memref<128x128xbf16, #tpu.memory_space<vmem>>, vector<128x128xbf16>
    %188 = arith.truncf %186 : vector<128x128xf32> to vector<128x128xbf16>
    %cst_108 = arith.constant dense<0.000000e+00> : vector<128x128xf32>
    %189 = tpu.matmul %187, %188, %cst_108 {dimension_numbers = #tpu.dot_dimension_numbers<[1], [0], [0], [1], [0, 0, 1, 1], [], []>} : vector<128x128xbf16>, vector<128x128xbf16>, vector<128x128xf32> -> vector<128x128xf32>
    %c0_109 = arith.constant 0 : index
    %c0_110 = arith.constant 0 : index
    %190 = vector.load %arg8[%c0_109, %c0_110] : memref<128x1xf32, #tpu.memory_space<vmem>>, vector<128x1xf32>
    %191 = vector.broadcast %190 : vector<128x1xf32> to vector<128x128xf32>
    %192 = arith.addf %189, %191 : vector<128x128xf32>
    %cst_111 = arith.constant 0.000000e+00 : f32
    %193 = vector.broadcast %cst_111 : f32 to vector<128x128xf32>
    %194 = arith.maximumf %192, %193 : vector<128x128xf32>
    %c0_112 = arith.constant 0 : index
    %c0_113 = arith.constant 0 : index
    %195 = vector.load %arg9[%c0_112, %c0_113] : memref<128x1xf32, #tpu.memory_space<vmem>>, vector<128x1xf32>
    %196 = vector.broadcast %195 : vector<128x1xf32> to vector<128x128xf32>
    %197 = arith.mulf %194, %196 : vector<128x128xf32>
    %cst_114 = arith.constant dense<0.000000e+00> : vector<128xf32>
    %198 = vector.multi_reduction <add>, %197, %cst_114 [0] : vector<128x128xf32> to vector<128xf32>
    %199 = vector.shape_cast %198 : vector<128xf32> to vector<1x128xf32>
    %c0_115 = arith.constant 0 : index
    %c0_116 = arith.constant 0 : index
    %200 = memref.load %arg10[%c0_115, %c0_116] : memref<1x1xf32, #tpu.memory_space<smem>>
    %201 = vector.broadcast %200 : f32 to vector<1x128xf32>
    %202 = arith.addf %199, %201 : vector<1x128xf32>
    %203 = arith.negf %202 : vector<1x128xf32>
    %204 = math.exp %203 : vector<1x128xf32>
    %cst_117 = arith.constant 1.000000e+00 : f32
    %205 = vector.broadcast %cst_117 : f32 to vector<1x128xf32>
    %206 = arith.addf %205, %204 : vector<1x128xf32>
    %207 = arith.divf %205, %206 : vector<1x128xf32>
    %208 = vector.shape_cast %207 : vector<1x128xf32> to vector<1x1x128xf32>
    %c0_118 = arith.constant 0 : index
    %c0_119 = arith.constant 0 : index
    %c0_120 = arith.constant 0 : index
    %209 = vector.load %arg11[%c0_118, %c0_119, %c0_120] : memref<1x1x128xf32, #tpu.memory_space<vmem>>, vector<1x1x128xf32>
    tpu.vector_store %arg11[%c0_118, %c0_119, %c0_120], %208 {strides = array<i32>} : memref<1x1x128xf32, #tpu.memory_space<vmem>>, vector<1x1x128xf32>,
    return
  }
  func.func @transform_0(%arg0: i32) -> (i32, i32, i32) {
    %c0_i32 = arith.constant 0 : i32
    %c0_i32_0 = arith.constant 0 : i32
    %c0_i32_1 = arith.constant 0 : i32
    return %c0_i32, %c0_i32_0, %arg0 : i32, i32, i32
  }
  func.func @transform_1(%arg0: i32) -> (i32, i32) {
    %c0_i32 = arith.constant 0 : i32
    %c0_i32_0 = arith.constant 0 : i32
    return %c0_i32, %arg0 : i32, i32
  }
  func.func @transform_2(%arg0: i32) -> (i32, i32) {
    %c0_i32 = arith.constant 0 : i32
    %c0_i32_0 = arith.constant 0 : i32
    %c0_i32_1 = arith.constant 0 : i32
    return %c0_i32, %c0_i32_0 : i32, i32
  }
  func.func @transform_3(%arg0: i32) -> (i32, i32) {
    %c0_i32 = arith.constant 0 : i32
    %c0_i32_0 = arith.constant 0 : i32
    %c0_i32_1 = arith.constant 0 : i32
    return %c0_i32, %c0_i32_0 : i32, i32
  }
  func.func @transform_4(%arg0: i32) -> (i32, i32) {
    %c0_i32 = arith.constant 0 : i32
    %c0_i32_0 = arith.constant 0 : i32
    %c0_i32_1 = arith.constant 0 : i32
    return %c0_i32, %c0_i32_0 : i32, i32
  }
  func.func @transform_5(%arg0: i32) -> (i32, i32) {
    %c0_i32 = arith.constant 0 : i32
    %c0_i32_0 = arith.constant 0 : i32
    %c0_i32_1 = arith.constant 0 : i32
    return %c0_i32, %c0_i32_0 : i32, i32
  }
  func.func @transform_6(%arg0: i32) -> (i32, i32) {
    %c0_i32 = arith.constant 0 : i32
    %c0_i32_0 = arith.constant 0 : i32
    %c0_i32_1 = arith.constant 0 : i32
    return %c0_i32, %c0_i32_0 : i32, i32
  }
  func.func @transform_7(%arg0: i32) -> (i32, i32) {
    %c0_i32 = arith.constant 0 : i32
    %c0_i32_0 = arith.constant 0 : i32
    %c0_i32_1 = arith.constant 0 : i32
    return %c0_i32, %c0_i32_0 : i32, i32
  }
  func.func @transform_8(%arg0: i32) -> (i32, i32) {
    %c0_i32 = arith.constant 0 : i32
    %c0_i32_0 = arith.constant 0 : i32
    %c0_i32_1 = arith.constant 0 : i32
    return %c0_i32, %c0_i32_0 : i32, i32
  }
  func.func @transform_9(%arg0: i32) -> (i32, i32) {
    %c0_i32 = arith.constant 0 : i32
    %c0_i32_0 = arith.constant 0 : i32
    %c0_i32_1 = arith.constant 0 : i32
    return %c0_i32, %c0_i32_0 : i32, i32
  }
  func.func @transform_10(%arg0: i32) -> (i32, i32, i32) {
    %c0_i32 = arith.constant 0 : i32
    %c0_i32_0 = arith.constant 0 : i32
    %c0_i32_1 = arith.constant 0 : i32
    return %arg0, %c0_i32, %c0_i32_0 : i32, i32, i32
  }
}

</mosaic_0001>

<llo_original>
// kernel: tpu_custom_call.1
$region0: #{tpu_custom_call.1}
  #allocation0 [shape = 'u32[]', space=smem, size = 0x4, offset = 0x4, fixed_abs, tag = 'smem constant byte address 0x4 - core index']
  #allocation1 [shape = 'u32[144,128]{1,0:T(1,128)}', space=vmem, size = 0x12000, scoped, tag = 'internal scratch']
  #allocation2 [shape = 'f32[1,1]{1,0:T(1,128)S(6)}', space=smem, size = 0x200, scoped, tag = 'scoped memory for tpu_custom_call.1']
  %s0 = inlined_call_operand.vmem [shape: bf16[16,4,256], index: 0, kind: input, shape index: {}]
  %s1 = inlined_call_operand.vmem [shape: f32[16,256], index: 1, kind: input, shape index: {}]
  %s2 = inlined_call_operand.vmem [shape: bf16[128,4], index: 2, kind: input, shape index: {}]
  %s3 = inlined_call_operand.vmem [shape: f32[128,1], index: 3, kind: input, shape index: {}]
  %s4 = inlined_call_operand.vmem [shape: bf16[128,128], index: 4, kind: input, shape index: {}]
  %s5 = inlined_call_operand.vmem [shape: f32[128,1], index: 5, kind: input, shape index: {}]
  %s6 = inlined_call_operand.vmem [shape: bf16[128,128], index: 6, kind: input, shape index: {}]
  %s7 = inlined_call_operand.vmem [shape: f32[128,1], index: 7, kind: input, shape index: {}]
  %s8 = inlined_call_operand.vmem [shape: f32[128,1], index: 8, kind: input, shape index: {}]
  %s9 = inlined_call_operand.<no memory space> [shape: f32[1,1], index: 9, kind: input, shape index: {}]
  %s10 = inlined_call_operand.hbm [shape: f32[2,1,128], index: 10, kind: output, shape index: {}]
  %s11 = sld [smem:[#allocation0]]
  $region152: #{tpu_custom_call.1} parent=0
    _
  %s13 = ssub.s32 1, %s11
  %s14 = scalar_select 0, %s13, %s11
  %15 = sst [smem:[#allocation2]] %s9
  $region1: #{tpu_custom_call.1} parent=0
    #allocation3 [shape = 'u8[32768]{0}', space=vmem, size = 0x8000, scoped, tag = 'input window, operand 0']
    #allocation4 [shape = 'u8[16384]{0}', space=vmem, size = 0x4000, scoped, tag = 'input window, operand 1']
    #allocation5 [shape = 'u8[1024]{0}', space=vmem, size = 0x400, scoped, tag = 'output window, operand 0']
    #allocation6 [shape = 's32[2]{0}', space=sflag, size = 0x8, scoped, tag = 'scoped memory for tpu_custom_call.1']
    %16 = vsyncpa [#allocation6], 0
    %s17 = scalar_lea.sflag [#allocation6], 1
    %18 = vsyncpa %s17, 0
    loop: start=0, step=1, limit=4
    $region2: #{tpu_custom_call.1} parent=1 // loop_pre_header
      _
    $region3: #{tpu_custom_call.1} parent=1 // loop_header
      %s20 = sphi 0, %s24
      %p21 = scmp.ge.s32.totalorder %s20, 4
      %s30 = sphi 0, %s32
      %s33 = sphi 0, %s30
      %s34 = sphi 0, %s33
      %s50 = sphi 0, %s34
      %s56 = sphi 0, %s58
      %s59 = sphi 0, %s56
      %s60 = sphi 0, %s59
      %s76 = sphi 0, %s60
      %s80 = sphi 0, %s80
      %s82 = sphi 0, %s80
      %s83 = sphi 0, %s82
      %s97 = sphi 0, %s83
      %s101 = sphi 0, %s101
      %s103 = sphi 0, %s101
      %s104 = sphi 0, %s103
      %s118 = sphi 0, %s104
      %s122 = sphi 0, %s122
      %s124 = sphi 0, %s122
      %s125 = sphi 0, %s124
      %s139 = sphi 0, %s125
      %s143 = sphi 0, %s143
      %s145 = sphi 0, %s143
      %s146 = sphi 0, %s145
      %s160 = sphi 0, %s146
      %s164 = sphi 0, %s164
      %s166 = sphi 0, %s164
      %s167 = sphi 0, %s166
      %s181 = sphi 0, %s167
      %s185 = sphi 0, %s185
      %s187 = sphi 0, %s185
      %s188 = sphi 0, %s187
      %s202 = sphi 0, %s188
      %s206 = sphi 0, %s206
      %s208 = sphi 0, %s206
      %s209 = sphi 0, %s208
      %s223 = sphi 0, %s209
      %s227 = sphi 0, %s227
      %s229 = sphi 0, %s227
      %s230 = sphi 0, %s229
      %s244 = sphi 0, %s230
      %s250 = sphi 0, %s252
      %s253 = sphi 0, %s250
      %s254 = sphi 0, %s253
      %s270 = sphi 0, %s254
    $region4: #{tpu_custom_call.1} parent=1 // loop_header_branch
      %23 = sbr.rel (%p21) target = $region8
    $region5: #{tpu_custom_call.1} parent=1 // loop_body
      %s25 = ssub.s32 %s20, 1
      %s26 = ssub.s32 %s20, 2
      %s27 = sadd.s32 %s20, 1
      %s28 = ssub.s32 %s20, %s27
      %p29 = scmp.eq.s32.totalorder %s28, 0
      %s31 = sadd.s32 %s30, 1
      %s32 = scalar_select %p29, %s30, %s31
      %p35 = pneg %p29
      %p36 = scmp.eq.s32.totalorder %s20, 1
      %p37 = por %p35, %p36
      %p38 = scmp.ne.s32.totalorder %s30, %s33
      %p39 = scmp.eq.s32.totalorder %s20, 0
      %p40 = por %p38, %p39
      %p41 = scmp.ne.s32.totalorder %s30, %s33
      %p42 = scmp.eq.s32.totalorder %s25, 1
      %p43 = por %p41, %p42
      %p44 = scmp.ne.s32.totalorder %s33, %s34
      %p45 = scmp.eq.s32.totalorder %s25, 0
      %p46 = por %p44, %p45
      %p47 = scmp.ne.s32.totalorder %s33, %s34
      %p48 = scmp.eq.s32.totalorder %s26, 1
      %p49 = por %p47, %p48
      %p51 = scmp.ne.s32.totalorder %s34, %s50
      %p52 = scmp.eq.s32.totalorder %s26, 0
      %p53 = por %p51, %p52
      %s54 = ssub.s32 %s20, %s27
      %p55 = scmp.eq.s32.totalorder %s54, 0
      %s57 = sadd.s32 %s56, 1
      %s58 = scalar_select %p55, %s56, %s57
      %p61 = pneg %p55
      %p62 = scmp.eq.s32.totalorder %s20, 1
      %p63 = por %p61, %p62
      %p64 = scmp.ne.s32.totalorder %s56, %s59
      %p65 = scmp.eq.s32.totalorder %s20, 0
      %p66 = por %p64, %p65
      %p67 = scmp.ne.s32.totalorder %s56, %s59
      %p68 = scmp.eq.s32.totalorder %s25, 1
      %p69 = por %p67, %p68
      %p70 = scmp.ne.s32.totalorder %s59, %s60
      %p71 = scmp.eq.s32.totalorder %s25, 0
      %p72 = por %p70, %p71
      %p73 = scmp.ne.s32.totalorder %s59, %s60
      %p74 = scmp.eq.s32.totalorder %s26, 1
      %p75 = por %p73, %p74
      %p77 = scmp.ne.s32.totalorder %s60, %s76
      %p78 = scmp.eq.s32.totalorder %s26, 0
      %p79 = por %p77, %p78
      %s81 = sadd.s32 %s80, 1
      %p84 = scmp.eq.s32.totalorder %s20, 1
      %p85 = scmp.ne.s32.totalorder %s80, %s82
      %p86 = scmp.eq.s32.totalorder %s20, 0
      %p87 = por %p85, %p86
      %p88 = scmp.ne.s32.totalorder %s80, %s82
      %p89 = scmp.eq.s32.totalorder %s25, 1
      %p90 = por %p88, %p89
      %p91 = scmp.ne.s32.totalorder %s82, %s83
      %p92 = scmp.eq.s32.totalorder %s25, 0
      %p93 = por %p91, %p92
      %p94 = scmp.ne.s32.totalorder %s82, %s83
      %p95 = scmp.eq.s32.totalorder %s26, 1
      %p96 = por %p94, %p95
      %p98 = scmp.ne.s32.totalorder %s83, %s97
      %p99 = scmp.eq.s32.totalorder %s26, 0
      %p100 = por %p98, %p99
      %s102 = sadd.s32 %s101, 1
      %p105 = scmp.eq.s32.totalorder %s20, 1
      %p106 = scmp.ne.s32.totalorder %s101, %s103
      %p107 = scmp.eq.s32.totalorder %s20, 0
      %p108 = por %p106, %p107
      %p109 = scmp.ne.s32.totalorder %s101, %s103
      %p110 = scmp.eq.s32.totalorder %s25, 1
      %p111 = por %p109, %p110
      %p112 = scmp.ne.s32.totalorder %s103, %s104
      %p113 = scmp.eq.s32.totalorder %s25, 0
      %p114 = por %p112, %p113
      %p115 = scmp.ne.s32.totalorder %s103, %s104
      %p116 = scmp.eq.s32.totalorder %s26, 1
      %p117 = por %p115, %p116
      %p119 = scmp.ne.s32.totalorder %s104, %s118
      %p120 = scmp.eq.s32.totalorder %s26, 0
      %p121 = por %p119, %p120
      %s123 = sadd.s32 %s122, 1
      %p126 = scmp.eq.s32.totalorder %s20, 1
      %p127 = scmp.ne.s32.totalorder %s122, %s124
      %p128 = scmp.eq.s32.totalorder %s20, 0
      %p129 = por %p127, %p128
      %p130 = scmp.ne.s32.totalorder %s122, %s124
      %p131 = scmp.eq.s32.totalorder %s25, 1
      %p132 = por %p130, %p131
      %p133 = scmp.ne.s32.totalorder %s124, %s125
      %p134 = scmp.eq.s32.totalorder %s25, 0
      %p135 = por %p133, %p134
      %p136 = scmp.ne.s32.totalorder %s124, %s125
      %p137 = scmp.eq.s32.totalorder %s26, 1
      %p138 = por %p136, %p137
      %p140 = scmp.ne.s32.totalorder %s125, %s139
      %p141 = scmp.eq.s32.totalorder %s26, 0
      %p142 = por %p140, %p141
      %s144 = sadd.s32 %s143, 1
      %p147 = scmp.eq.s32.totalorder %s20, 1
      %p148 = scmp.ne.s32.totalorder %s143, %s145
      %p149 = scmp.eq.s32.totalorder %s20, 0
      %p150 = por %p148, %p149
      %p151 = scmp.ne.s32.totalorder %s143, %s145
      %p152 = scmp.eq.s32.totalorder %s25, 1
      %p153 = por %p151, %p152
      %p154 = scmp.ne.s32.totalorder %s145, %s146
      %p155 = scmp.eq.s32.totalorder %s25, 0
      %p156 = por %p154, %p155
      %p157 = scmp.ne.s32.totalorder %s145, %s146
      %p158 = scmp.eq.s32.totalorder %s26, 1
      %p159 = por %p157, %p158
      %p161 = scmp.ne.s32.totalorder %s146, %s160
      %p162 = scmp.eq.s32.totalorder %s26, 0
      %p163 = por %p161, %p162
      %s165 = sadd.s32 %s164, 1
      %p168 = scmp.eq.s32.totalorder %s20, 1
      %p169 = scmp.ne.s32.totalorder %s164, %s166
      %p170 = scmp.eq.s32.totalorder %s20, 0
      %p171 = por %p169, %p170
      %p172 = scmp.ne.s32.totalorder %s164, %s166
      %p173 = scmp.eq.s32.totalorder %s25, 1
      %p174 = por %p172, %p173
      %p175 = scmp.ne.s32.totalorder %s166, %s167
      %p176 = scmp.eq.s32.totalorder %s25, 0
      %p177 = por %p175, %p176
      %p178 = scmp.ne.s32.totalorder %s166, %s167
      %p179 = scmp.eq.s32.totalorder %s26, 1
      %p180 = por %p178, %p179
      %p182 = scmp.ne.s32.totalorder %s167, %s181
      %p183 = scmp.eq.s32.totalorder %s26, 0
      %p184 = por %p182, %p183
      %s186 = sadd.s32 %s185, 1
      %p189 = scmp.eq.s32.totalorder %s20, 1
      %p190 = scmp.ne.s32.totalorder %s185, %s187
      %p191 = scmp.eq.s32.totalorder %s20, 0
      %p192 = por %p190, %p191
      %p193 = scmp.ne.s32.totalorder %s185, %s187
      %p194 = scmp.eq.s32.totalorder %s25, 1
      %p195 = por %p193, %p194
      %p196 = scmp.ne.s32.totalorder %s187, %s188
      %p197 = scmp.eq.s32.totalorder %s25, 0
      %p198 = por %p196, %p197
      %p199 = scmp.ne.s32.totalorder %s187, %s188
      %p200 = scmp.eq.s32.totalorder %s26, 1
      %p201 = por %p199, %p200
      %p203 = scmp.ne.s32.totalorder %s188, %s202
      %p204 = scmp.eq.s32.totalorder %s26, 0
      %p205 = por %p203, %p204
      %s207 = sadd.s32 %s206, 1
      %p210 = scmp.eq.s32.totalorder %s20, 1
      %p211 = scmp.ne.s32.totalorder %s206, %s208
      %p212 = scmp.eq.s32.totalorder %s20, 0
      %p213 = por %p211, %p212
      %p214 = scmp.ne.s32.totalorder %s206, %s208
      %p215 = scmp.eq.s32.totalorder %s25, 1
      %p216 = por %p214, %p215
      %p217 = scmp.ne.s32.totalorder %s208, %s209
      %p218 = scmp.eq.s32.totalorder %s25, 0
      %p219 = por %p217, %p218
      %p220 = scmp.ne.s32.totalorder %s208, %s209
      %p221 = scmp.eq.s32.totalorder %s26, 1
      %p222 = por %p220, %p221
      %p224 = scmp.ne.s32.totalorder %s209, %s223
      %p225 = scmp.eq.s32.totalorder %s26, 0
      %p226 = por %p224, %p225
      %s228 = sadd.s32 %s227, 1
      %p231 = scmp.eq.s32.totalorder %s20, 1
      %p232 = scmp.ne.s32.totalorder %s227, %s229
      %p233 = scmp.eq.s32.totalorder %s20, 0
      %p234 = por %p232, %p233
      %p235 = scmp.ne.s32.totalorder %s227, %s229
      %p236 = scmp.eq.s32.totalorder %s25, 1
      %p237 = por %p235, %p236
      %p238 = scmp.ne.s32.totalorder %s229, %s230
      %p239 = scmp.eq.s32.totalorder %s25, 0
      %p240 = por %p238, %p239
      %p241 = scmp.ne.s32.totalorder %s229, %s230
      %p242 = scmp.eq.s32.totalorder %s26, 1
      %p243 = por %p241, %p242
      %p245 = scmp.ne.s32.totalorder %s230, %s244
      %p246 = scmp.eq.s32.totalorder %s26, 0
      %p247 = por %p245, %p246
      %s248 = ssub.s32 %s20, %s27
      %p249 = scmp.eq.s32.totalorder %s248, 0
      %s251 = sadd.s32 %s250, 1
      %s252 = scalar_select %p249, %s250, %s251
      %p255 = pneg %p249
      %p256 = scmp.eq.s32.totalorder %s20, 1
      %p257 = por %p255, %p256
      %p258 = scmp.ne.s32.totalorder %s250, %s253
      %p259 = scmp.eq.s32.totalorder %s20, 0
      %p260 = por %p258, %p259
      %p261 = scmp.ne.s32.totalorder %s250, %s253
      %p262 = scmp.eq.s32.totalorder %s25, 1
      %p263 = por %p261, %p262
      %p264 = scmp.ne.s32.totalorder %s253, %s254
      %p265 = scmp.eq.s32.totalorder %s25, 0
      %p266 = por %p264, %p265
      %p267 = scmp.ne.s32.totalorder %s253, %s254
      %p268 = scmp.eq.s32.totalorder %s26, 1
      %p269 = por %p267, %p268
      %p271 = scmp.ne.s32.totalorder %s254, %s270
      %p272 = scmp.eq.s32.totalorder %s26, 0
      %p273 = por %p271, %p272
      %p274 = scmp.le.s32.totalorder 1, %s20
      %p275 = scmp.lt.s32.totalorder %s20, 3
      %p276 = pnand %p274, %p275
      %p277 = pneg %p276
      // Predicated region
      $region9: #{tpu_custom_call.1} parent=5 // pred_check
        _
      $region10: #{tpu_custom_call.1} parent=5 // pred_check_branch
        %279 = sbr.rel (%p276) target = $region12
      $region11: #{tpu_custom_call.1} parent=5 // pred_region
        %s280 = ssub.s32 %s20, 1
        // Predicated region
        $region13: #{tpu_custom_call.1} parent=11 // pred_check
          %p281 = pneg %p93
        $region14: #{tpu_custom_call.1} parent=11 // pred_check_branch
          %283 = sbr.rel (%p281) target = $region16
        $region15: #{tpu_custom_call.1} parent=11 // pred_region
          _
        $region16: #{tpu_custom_call.1} parent=11 // pred_fallthru
          _
        // Predicated region
        $region17: #{tpu_custom_call.1} parent=11 // pred_check
          %p284 = pneg %p114
        $region18: #{tpu_custom_call.1} parent=11 // pred_check_branch
          %286 = sbr.rel (%p284) target = $region20
        $region19: #{tpu_custom_call.1} parent=11 // pred_region
          _
        $region20: #{tpu_custom_call.1} parent=11 // pred_fallthru
          _
        // Predicated region
        $region21: #{tpu_custom_call.1} parent=11 // pred_check
          %p287 = pneg %p135
        $region22: #{tpu_custom_call.1} parent=11 // pred_check_branch
          %289 = sbr.rel (%p287) target = $region24
        $region23: #{tpu_custom_call.1} parent=11 // pred_region
          _
        $region24: #{tpu_custom_call.1} parent=11 // pred_fallthru
          _
        // Predicated region
        $region25: #{tpu_custom_call.1} parent=11 // pred_check
          %p290 = pneg %p156
        $region26: #{tpu_custom_call.1} parent=11 // pred_check_branch
          %292 = sbr.rel (%p290) target = $region28
        $region27: #{tpu_custom_call.1} parent=11 // pred_region
          _
        $region28: #{tpu_custom_call.1} parent=11 // pred_fallthru
          _
        // Predicated region
        $region29: #{tpu_custom_call.1} parent=11 // pred_check
          %p293 = pneg %p177
        $region30: #{tpu_custom_call.1} parent=11 // pred_check_branch
          %295 = sbr.rel (%p293) target = $region32
        $region31: #{tpu_custom_call.1} parent=11 // pred_region
          _
        $region32: #{tpu_custom_call.1} parent=11 // pred_fallthru
          _
        // Predicated region
        $region33: #{tpu_custom_call.1} parent=11 // pred_check
          %p296 = pneg %p198
        $region34: #{tpu_custom_call.1} parent=11 // pred_check_branch
          %298 = sbr.rel (%p296) target = $region36
        $region35: #{tpu_custom_call.1} parent=11 // pred_region
          _
        $region36: #{tpu_custom_call.1} parent=11 // pred_fallthru
          _
        // Predicated region
        $region37: #{tpu_custom_call.1} parent=11 // pred_check
          %p299 = pneg %p219
        $region38: #{tpu_custom_call.1} parent=11 // pred_check_branch
          %301 = sbr.rel (%p299) target = $region40
        $region39: #{tpu_custom_call.1} parent=11 // pred_region
          _
        $region40: #{tpu_custom_call.1} parent=11 // pred_fallthru
          _
        // Predicated region
        $region41: #{tpu_custom_call.1} parent=11 // pred_check
          %p302 = pneg %p240
        $region42: #{tpu_custom_call.1} parent=11 // pred_check_branch
          %304 = sbr.rel (%p302) target = $region44
        $region43: #{tpu_custom_call.1} parent=11 // pred_region
          _
        $region44: #{tpu_custom_call.1} parent=11 // pred_fallthru
          _
      $region12: #{tpu_custom_call.1} parent=5 // pred_fallthru
        _
      %p305 = scmp.lt.s32.totalorder %s20, 2
      // Predicated region
      $region45: #{tpu_custom_call.1} parent=5 // pred_check
        %p306 = pneg %p305
      $region46: #{tpu_custom_call.1} parent=5 // pred_check_branch
        %308 = sbr.rel (%p306) target = $region48
      $region47: #{tpu_custom_call.1} parent=5 // pred_region
        // Predicated region
        $region49: #{tpu_custom_call.1} parent=47 // pred_check
          %p309 = pneg %p40
        $region50: #{tpu_custom_call.1} parent=47 // pred_check_branch
          %311 = sbr.rel (%p309) target = $region52
        $region51: #{tpu_custom_call.1} parent=47 // pred_region
          %s312 = sand.u32 %s30, 1
          %s313 = sand.u32 %s30, 1
          %s314 = smul.addr %s313, 32
          %s315 = scalar_lea.vmem [#allocation3], %s314
          %s316 = smul.addr %s20, 2
          %s317 = scalar_lea.vmem %s0, %s316
          // Predicated region
          $region53: #{tpu_custom_call.1} parent=51 // pred_check
            _
          $region54: #{tpu_custom_call.1} parent=51 // pred_check_branch
            %319 = sbr.rel (0) target = $region56
          $region55: #{tpu_custom_call.1} parent=51 // pred_region
            // Predicated region
            $region57: #{tpu_custom_call.1} parent=55 // pred_check
              _
            $region58: #{tpu_custom_call.1} parent=55 // pred_check_branch
              %321 = sbr.rel target = $region60
            $region59: #{tpu_custom_call.1} parent=55 // pred_region
              // Predicated region
              $region72: #{tpu_custom_call.1} parent=59 // pred_check
                _
              $region73: #{tpu_custom_call.1} parent=59 // pred_check_branch
                %366 = sbr.rel (0) target = $region75
              $region74: #{tpu_custom_call.1} parent=59 // pred_region
                loop: start=0, step=1, limit=1
                $region76: #{tpu_custom_call.1} parent=74 // loop_pre_header
                  _
                $region77: #{tpu_custom_call.1} parent=74 // loop_header
                  %s368 = sphi 0, %s372
                  %p369 = scmp.ge.s32.totalorder %s368, 1
                  %s373 = sphi %s317, %s317
                  %s374 = sphi %s315, %s315
                $region78: #{tpu_custom_call.1} parent=74 // loop_header_branch
                  %371 = sbr.rel (%p369) target = $region82
                $region79: #{tpu_custom_call.1} parent=74 // loop_body
                  _
                $region80: #{tpu_custom_call.1} parent=74 // loop_footer
                  %s372 = sadd.s32 1, %s368
                $region81: #{tpu_custom_call.1} parent=74 // loop_footer_branch
                  %367 = sbr.rel target = $region77
                $region82: #{tpu_custom_call.1} parent=74 // loop_exit
                  _
                loop: start=0, step=1, limit=1
                $region83: #{tpu_custom_call.1} parent=74 // loop_pre_header
                  _
                $region84: #{tpu_custom_call.1} parent=74 // loop_header
                  %s377 = sphi 0, %s381
                  %p378 = scmp.ge.s32.totalorder %s377, 1
                  %s382 = sphi %s317, %s317
                  %s383 = sphi %s315, %s315
                $region85: #{tpu_custom_call.1} parent=74 // loop_header_branch
                  %380 = sbr.rel (%p378) target = $region89
                $region86: #{tpu_custom_call.1} parent=74 // loop_body
                  %v384 = vld [vmem:[%s382] sm:$0x3]
                  %385 = vst [vmem:[%s383] sm:$0x3] %v384
                  %v386 = vld [vmem:[%s382 + $0x4] sm:$0x3]
                  %387 = vst [vmem:[%s383 + $0x2] sm:$0x3] %v386
                  %v388 = vld [vmem:[%s382 + $0x8] sm:$0x3]
                  %389 = vst [vmem:[%s383 + $0x4] sm:$0x3] %v388
                  %v390 = vld [vmem:[%s382 + $0xc] sm:$0x3]
                  %391 = vst [vmem:[%s383 + $0x6] sm:$0x3] %v390
                  %v392 = vld [vmem:[%s382 + $0x10] sm:$0x3]
                  %393 = vst [vmem:[%s383 + $0x8] sm:$0x3] %v392
                  %v394 = vld [vmem:[%s382 + $0x14] sm:$0x3]
                  %395 = vst [vmem:[%s383 + $0xa] sm:$0x3] %v394
                  %v396 = vld [vmem:[%s382 + $0x18] sm:$0x3]
                  %397 = vst [vmem:[%s383 + $0xc] sm:$0x3] %v396
                  %v398 = vld [vmem:[%s382 + $0x1c] sm:$0x3]
                  %399 = vst [vmem:[%s383 + $0xe] sm:$0x3] %v398
                  %v400 = vld [vmem:[%s382 + $0x20] sm:$0x3]
                  %401 = vst [vmem:[%s383 + $0x10] sm:$0x3] %v400
                  %v402 = vld [vmem:[%s382 + $0x24] sm:$0x3]
                  %403 = vst [vmem:[%s383 + $0x12] sm:$0x3] %v402
                  %v404 = vld [vmem:[%s382 + $0x28] sm:$0x3]
                  %405 = vst [vmem:[%s383 + $0x14] sm:$0x3] %v404
                  %v406 = vld [vmem:[%s382 + $0x2c] sm:$0x3]
                  %407 = vst [vmem:[%s383 + $0x16] sm:$0x3] %v406
                  %v408 = vld [vmem:[%s382 + $0x30] sm:$0x3]
                  %409 = vst [vmem:[%s383 + $0x18] sm:$0x3] %v408
                  %v410 = vld [vmem:[%s382 + $0x34] sm:$0x3]
                  %411 = vst [vmem:[%s383 + $0x1a] sm:$0x3] %v410
                  %v412 = vld [vmem:[%s382 + $0x38] sm:$0x3]
                  %413 = vst [vmem:[%s383 + $0x1c] sm:$0x3] %v412
                  %v414 = vld [vmem:[%s382 + $0x3c] sm:$0x3]
                  %415 = vst [vmem:[%s383 + $0x1e] sm:$0x3] %v414
                $region87: #{tpu_custom_call.1} parent=74 // loop_footer
                  %s381 = sadd.s32 1, %s377
                $region88: #{tpu_custom_call.1} parent=74 // loop_footer_branch
                  %376 = sbr.rel target = $region84
                $region89: #{tpu_custom_call.1} parent=74 // loop_exit
                  _
              $region75: #{tpu_custom_call.1} parent=59 // pred_fallthru
                _
            $region60: #{tpu_custom_call.1} parent=55 // pred_fallthru
              _
            // Predicated region
            $region61: #{tpu_custom_call.1} parent=55 // pred_check
              _
            $region62: #{tpu_custom_call.1} parent=55 // pred_check_branch
              %323 = sbr.rel (0) target = $region64
            $region63: #{tpu_custom_call.1} parent=55 // pred_region
              loop: start=0, step=1, limit=1
              $region65: #{tpu_custom_call.1} parent=63 // loop_pre_header
                _
              $region66: #{tpu_custom_call.1} parent=63 // loop_header
                %s326 = sphi 0, %s330
                %p327 = scmp.ge.s32.totalorder %s326, 1
                %s331 = sphi %s317, %s317
                %s332 = sphi %s315, %s315
              $region67: #{tpu_custom_call.1} parent=63 // loop_header_branch
                %329 = sbr.rel (%p327) target = $region71
              $region68: #{tpu_custom_call.1} parent=63 // loop_body
                %v333 = vld [vmem:[%s331] sm:$0x3]
                %334 = vst [vmem:[%s332] sm:$0x3] %v333
                %v335 = vld [vmem:[%s331 + $0x4] sm:$0x3]
                %336 = vst [vmem:[%s332 + $0x2] sm:$0x3] %v335
                %v337 = vld [vmem:[%s331 + $0x8] sm:$0x3]
                %338 = vst [vmem:[%s332 + $0x4] sm:$0x3] %v337
                %v339 = vld [vmem:[%s331 + $0xc] sm:$0x3]
                %340 = vst [vmem:[%s332 + $0x6] sm:$0x3] %v339
                %v341 = vld [vmem:[%s331 + $0x10] sm:$0x3]
                %342 = vst [vmem:[%s332 + $0x8] sm:$0x3] %v341
                %v343 = vld [vmem:[%s331 + $0x14] sm:$0x3]
                %344 = vst [vmem:[%s332 + $0xa] sm:$0x3] %v343
                %v345 = vld [vmem:[%s331 + $0x18] sm:$0x3]
                %346 = vst [vmem:[%s332 + $0xc] sm:$0x3] %v345
                %v347 = vld [vmem:[%s331 + $0x1c] sm:$0x3]
                %348 = vst [vmem:[%s332 + $0xe] sm:$0x3] %v347
                %v349 = vld [vmem:[%s331 + $0x20] sm:$0x3]
                %350 = vst [vmem:[%s332 + $0x10] sm:$0x3] %v349
                %v351 = vld [vmem:[%s331 + $0x24] sm:$0x3]
                %352 = vst [vmem:[%s332 + $0x12] sm:$0x3] %v351
                %v353 = vld [vmem:[%s331 + $0x28] sm:$0x3]
                %354 = vst [vmem:[%s332 + $0x14] sm:$0x3] %v353
                %v355 = vld [vmem:[%s331 + $0x2c] sm:$0x3]
                %356 = vst [vmem:[%s332 + $0x16] sm:$0x3] %v355
                %v357 = vld [vmem:[%s331 + $0x30] sm:$0x3]
                %358 = vst [vmem:[%s332 + $0x18] sm:$0x3] %v357
                %v359 = vld [vmem:[%s331 + $0x34] sm:$0x3]
                %360 = vst [vmem:[%s332 + $0x1a] sm:$0x3] %v359
                %v361 = vld [vmem:[%s331 + $0x38] sm:$0x3]
                %362 = vst [vmem:[%s332 + $0x1c] sm:$0x3] %v361
                %v363 = vld [vmem:[%s331 + $0x3c] sm:$0x3]
                %364 = vst [vmem:[%s332 + $0x1e] sm:$0x3] %v363
              $region69: #{tpu_custom_call.1} parent=63 // loop_footer
                %s330 = sadd.s32 1, %s326
              $region70: #{tpu_custom_call.1} parent=63 // loop_footer_branch
                %325 = sbr.rel target = $region66
              $region71: #{tpu_custom_call.1} parent=63 // loop_exit
                _
            $region64: #{tpu_custom_call.1} parent=55 // pred_fallthru
              _
          $region56: #{tpu_custom_call.1} parent=51 // pred_fallthru
            _
          %416 = vnop
        $region52: #{tpu_custom_call.1} parent=47 // pred_fallthru
          _
        // Predicated region
        $region90: #{tpu_custom_call.1} parent=47 // pred_check
          %p417 = pneg %p66
        $region91: #{tpu_custom_call.1} parent=47 // pred_check_branch
          %419 = sbr.rel (%p417) target = $region93
        $region92: #{tpu_custom_call.1} parent=47 // pred_region
          %s420 = sand.u32 %s56, 1
          %s421 = sand.u32 %s56, 1
          %s422 = smul.addr %s421, 16
          %s423 = scalar_lea.vmem [#allocation4], %s422
          %s424 = smul.addr %s20, 8
          %s425 = scalar_lea.vmem %s1, %s424
          // Predicated region
          $region94: #{tpu_custom_call.1} parent=92 // pred_check
            _
          $region95: #{tpu_custom_call.1} parent=92 // pred_check_branch
            %427 = sbr.rel (0) target = $region97
          $region96: #{tpu_custom_call.1} parent=92 // pred_region
            // Predicated region
            $region98: #{tpu_custom_call.1} parent=96 // pred_check
              _
            $region99: #{tpu_custom_call.1} parent=96 // pred_check_branch
              %429 = sbr.rel (0) target = $region101
            $region100: #{tpu_custom_call.1} parent=96 // pred_region
              // Predicated region
              $region113: #{tpu_custom_call.1} parent=100 // pred_check
                _
              $region114: #{tpu_custom_call.1} parent=100 // pred_check_branch
                %446 = sbr.rel (0) target = $region116
              $region115: #{tpu_custom_call.1} parent=100 // pred_region
                loop: start=0, step=1, limit=1
                $region117: #{tpu_custom_call.1} parent=115 // loop_pre_header
                  _
                $region118: #{tpu_custom_call.1} parent=115 // loop_header
                  %s448 = sphi 0, %s452
                  %p449 = scmp.ge.s32.totalorder %s448, 1
                  %s453 = sphi %s425, %s425
                  %s454 = sphi %s423, %s423
                $region119: #{tpu_custom_call.1} parent=115 // loop_header_branch
                  %451 = sbr.rel (%p449) target = $region123
                $region120: #{tpu_custom_call.1} parent=115 // loop_body
                  %v455 = vld [vmem:[%s453] sm:$0xff]
                  %456 = vst [vmem:[%s454] sm:$0xff] %v455
                  %v457 = vld [vmem:[%s453 + $0x10] sm:$0xff]
                  %458 = vst [vmem:[%s454 + $0x8] sm:$0xff] %v457
                $region121: #{tpu_custom_call.1} parent=115 // loop_footer
                  %s452 = sadd.s32 1, %s448
                $region122: #{tpu_custom_call.1} parent=115 // loop_footer_branch
                  %447 = sbr.rel target = $region118
                $region123: #{tpu_custom_call.1} parent=115 // loop_exit
                  _
              $region116: #{tpu_custom_call.1} parent=100 // pred_fallthru
                _
              // Predicated region
              $region124: #{tpu_custom_call.1} parent=100 // pred_check
                _
              $region125: #{tpu_custom_call.1} parent=100 // pred_check_branch
                %460 = sbr.rel target = $region127
              $region126: #{tpu_custom_call.1} parent=100 // pred_region
                _
              $region127: #{tpu_custom_call.1} parent=100 // pred_fallthru
                _
            $region101: #{tpu_custom_call.1} parent=96 // pred_fallthru
              _
            // Predicated region
            $region102: #{tpu_custom_call.1} parent=96 // pred_check
              _
            $region103: #{tpu_custom_call.1} parent=96 // pred_check_branch
              %431 = sbr.rel target = $region105
            $region104: #{tpu_custom_call.1} parent=96 // pred_region
              loop: start=0, step=1, limit=1
              $region106: #{tpu_custom_call.1} parent=104 // loop_pre_header
                _
              $region107: #{tpu_custom_call.1} parent=104 // loop_header
                %s434 = sphi 0, %s438
                %p435 = scmp.ge.s32.totalorder %s434, 1
                %s439 = sphi %s425, %s425
                %s440 = sphi %s423, %s423
              $region108: #{tpu_custom_call.1} parent=104 // loop_header_branch
                %437 = sbr.rel (%p435) target = $region112
              $region109: #{tpu_custom_call.1} parent=104 // loop_body
                %v441 = vld [vmem:[%s439] sm:$0xff]
                %442 = vst [vmem:[%s440] sm:$0xff] %v441
                %v443 = vld [vmem:[%s439 + $0x10] sm:$0xff]
                %444 = vst [vmem:[%s440 + $0x8] sm:$0xff] %v443
              $region110: #{tpu_custom_call.1} parent=104 // loop_footer
                %s438 = sadd.s32 1, %s434
              $region111: #{tpu_custom_call.1} parent=104 // loop_footer_branch
                %433 = sbr.rel target = $region107
              $region112: #{tpu_custom_call.1} parent=104 // loop_exit
                _
            $region105: #{tpu_custom_call.1} parent=96 // pred_fallthru
              _
          $region97: #{tpu_custom_call.1} parent=92 // pred_fallthru
            _
          %461 = vnop
        $region93: #{tpu_custom_call.1} parent=47 // pred_fallthru
          _
      $region48: #{tpu_custom_call.1} parent=5 // pred_fallthru
        _
      %p462 = scmp.le.s32.totalorder 1, %s20
      %p463 = scmp.lt.s32.totalorder %s20, 3
      %p464 = pnand %p462, %p463
      %p465 = pneg %p464
      // Predicated region
      $region128: #{tpu_custom_call.1} parent=5 // pred_check
        _
      $region129: #{tpu_custom_call.1} parent=5 // pred_check_branch
        %467 = sbr.rel (%p464) target = $region131
      $region130: #{tpu_custom_call.1} parent=5 // pred_region
        %s468 = ssub.s32 %s20, 1
        %s469 = sand.u32 %s33, 1
        %s470 = sand.u32 %s33, 1
        %s471 = smul.addr %s470, 32
        %s472 = scalar_lea.vmem [#allocation3], %s471
        // Predicated region
        $region132: #{tpu_custom_call.1} parent=130 // pred_check
          %p473 = pneg %p46
        $region133: #{tpu_custom_call.1} parent=130 // pred_check_branch
          %475 = sbr.rel (%p473) target = $region135
        $region134: #{tpu_custom_call.1} parent=130 // pred_region
          _
        $region135: #{tpu_custom_call.1} parent=130 // pred_fallthru
          _
        %s476 = sand.u32 %s59, 1
        %s477 = sand.u32 %s59, 1
        %s478 = smul.addr %s477, 16
        %s479 = scalar_lea.vmem [#allocation4], %s478
        // Predicated region
        $region136: #{tpu_custom_call.1} parent=130 // pred_check
          %p480 = pneg %p72
        $region137: #{tpu_custom_call.1} parent=130 // pred_check_branch
          %482 = sbr.rel (%p480) target = $region139
        $region138: #{tpu_custom_call.1} parent=130 // pred_region
          _
        $region139: #{tpu_custom_call.1} parent=130 // pred_fallthru
          _
        %s483 = sand.u32 %s33, 1
        %s484 = sand.u32 %s33, 1
        %s485 = smul.addr %s484, 32
        %s486 = scalar_lea.vmem [#allocation3], %s485
        %p487 = pneg %p46
        %p488 = pneg %p43
        %s489 = sand.u32 %s59, 1
        %s490 = sand.u32 %s59, 1
        %s491 = smul.addr %s490, 16
        %s492 = scalar_lea.vmem [#allocation4], %s491
        %p493 = pneg %p72
        %p494 = pneg %p69
        %p495 = pneg %p93
        %p496 = pneg %p90
        %p497 = pneg %p114
        %p498 = pneg %p111
        %p499 = pneg %p135
        %p500 = pneg %p132
        %p501 = pneg %p156
        %p502 = pneg %p153
        %p503 = pneg %p177
        %p504 = pneg %p174
        %p505 = pneg %p198
        %p506 = pneg %p195
        %p507 = pneg %p219
        %p508 = pneg %p216
        %p509 = pneg %p240
        %p510 = pneg %p237
        %p511 = pneg %p266
        %p512 = pneg %p263
        %s513 = sand.u32 %s253, 1
        %s514 = scalar_lea.sflag [#allocation6], %s513
        %s515 = sand.u32 %s253, 1
        %s516 = scalar_lea.vmem [#allocation5], %s515
        %v518 = vld [vmem:[%s2] sm:$0xf]
        %v519 = vld [vmem:[%s2 + $0x4] sm:$0xf]
        %v520 = vld [vmem:[%s2 + $0x8] sm:$0xf]
        %v521 = vld [vmem:[%s2 + $0xc] sm:$0xf]
        %v522 = vld [vmem:[%s2 + $0x10] sm:$0xf]
        %v523 = vld [vmem:[%s2 + $0x14] sm:$0xf]
        %v524 = vld [vmem:[%s2 + $0x18] sm:$0xf]
        %v525 = vld [vmem:[%s2 + $0x1c] sm:$0xf]
        %v526 = vld [vmem:[%s2 + $0x20] sm:$0xf]
        %v527 = vld [vmem:[%s2 + $0x24] sm:$0xf]
        %v528 = vld [vmem:[%s2 + $0x28] sm:$0xf]
        %v529 = vld [vmem:[%s2 + $0x2c] sm:$0xf]
        %v530 = vld [vmem:[%s2 + $0x30] sm:$0xf]
        %v531 = vld [vmem:[%s2 + $0x34] sm:$0xf]
        %v532 = vld [vmem:[%s2 + $0x38] sm:$0xf]
        %v533 = vld [vmem:[%s2 + $0x3c] sm:$0xf]
        %v534 = vld [vmem:[%s3] sm:$0xff]
        %v535 = vld [vmem:[%s3 + $0x8] sm:$0xff]
        %v536 = vld [vmem:[%s3 + $0x10] sm:$0xff]
        %v537 = vld [vmem:[%s3 + $0x18] sm:$0xff]
        %v538 = vld [vmem:[%s3 + $0x20] sm:$0xff]
        %v539 = vld [vmem:[%s3 + $0x28] sm:$0xff]
        %v540 = vld [vmem:[%s3 + $0x30] sm:$0xff]
        %v541 = vld [vmem:[%s3 + $0x38] sm:$0xff]
        %v542 = vld [vmem:[%s3 + $0x40] sm:$0xff]
        %v543 = vld [vmem:[%s3 + $0x48] sm:$0xff]
        %v544 = vld [vmem:[%s3 + $0x50] sm:$0xff]
        %v545 = vld [vmem:[%s3 + $0x58] sm:$0xff]
        %v546 = vld [vmem:[%s3 + $0x60] sm:$0xff]
        %v547 = vld [vmem:[%s3 + $0x68] sm:$0xff]
        %v548 = vld [vmem:[%s3 + $0x70] sm:$0xff]
        %v549 = vld [vmem:[%s3 + $0x78] sm:$0xff]
        %v550 = vld [vmem:[%s472] sm:$0x3]
        %552 = vset.pattern.permute.xlu0 0
        %553 = vperm.xlu0 %552, %v534
        %v554 = vpop.permute.xlu0 %553
        %557 = vset.pattern.permute.xlu0 0
        %558 = vperm.xlu0 %557, %v535
        %v559 = vpop.permute.xlu0 %558
        %562 = vset.pattern.permute.xlu0 0
        %563 = vperm.xlu0 %562, %v536
        %v564 = vpop.permute.xlu0 %563
        %567 = vset.pattern.permute.xlu0 0
        %568 = vperm.xlu0 %567, %v537
        %v569 = vpop.permute.xlu0 %568
        %572 = vset.pattern.permute.xlu0 0
        %573 = vperm.xlu0 %572, %v538
        %v574 = vpop.permute.xlu0 %573
        %577 = vset.pattern.permute.xlu0 0
        %578 = vperm.xlu0 %577, %v539
        %v579 = vpop.permute.xlu0 %578
        %582 = vset.pattern.permute.xlu0 0
        %583 = vperm.xlu0 %582, %v540
        %v584 = vpop.permute.xlu0 %583
        %587 = vset.pattern.permute.xlu0 0
        %588 = vperm.xlu0 %587, %v541
        %v589 = vpop.permute.xlu0 %588
        %592 = vset.pattern.permute.xlu0 0
        %593 = vperm.xlu0 %592, %v542
        %v594 = vpop.permute.xlu0 %593
        %597 = vset.pattern.permute.xlu0 0
        %598 = vperm.xlu0 %597, %v543
        %v599 = vpop.permute.xlu0 %598
        %602 = vset.pattern.permute.xlu0 0
        %603 = vperm.xlu0 %602, %v544
        %v604 = vpop.permute.xlu0 %603
        %607 = vset.pattern.permute.xlu0 0
        %608 = vperm.xlu0 %607, %v545
        %v609 = vpop.permute.xlu0 %608
        %612 = vset.pattern.permute.xlu0 0
        %613 = vperm.xlu0 %612, %v546
        %v614 = vpop.permute.xlu0 %613
        %617 = vset.pattern.permute.xlu0 0
        %618 = vperm.xlu0 %617, %v547
        %v619 = vpop.permute.xlu0 %618
        %622 = vset.pattern.permute.xlu0 0
        %623 = vperm.xlu0 %622, %v548
        %v624 = vpop.permute.xlu0 %623
        %627 = vset.pattern.permute.xlu0 0
        %628 = vperm.xlu0 %627, %v549
        %v629 = vpop.permute.xlu0 %628
        %v647 = vunpack.c.l.b16 %v518
        %v648 = vunpack.c.l.b16 %v519
        %v649 = vunpack.c.l.b16 %v520
        %v650 = vunpack.c.l.b16 %v521
        %v651 = vunpack.c.l.b16 %v522
        %v652 = vunpack.c.l.b16 %v523
        %v653 = vunpack.c.l.b16 %v524
        %v654 = vunpack.c.l.b16 %v525
        %v655 = vunpack.c.l.b16 %v526
        %v656 = vunpack.c.l.b16 %v527
        %v657 = vunpack.c.l.b16 %v528
        %v658 = vunpack.c.l.b16 %v529
        %v659 = vunpack.c.l.b16 %v530
        %v660 = vunpack.c.l.b16 %v531
        %v661 = vunpack.c.l.b16 %v532
        %v662 = vunpack.c.l.b16 %v533
        %v663 = vpack.c.b16 %v648, %v647
        %v664 = vpack.c.b16 %v650, %v649
        %v665 = vpack.c.b16 %v652, %v651
        %v666 = vpack.c.b16 %v654, %v653
        %v667 = vpack.c.b16 %v656, %v655
        %v668 = vpack.c.b16 %v658, %v657
        %v669 = vpack.c.b16 %v660, %v659
        %v670 = vpack.c.b16 %v662, %v661
        %vm671 = vcmask 31744
        %v673 = vsel %vm671, %v663, 0
        %v676 = vsel %vm671, %v664, 0
        %v679 = vsel %vm671, %v665, 0
        %v682 = vsel %vm671, %v666, 0
        %v685 = vsel %vm671, %v667, 0
        %v688 = vsel %vm671, %v668, 0
        %v691 = vsel %vm671, %v669, 0
        %v694 = vsel %vm671, %v670, 0
        %vm696 = vcmask 1041408
        %v698 = vsel %vm696, %v550, 0
        %700 = vmatprep.subr.bf16.mxu0 0
        %701 = vmatpush1.bf16.msra.mxu0 %v698
        %702 = vmatprep.subr.bf16.mxu0 0
        %703 = vmatpush1.bf16.msra.mxu0 0
        %704 = vmatprep.subr.bf16.mxu0 0
        %705 = vmatpush1.bf16.msra.mxu0 0
        %706 = vmatprep.subr.bf16.mxu0 0
        %707 = vmatpush1.bf16.msra.mxu0 0
        %708 = vmatprep.subr.bf16.mxu0 0
        %709 = vmatpush1.bf16.msra.mxu0 0
        %710 = vmatprep.subr.bf16.mxu0 0
        %711 = vmatpush1.bf16.msra.mxu0 0
        %712 = vmatprep.subr.bf16.mxu0 0
        %713 = vmatpush1.bf16.msra.mxu0 0
        %714 = vmatprep.subr.bf16.mxu0 0
        %715 = vmatpush1.bf16.msra.mxu0 0
        %716 = vmatprep.subr.bf16.mxu0 0
        %717 = vmatpush1.bf16.msra.mxu0 0
        %718 = vmatprep.subr.bf16.mxu0 0
        %719 = vmatpush1.bf16.msra.mxu0 0
        %720 = vmatprep.subr.bf16.mxu0 0
        %721 = vmatpush1.bf16.msra.mxu0 0
        %722 = vmatprep.subr.bf16.mxu0 0
        %723 = vmatpush1.bf16.msra.mxu0 0
        %724 = vmatprep.subr.bf16.mxu0 0
        %725 = vmatpush1.bf16.msra.mxu0 0
        %726 = vmatprep.subr.bf16.mxu0 0
        %727 = vmatpush1.bf16.msra.mxu0 0
        %728 = vmatprep.subr.bf16.mxu0 0
        %729 = vmatpush1.bf16.msra.mxu0 0
        %730 = vmatprep.subr.bf16.mxu0 0
        %731 = vmatpush1.bf16.msra.mxu0 0
        %732 = vmatprep.mubr.bf16.mxu0 0
        %733 = vmatmul.mubr.bf16.gmra.mrb[0].mxu0 %v673
        %v734 = vpop.f32.mrb[0].mxu0
        %v735 = vadd.f32 %v554, %v734
        %v736 = vpop.f32.mrb[0].mxu0
        %v737 = vpop.f32.mrb[0].mxu0
        %v738 = vadd.f32 %v559, %v737
        %v739 = vpop.f32.mrb[0].mxu0
        %740 = vmatprep.mubr.bf16.mxu0 0
        %741 = vmatmul.mubr.bf16.gmra.mrb[0].mxu0 %v676
        %v742 = vpop.f32.mrb[0].mxu0
        %v743 = vadd.f32 %v564, %v742
        %v744 = vpop.f32.mrb[0].mxu0
        %v745 = vpop.f32.mrb[0].mxu0
        %v746 = vadd.f32 %v569, %v745
        %v747 = vpop.f32.mrb[0].mxu0
        %748 = vmatprep.mubr.bf16.mxu0 0
        %749 = vmatmul.mubr.bf16.gmra.mrb[0].mxu0 %v679
        %v750 = vpop.f32.mrb[0].mxu0
        %v751 = vadd.f32 %v574, %v750
        %v752 = vpop.f32.mrb[0].mxu0
        %v753 = vpop.f32.mrb[0].mxu0
        %v754 = vadd.f32 %v579, %v753
        %v755 = vpop.f32.mrb[0].mxu0
        %756 = vmatprep.mubr.bf16.mxu0 0
        %757 = vmatmul.mubr.bf16.gmra.mrb[0].mxu0 %v682
        %v758 = vpop.f32.mrb[0].mxu0
        %v759 = vadd.f32 %v584, %v758
        %v760 = vpop.f32.mrb[0].mxu0
        %v761 = vpop.f32.mrb[0].mxu0
        %v762 = vadd.f32 %v589, %v761
        %v763 = vpop.f32.mrb[0].mxu0
        %764 = vmatprep.mubr.bf16.mxu0 0
        %765 = vmatmul.mubr.bf16.gmra.mrb[0].mxu0 %v685
        %v766 = vpop.f32.mrb[0].mxu0
        %v767 = vadd.f32 %v594, %v766
        %v768 = vpop.f32.mrb[0].mxu0
        %v769 = vpop.f32.mrb[0].mxu0
        %v770 = vadd.f32 %v599, %v769
        %v771 = vpop.f32.mrb[0].mxu0
        %772 = vmatprep.mubr.bf16.mxu0 0
        %773 = vmatmul.mubr.bf16.gmra.mrb[0].mxu0 %v688
        %v774 = vpop.f32.mrb[0].mxu0
        %v775 = vadd.f32 %v604, %v774
        %v776 = vpop.f32.mrb[0].mxu0
        %v777 = vpop.f32.mrb[0].mxu0
        %v778 = vadd.f32 %v609, %v777
        %v779 = vpop.f32.mrb[0].mxu0
        %780 = vmatprep.mubr.bf16.mxu0 0
        %781 = vmatmul.mubr.bf16.gmra.mrb[0].mxu0 %v691
        %v782 = vpop.f32.mrb[0].mxu0
        %v783 = vadd.f32 %v614, %v782
        %v784 = vpop.f32.mrb[0].mxu0
        %v785 = vpop.f32.mrb[0].mxu0
        %v786 = vadd.f32 %v619, %v785
        %v787 = vpop.f32.mrb[0].mxu0
        %788 = vmatprep.mubr.bf16.mxu0 0
        %789 = vmatmul.mubr.bf16.gmra.mrb[0].mxu0 %v694
        %v790 = vpop.f32.mrb[0].mxu0
        %v791 = vadd.f32 %v624, %v790
        %v792 = vpop.f32.mrb[0].mxu0
        %v793 = vpop.f32.mrb[0].mxu0
        %v794 = vadd.f32 %v629, %v793
        %v795 = vpop.f32.mrb[0].mxu0
        %796 = vdwg.mxu0
        %v797 = vmax.f32 %v735, 0.0
        %v798 = vmax.f32 %v738, 0.0
        %v799 = vmax.f32 %v743, 0.0
        %v800 = vmax.f32 %v746, 0.0
        %v801 = vmax.f32 %v751, 0.0
        %v802 = vmax.f32 %v754, 0.0
        %v803 = vmax.f32 %v759, 0.0
        %v804 = vmax.f32 %v762, 0.0
        %v805 = vmax.f32 %v767, 0.0
        %v806 = vmax.f32 %v770, 0.0
        %v807 = vmax.f32 %v775, 0.0
        %v808 = vmax.f32 %v778, 0.0
        %v809 = vmax.f32 %v783, 0.0
        %v810 = vmax.f32 %v786, 0.0
        %v811 = vmax.f32 %v791, 0.0
        %v812 = vmax.f32 %v794, 0.0
        %v813 = vld [vmem:[%s479] sm:$0x1]
        %v814 = vlaneseq
        %v815 = vshrl.u32 %v814, 7
        %v816 = vsub.s32 0, %v815
        %v817 = vrot.slane %v813, %v816
        %v818 = vmul.f32 %v817, %v797
        %v819 = vmul.f32 %v817, %v798
        %v820 = vmul.f32 %v817, %v799
        %v821 = vmul.f32 %v817, %v800
        %v822 = vmul.f32 %v817, %v801
        %v823 = vmul.f32 %v817, %v802
        %v824 = vmul.f32 %v817, %v803
        %v825 = vmul.f32 %v817, %v804
        %v826 = vmul.f32 %v817, %v805
        %v827 = vmul.f32 %v817, %v806
        %v828 = vmul.f32 %v817, %v807
        %v829 = vmul.f32 %v817, %v808
        %v830 = vmul.f32 %v817, %v809
        %v831 = vmul.f32 %v817, %v810
        %v832 = vmul.f32 %v817, %v811
        %v833 = vmul.f32 %v817, %v812
        %v834 = vadd.f32 %v818, 0.0
        %v835 = vadd.f32 %v819, 0.0
        %v836 = vadd.f32 %v820, 0.0
        %v837 = vadd.f32 %v821, 0.0
        %v838 = vadd.f32 %v822, 0.0
        %v839 = vadd.f32 %v823, 0.0
        %v840 = vadd.f32 %v824, 0.0
        %v841 = vadd.f32 %v825, 0.0
        %v842 = vadd.f32 %v826, 0.0
        %v843 = vadd.f32 %v827, 0.0
        %v844 = vadd.f32 %v828, 0.0
        %v845 = vadd.f32 %v829, 0.0
        %v846 = vadd.f32 %v830, 0.0
        %v847 = vadd.f32 %v831, 0.0
        %v848 = vadd.f32 %v832, 0.0
        %v849 = vadd.f32 %v833, 0.0
        %s850 = scalar_lea.vmem %s472, 2 [#allocation3]
        %v851 = vld [vmem:[%s850] sm:$0x3]
        %v853 = vsel %vm696, %v851, 0
        %855 = vmatprep.subr.bf16.mxu0 0
        %856 = vmatpush1.bf16.msra.mxu0 %v853
        %857 = vmatprep.subr.bf16.mxu0 0
        %858 = vmatpush1.bf16.msra.mxu0 0
        %859 = vmatprep.subr.bf16.mxu0 0
        %860 = vmatpush1.bf16.msra.mxu0 0
        %861 = vmatprep.subr.bf16.mxu0 0
        %862 = vmatpush1.bf16.msra.mxu0 0
        %863 = vmatprep.subr.bf16.mxu0 0
        %864 = vmatpush1.bf16.msra.mxu0 0
        %865 = vmatprep.subr.bf16.mxu0 0
        %866 = vmatpush1.bf16.msra.mxu0 0
        %867 = vmatprep.subr.bf16.mxu0 0
        %868 = vmatpush1.bf16.msra.mxu0 0
        %869 = vmatprep.subr.bf16.mxu0 0
        %870 = vmatpush1.bf16.msra.mxu0 0
        %871 = vmatprep.subr.bf16.mxu0 0
        %872 = vmatpush1.bf16.msra.mxu0 0
        %873 = vmatprep.subr.bf16.mxu0 0
        %874 = vmatpush1.bf16.msra.mxu0 0
        %875 = vmatprep.subr.bf16.mxu0 0
        %876 = vmatpush1.bf16.msra.mxu0 0
        %877 = vmatprep.subr.bf16.mxu0 0
        %878 = vmatpush1.bf16.msra.mxu0 0
        %879 = vmatprep.subr.bf16.mxu0 0
        %880 = vmatpush1.bf16.msra.mxu0 0
        %881 = vmatprep.subr.bf16.mxu0 0
        %882 = vmatpush1.bf16.msra.mxu0 0
        %883 = vmatprep.subr.bf16.mxu0 0
        %884 = vmatpush1.bf16.msra.mxu0 0
        %885 = vmatprep.subr.bf16.mxu0 0
        %886 = vmatpush1.bf16.msra.mxu0 0
        %887 = vmatprep.mubr.bf16.mxu0 0
        %888 = vmatmul.mubr.bf16.gmra.mrb[0].mxu0 %v673
        %v889 = vpop.f32.mrb[0].mxu0
        %v890 = vadd.f32 %v554, %v889
        %v891 = vpop.f32.mrb[0].mxu0
        %v892 = vpop.f32.mrb[0].mxu0
        %v893 = vadd.f32 %v559, %v892
        %v894 = vpop.f32.mrb[0].mxu0
        %895 = vmatprep.mubr.bf16.mxu0 0
        %896 = vmatmul.mubr.bf16.gmra.mrb[0].mxu0 %v676
        %v897 = vpop.f32.mrb[0].mxu0
        %v898 = vadd.f32 %v564, %v897
        %v899 = vpop.f32.mrb[0].mxu0
        %v900 = vpop.f32.mrb[0].mxu0
        %v901 = vadd.f32 %v569, %v900
        %v902 = vpop.f32.mrb[0].mxu0
        %903 = vmatprep.mubr.bf16.mxu0 0
        %904 = vmatmul.mubr.bf16.gmra.mrb[0].mxu0 %v679
        %v905 = vpop.f32.mrb[0].mxu0
        %v906 = vadd.f32 %v574, %v905
        %v907 = vpop.f32.mrb[0].mxu0
        %v908 = vpop.f32.mrb[0].mxu0
        %v909 = vadd.f32 %v579, %v908
        %v910 = vpop.f32.mrb[0].mxu0
        %911 = vmatprep.mubr.bf16.mxu0 0
        %912 = vmatmul.mubr.bf16.gmra.mrb[0].mxu0 %v682
        %v913 = vpop.f32.mrb[0].mxu0
        %v914 = vadd.f32 %v584, %v913
        %v915 = vpop.f32.mrb[0].mxu0
        %v916 = vpop.f32.mrb[0].mxu0
        %v917 = vadd.f32 %v589, %v916
        %v918 = vpop.f32.mrb[0].mxu0
        %919 = vmatprep.mubr.bf16.mxu0 0
        %920 = vmatmul.mubr.bf16.gmra.mrb[0].mxu0 %v685
        %v921 = vpop.f32.mrb[0].mxu0
        %v922 = vadd.f32 %v594, %v921
        %v923 = vpop.f32.mrb[0].mxu0
        %v924 = vpop.f32.mrb[0].mxu0
        %v925 = vadd.f32 %v599, %v924
        %v926 = vpop.f32.mrb[0].mxu0
        %927 = vmatprep.mubr.bf16.mxu0 0
        %928 = vmatmul.mubr.bf16.gmra.mrb[0].mxu0 %v688
        %v929 = vpop.f32.mrb[0].mxu0
        %v930 = vadd.f32 %v604, %v929
        %v931 = vpop.f32.mrb[0].mxu0
        %v932 = vpop.f32.mrb[0].mxu0
        %v933 = vadd.f32 %v609, %v932
        %v934 = vpop.f32.mrb[0].mxu0
        %935 = vmatprep.mubr.bf16.mxu0 0
        %936 = vmatmul.mubr.bf16.gmra.mrb[0].mxu0 %v691
        %v937 = vpop.f32.mrb[0].mxu0
        %v938 = vadd.f32 %v614, %v937
        %v939 = vpop.f32.mrb[0].mxu0
        %v940 = vpop.f32.mrb[0].mxu0
        %v941 = vadd.f32 %v619, %v940
        %v942 = vpop.f32.mrb[0].mxu0
        %943 = vmatprep.mubr.bf16.mxu0 0
        %944 = vmatmul.mubr.bf16.gmra.mrb[0].mxu0 %v694
        %v945 = vpop.f32.mrb[0].mxu0
        %v946 = vadd.f32 %v624, %v945
        %v947 = vpop.f32.mrb[0].mxu0
        %v948 = vpop.f32.mrb[0].mxu0
        %v949 = vadd.f32 %v629, %v948
        %v950 = vpop.f32.mrb[0].mxu0
        %951 = vdwg.mxu0
        %v952 = vmax.f32 %v890, 0.0
        %v953 = vmax.f32 %v893, 0.0
        %v954 = vmax.f32 %v898, 0.0
        %v955 = vmax.f32 %v901, 0.0
        %v956 = vmax.f32 %v906, 0.0
        %v957 = vmax.f32 %v909, 0.0
        %v958 = vmax.f32 %v914, 0.0
        %v959 = vmax.f32 %v917, 0.0
        %v960 = vmax.f32 %v922, 0.0
        %v961 = vmax.f32 %v925, 0.0
        %v962 = vmax.f32 %v930, 0.0
        %v963 = vmax.f32 %v933, 0.0
        %v964 = vmax.f32 %v938, 0.0
        %v965 = vmax.f32 %v941, 0.0
        %v966 = vmax.f32 %v946, 0.0
        %v967 = vmax.f32 %v949, 0.0
        %v968 = vld [vmem:[%s479 + $0x1] sm:$0x1]
        %v969 = vlaneseq
        %v970 = vshrl.u32 %v969, 7
        %v971 = vsub.s32 0, %v970
        %v972 = vrot.slane %v968, %v971
        %v973 = vmul.f32 %v972, %v952
        %v974 = vmul.f32 %v972, %v953
        %v975 = vmul.f32 %v972, %v954
        %v976 = vmul.f32 %v972, %v955
        %v977 = vmul.f32 %v972, %v956
        %v978 = vmul.f32 %v972, %v957
        %v979 = vmul.f32 %v972, %v958
        %v980 = vmul.f32 %v972, %v959
        %v981 = vmul.f32 %v972, %v960
        %v982 = vmul.f32 %v972, %v961
        %v983 = vmul.f32 %v972, %v962
        %v984 = vmul.f32 %v972, %v963
        %v985 = vmul.f32 %v972, %v964
        %v986 = vmul.f32 %v972, %v965
        %v987 = vmul.f32 %v972, %v966
        %v988 = vmul.f32 %v972, %v967
        %v989 = vadd.f32 %v834, %v973
        %v990 = vadd.f32 %v835, %v974
        %v991 = vadd.f32 %v836, %v975
        %v992 = vadd.f32 %v837, %v976
        %v993 = vadd.f32 %v838, %v977
        %v994 = vadd.f32 %v839, %v978
        %v995 = vadd.f32 %v840, %v979
        %v996 = vadd.f32 %v841, %v980
        %v997 = vadd.f32 %v842, %v981
        %v998 = vadd.f32 %v843, %v982
        %v999 = vadd.f32 %v844, %v983
        %v1000 = vadd.f32 %v845, %v984
        %v1001 = vadd.f32 %v846, %v985
        %v1002 = vadd.f32 %v847, %v986
        %v1003 = vadd.f32 %v848, %v987
        %v1004 = vadd.f32 %v849, %v988
        %s1005 = scalar_lea.vmem %s472, 4 [#allocation3]
        %v1006 = vld [vmem:[%s1005] sm:$0x3]
        %v1008 = vsel %vm696, %v1006, 0
        %1010 = vmatprep.subr.bf16.mxu0 0
        %1011 = vmatpush1.bf16.msra.mxu0 %v1008
        %1012 = vmatprep.subr.bf16.mxu0 0
        %1013 = vmatpush1.bf16.msra.mxu0 0
        %1014 = vmatprep.subr.bf16.mxu0 0
        %1015 = vmatpush1.bf16.msra.mxu0 0
        %1016 = vmatprep.subr.bf16.mxu0 0
        %1017 = vmatpush1.bf16.msra.mxu0 0
        %1018 = vmatprep.subr.bf16.mxu0 0
        %1019 = vmatpush1.bf16.msra.mxu0 0
        %1020 = vmatprep.subr.bf16.mxu0 0
        %1021 = vmatpush1.bf16.msra.mxu0 0
        %1022 = vmatprep.subr.bf16.mxu0 0
        %1023 = vmatpush1.bf16.msra.mxu0 0
        %1024 = vmatprep.subr.bf16.mxu0 0
        %1025 = vmatpush1.bf16.msra.mxu0 0
        %1026 = vmatprep.subr.bf16.mxu0 0
        %1027 = vmatpush1.bf16.msra.mxu0 0
        %1028 = vmatprep.subr.bf16.mxu0 0
        %1029 = vmatpush1.bf16.msra.mxu0 0
        %1030 = vmatprep.subr.bf16.mxu0 0
        %1031 = vmatpush1.bf16.msra.mxu0 0
        %1032 = vmatprep.subr.bf16.mxu0 0
        %1033 = vmatpush1.bf16.msra.mxu0 0
        %1034 = vmatprep.subr.bf16.mxu0 0
        %1035 = vmatpush1.bf16.msra.mxu0 0
        %1036 = vmatprep.subr.bf16.mxu0 0
        %1037 = vmatpush1.bf16.msra.mxu0 0
        %1038 = vmatprep.subr.bf16.mxu0 0
        %1039 = vmatpush1.bf16.msra.mxu0 0
        %1040 = vmatprep.subr.bf16.mxu0 0
        %1041 = vmatpush1.bf16.msra.mxu0 0
        %1042 = vmatprep.mubr.bf16.mxu0 0
        %1043 = vmatmul.mubr.bf16.gmra.mrb[0].mxu0 %v673
        %v1044 = vpop.f32.mrb[0].mxu0
        %v1045 = vadd.f32 %v554, %v1044
        %v1046 = vpop.f32.mrb[0].mxu0
        %v1047 = vpop.f32.mrb[0].mxu0
        %v1048 = vadd.f32 %v559, %v1047
        %v1049 = vpop.f32.mrb[0].mxu0
        %1050 = vmatprep.mubr.bf16.mxu0 0
        %1051 = vmatmul.mubr.bf16.gmra.mrb[0].mxu0 %v676
        %v1052 = vpop.f32.mrb[0].mxu0
        %v1053 = vadd.f32 %v564, %v1052
        %v1054 = vpop.f32.mrb[0].mxu0
        %v1055 = vpop.f32.mrb[0].mxu0
        %v1056 = vadd.f32 %v569, %v1055
        %v1057 = vpop.f32.mrb[0].mxu0
        %1058 = vmatprep.mubr.bf16.mxu0 0
        %1059 = vmatmul.mubr.bf16.gmra.mrb[0].mxu0 %v679
        %v1060 = vpop.f32.mrb[0].mxu0
        %v1061 = vadd.f32 %v574, %v1060
        %v1062 = vpop.f32.mrb[0].mxu0
        %v1063 = vpop.f32.mrb[0].mxu0
        %v1064 = vadd.f32 %v579, %v1063
        %v1065 = vpop.f32.mrb[0].mxu0
        %1066 = vmatprep.mubr.bf16.mxu0 0
        %1067 = vmatmul.mubr.bf16.gmra.mrb[0].mxu0 %v682
        %v1068 = vpop.f32.mrb[0].mxu0
        %v1069 = vadd.f32 %v584, %v1068
        %v1070 = vpop.f32.mrb[0].mxu0
        %v1071 = vpop.f32.mrb[0].mxu0
        %v1072 = vadd.f32 %v589, %v1071
        %v1073 = vpop.f32.mrb[0].mxu0
        %1074 = vmatprep.mubr.bf16.mxu0 0
        %1075 = vmatmul.mubr.bf16.gmra.mrb[0].mxu0 %v685
        %v1076 = vpop.f32.mrb[0].mxu0
        %v1077 = vadd.f32 %v594, %v1076
        %v1078 = vpop.f32.mrb[0].mxu0
        %v1079 = vpop.f32.mrb[0].mxu0
        %v1080 = vadd.f32 %v599, %v1079
        %v1081 = vpop.f32.mrb[0].mxu0
        %1082 = vmatprep.mubr.bf16.mxu0 0
        %1083 = vmatmul.mubr.bf16.gmra.mrb[0].mxu0 %v688
        %v1084 = vpop.f32.mrb[0].mxu0
        %v1085 = vadd.f32 %v604, %v1084
        %v1086 = vpop.f32.mrb[0].mxu0
        %v1087 = vpop.f32.mrb[0].mxu0
        %v1088 = vadd.f32 %v609, %v1087
        %v1089 = vpop.f32.mrb[0].mxu0
        %1090 = vmatprep.mubr.bf16.mxu0 0
        %1091 = vmatmul.mubr.bf16.gmra.mrb[0].mxu0 %v691
        %v1092 = vpop.f32.mrb[0].mxu0
        %v1093 = vadd.f32 %v614, %v1092
        %v1094 = vpop.f32.mrb[0].mxu0
        %v1095 = vpop.f32.mrb[0].mxu0
        %v1096 = vadd.f32 %v619, %v1095
        %v1097 = vpop.f32.mrb[0].mxu0
        %1098 = vmatprep.mubr.bf16.mxu0 0
        %1099 = vmatmul.mubr.bf16.gmra.mrb[0].mxu0 %v694
        %v1100 = vpop.f32.mrb[0].mxu0
        %v1101 = vadd.f32 %v624, %v1100
        %v1102 = vpop.f32.mrb[0].mxu0
        %v1103 = vpop.f32.mrb[0].mxu0
        %v1104 = vadd.f32 %v629, %v1103
        %v1105 = vpop.f32.mrb[0].mxu0
        %1106 = vdwg.mxu0
        %v1107 = vmax.f32 %v1045, 0.0
        %v1108 = vmax.f32 %v1048, 0.0
        %v1109 = vmax.f32 %v1053, 0.0
        %v1110 = vmax.f32 %v1056, 0.0
        %v1111 = vmax.f32 %v1061, 0.0
        %v1112 = vmax.f32 %v1064, 0.0
        %v1113 = vmax.f32 %v1069, 0.0
        %v1114 = vmax.f32 %v1072, 0.0
        %v1115 = vmax.f32 %v1077, 0.0
        %v1116 = vmax.f32 %v1080, 0.0
        %v1117 = vmax.f32 %v1085, 0.0
        %v1118 = vmax.f32 %v1088, 0.0
        %v1119 = vmax.f32 %v1093, 0.0
        %v1120 = vmax.f32 %v1096, 0.0
        %v1121 = vmax.f32 %v1101, 0.0
        %v1122 = vmax.f32 %v1104, 0.0
        %v1123 = vld [vmem:[%s479 + $0x2] sm:$0x1]
        %v1124 = vlaneseq
        %v1125 = vshrl.u32 %v1124, 7
        %v1126 = vsub.s32 0, %v1125
        %v1127 = vrot.slane %v1123, %v1126
        %v1128 = vmul.f32 %v1127, %v1107
        %v1129 = vmul.f32 %v1127, %v1108
        %v1130 = vmul.f32 %v1127, %v1109
        %v1131 = vmul.f32 %v1127, %v1110
        %v1132 = vmul.f32 %v1127, %v1111
        %v1133 = vmul.f32 %v1127, %v1112
        %v1134 = vmul.f32 %v1127, %v1113
        %v1135 = vmul.f32 %v1127, %v1114
        %v1136 = vmul.f32 %v1127, %v1115
        %v1137 = vmul.f32 %v1127, %v1116
        %v1138 = vmul.f32 %v1127, %v1117
        %v1139 = vmul.f32 %v1127, %v1118
        %v1140 = vmul.f32 %v1127, %v1119
        %v1141 = vmul.f32 %v1127, %v1120
        %v1142 = vmul.f32 %v1127, %v1121
        %v1143 = vmul.f32 %v1127, %v1122
        %v1144 = vadd.f32 %v989, %v1128
        %v1145 = vadd.f32 %v990, %v1129
        %v1146 = vadd.f32 %v991, %v1130
        %v1147 = vadd.f32 %v992, %v1131
        %v1148 = vadd.f32 %v993, %v1132
        %v1149 = vadd.f32 %v994, %v1133
        %v1150 = vadd.f32 %v995, %v1134
        %v1151 = vadd.f32 %v996, %v1135
        %v1152 = vadd.f32 %v997, %v1136
        %v1153 = vadd.f32 %v998, %v1137
        %v1154 = vadd.f32 %v999, %v1138
        %v1155 = vadd.f32 %v1000, %v1139
        %v1156 = vadd.f32 %v1001, %v1140
        %v1157 = vadd.f32 %v1002, %v1141
        %v1158 = vadd.f32 %v1003, %v1142
        %v1159 = vadd.f32 %v1004, %v1143
        %s1160 = scalar_lea.vmem %s472, 6 [#allocation3]
        %v1161 = vld [vmem:[%s1160] sm:$0x3]
        %v1163 = vsel %vm696, %v1161, 0
        %1165 = vmatprep.subr.bf16.mxu0 0
        %1166 = vmatpush1.bf16.msra.mxu0 %v1163
        %1167 = vmatprep.subr.bf16.mxu0 0
        %1168 = vmatpush1.bf16.msra.mxu0 0
        %1169 = vmatprep.subr.bf16.mxu0 0
        %1170 = vmatpush1.bf16.msra.mxu0 0
        %1171 = vmatprep.subr.bf16.mxu0 0
        %1172 = vmatpush1.bf16.msra.mxu0 0
        %1173 = vmatprep.subr.bf16.mxu0 0
        %1174 = vmatpush1.bf16.msra.mxu0 0
        %1175 = vmatprep.subr.bf16.mxu0 0
        %1176 = vmatpush1.bf16.msra.mxu0 0
        %1177 = vmatprep.subr.bf16.mxu0 0
        %1178 = vmatpush1.bf16.msra.mxu0 0
        %1179 = vmatprep.subr.bf16.mxu0 0
        %1180 = vmatpush1.bf16.msra.mxu0 0
        %1181 = vmatprep.subr.bf16.mxu0 0
        %1182 = vmatpush1.bf16.msra.mxu0 0
        %1183 = vmatprep.subr.bf16.mxu0 0
        %1184 = vmatpush1.bf16.msra.mxu0 0
        %1185 = vmatprep.subr.bf16.mxu0 0
        %1186 = vmatpush1.bf16.msra.mxu0 0
        %1187 = vmatprep.subr.bf16.mxu0 0
        %1188 = vmatpush1.bf16.msra.mxu0 0
        %1189 = vmatprep.subr.bf16.mxu0 0
        %1190 = vmatpush1.bf16.msra.mxu0 0
        %1191 = vmatprep.subr.bf16.mxu0 0
        %1192 = vmatpush1.bf16.msra.mxu0 0
        %1193 = vmatprep.subr.bf16.mxu0 0
        %1194 = vmatpush1.bf16.msra.mxu0 0
        %1195 = vmatprep.subr.bf16.mxu0 0
        %1196 = vmatpush1.bf16.msra.mxu0 0
        %1197 = vmatprep.mubr.bf16.mxu0 0
        %1198 = vmatmul.mubr.bf16.gmra.mrb[0].mxu0 %v673
        %v1199 = vpop.f32.mrb[0].mxu0
        %v1200 = vadd.f32 %v554, %v1199
        %v1201 = vpop.f32.mrb[0].mxu0
        %v1202 = vpop.f32.mrb[0].mxu0
        %v1203 = vadd.f32 %v559, %v1202
        %v1204 = vpop.f32.mrb[0].mxu0
        %1205 = vmatprep.mubr.bf16.mxu0 0
        %1206 = vmatmul.mubr.bf16.gmra.mrb[0].mxu0 %v676
        %v1207 = vpop.f32.mrb[0].mxu0
        %v1208 = vadd.f32 %v564, %v1207
        %v1209 = vpop.f32.mrb[0].mxu0
        %v1210 = vpop.f32.mrb[0].mxu0
        %v1211 = vadd.f32 %v569, %v1210
        %v1212 = vpop.f32.mrb[0].mxu0
        %1213 = vmatprep.mubr.bf16.mxu0 0
        %1214 = vmatmul.mubr.bf16.gmra.mrb[0].mxu0 %v679
        %v1215 = vpop.f32.mrb[0].mxu0
        %v1216 = vadd.f32 %v574, %v1215
        %v1217 = vpop.f32.mrb[0].mxu0
        %v1218 = vpop.f32.mrb[0].mxu0
        %v1219 = vadd.f32 %v579, %v1218
        %v1220 = vpop.f32.mrb[0].mxu0
        %1221 = vmatprep.mubr.bf16.mxu0 0
        %1222 = vmatmul.mubr.bf16.gmra.mrb[0].mxu0 %v682
        %v1223 = vpop.f32.mrb[0].mxu0
        %v1224 = vadd.f32 %v584, %v1223
        %v1225 = vpop.f32.mrb[0].mxu0
        %v1226 = vpop.f32.mrb[0].mxu0
        %v1227 = vadd.f32 %v589, %v1226
        %v1228 = vpop.f32.mrb[0].mxu0
        %1229 = vmatprep.mubr.bf16.mxu0 0
        %1230 = vmatmul.mubr.bf16.gmra.mrb[0].mxu0 %v685
        %v1231 = vpop.f32.mrb[0].mxu0
        %v1232 = vadd.f32 %v594, %v1231
        %v1233 = vpop.f32.mrb[0].mxu0
        %v1234 = vpop.f32.mrb[0].mxu0
        %v1235 = vadd.f32 %v599, %v1234
        %v1236 = vpop.f32.mrb[0].mxu0
        %1237 = vmatprep.mubr.bf16.mxu0 0
        %1238 = vmatmul.mubr.bf16.gmra.mrb[0].mxu0 %v688
        %v1239 = vpop.f32.mrb[0].mxu0
        %v1240 = vadd.f32 %v604, %v1239
        %v1241 = vpop.f32.mrb[0].mxu0
        %v1242 = vpop.f32.mrb[0].mxu0
        %v1243 = vadd.f32 %v609, %v1242
        %v1244 = vpop.f32.mrb[0].mxu0
        %1245 = vmatprep.mubr.bf16.mxu0 0
        %1246 = vmatmul.mubr.bf16.gmra.mrb[0].mxu0 %v691
        %v1247 = vpop.f32.mrb[0].mxu0
        %v1248 = vadd.f32 %v614, %v1247
        %v1249 = vpop.f32.mrb[0].mxu0
        %v1250 = vpop.f32.mrb[0].mxu0
        %v1251 = vadd.f32 %v619, %v1250
        %v1252 = vpop.f32.mrb[0].mxu0
        %1253 = vmatprep.mubr.bf16.mxu0 0
        %1254 = vmatmul.mubr.bf16.gmra.mrb[0].mxu0 %v694
        %v1255 = vpop.f32.mrb[0].mxu0
        %v1256 = vadd.f32 %v624, %v1255
        %v1257 = vpop.f32.mrb[0].mxu0
        %v1258 = vpop.f32.mrb[0].mxu0
        %v1259 = vadd.f32 %v629, %v1258
        %v1260 = vpop.f32.mrb[0].mxu0
        %1261 = vdwg.mxu0
        %v1262 = vmax.f32 %v1200, 0.0
        %v1263 = vmax.f32 %v1203, 0.0
        %v1264 = vmax.f32 %v1208, 0.0
        %v1265 = vmax.f32 %v1211, 0.0
        %v1266 = vmax.f32 %v1216, 0.0
        %v1267 = vmax.f32 %v1219, 0.0
        %v1268 = vmax.f32 %v1224, 0.0
        %v1269 = vmax.f32 %v1227, 0.0
        %v1270 = vmax.f32 %v1232, 0.0
        %v1271 = vmax.f32 %v1235, 0.0
        %v1272 = vmax.f32 %v1240, 0.0
        %v1273 = vmax.f32 %v1243, 0.0
        %v1274 = vmax.f32 %v1248, 0.0
        %v1275 = vmax.f32 %v1251, 0.0
        %v1276 = vmax.f32 %v1256, 0.0
        %v1277 = vmax.f32 %v1259, 0.0
        %v1278 = vld [vmem:[%s479 + $0x3] sm:$0x1]
        %v1279 = vlaneseq
        %v1280 = vshrl.u32 %v1279, 7
        %v1281 = vsub.s32 0, %v1280
        %v1282 = vrot.slane %v1278, %v1281
        %v1283 = vmul.f32 %v1282, %v1262
        %v1284 = vmul.f32 %v1282, %v1263
        %v1285 = vmul.f32 %v1282, %v1264
        %v1286 = vmul.f32 %v1282, %v1265
        %v1287 = vmul.f32 %v1282, %v1266
        %v1288 = vmul.f32 %v1282, %v1267
        %v1289 = vmul.f32 %v1282, %v1268
        %v1290 = vmul.f32 %v1282, %v1269
        %v1291 = vmul.f32 %v1282, %v1270
        %v1292 = vmul.f32 %v1282, %v1271
        %v1293 = vmul.f32 %v1282, %v1272
        %v1294 = vmul.f32 %v1282, %v1273
        %v1295 = vmul.f32 %v1282, %v1274
        %v1296 = vmul.f32 %v1282, %v1275
        %v1297 = vmul.f32 %v1282, %v1276
        %v1298 = vmul.f32 %v1282, %v1277
        %v1299 = vadd.f32 %v1144, %v1283
        %v1300 = vadd.f32 %v1145, %v1284
        %v1301 = vadd.f32 %v1146, %v1285
        %v1302 = vadd.f32 %v1147, %v1286
        %v1303 = vadd.f32 %v1148, %v1287
        %v1304 = vadd.f32 %v1149, %v1288
        %v1305 = vadd.f32 %v1150, %v1289
        %v1306 = vadd.f32 %v1151, %v1290
        %v1307 = vadd.f32 %v1152, %v1291
        %v1308 = vadd.f32 %v1153, %v1292
        %v1309 = vadd.f32 %v1154, %v1293
        %v1310 = vadd.f32 %v1155, %v1294
        %v1311 = vadd.f32 %v1156, %v1295
        %v1312 = vadd.f32 %v1157, %v1296
        %v1313 = vadd.f32 %v1158, %v1297
        %v1314 = vadd.f32 %v1159, %v1298
        %s1315 = scalar_lea.vmem %s472, 8 [#allocation3]
        %v1316 = vld [vmem:[%s1315] sm:$0x3]
        %v1318 = vsel %vm696, %v1316, 0
        %1320 = vmatprep.subr.bf16.mxu0 0
        %1321 = vmatpush1.bf16.msra.mxu0 %v1318
        %1322 = vmatprep.subr.bf16.mxu0 0
        %1323 = vmatpush1.bf16.msra.mxu0 0
        %1324 = vmatprep.subr.bf16.mxu0 0
        %1325 = vmatpush1.bf16.msra.mxu0 0
        %1326 = vmatprep.subr.bf16.mxu0 0
        %1327 = vmatpush1.bf16.msra.mxu0 0
        %1328 = vmatprep.subr.bf16.mxu0 0
        %1329 = vmatpush1.bf16.msra.mxu0 0
        %1330 = vmatprep.subr.bf16.mxu0 0
        %1331 = vmatpush1.bf16.msra.mxu0 0
        %1332 = vmatprep.subr.bf16.mxu0 0
        %1333 = vmatpush1.bf16.msra.mxu0 0
        %1334 = vmatprep.subr.bf16.mxu0 0
        %1335 = vmatpush1.bf16.msra.mxu0 0
        %1336 = vmatprep.subr.bf16.mxu0 0
        %1337 = vmatpush1.bf16.msra.mxu0 0
        %1338 = vmatprep.subr.bf16.mxu0 0
        %1339 = vmatpush1.bf16.msra.mxu0 0
        %1340 = vmatprep.subr.bf16.mxu0 0
        %1341 = vmatpush1.bf16.msra.mxu0 0
        %1342 = vmatprep.subr.bf16.mxu0 0
        %1343 = vmatpush1.bf16.msra.mxu0 0
        %1344 = vmatprep.subr.bf16.mxu0 0
        %1345 = vmatpush1.bf16.msra.mxu0 0
        %1346 = vmatprep.subr.bf16.mxu0 0
        %1347 = vmatpush1.bf16.msra.mxu0 0
        %1348 = vmatprep.subr.bf16.mxu0 0
        %1349 = vmatpush1.bf16.msra.mxu0 0
        %1350 = vmatprep.subr.bf16.mxu0 0
        %1351 = vmatpush1.bf16.msra.mxu0 0
        %1352 = vmatprep.mubr.bf16.mxu0 0
        %1353 = vmatmul.mubr.bf16.gmra.mrb[0].mxu0 %v673
        %v1354 = vpop.f32.mrb[0].mxu0
        %v1355 = vadd.f32 %v554, %v1354
        %v1356 = vpop.f32.mrb[0].mxu0
        %v1357 = vpop.f32.mrb[0].mxu0
        %v1358 = vadd.f32 %v559, %v1357
        %v1359 = vpop.f32.mrb[0].mxu0
        %1360 = vmatprep.mubr.bf16.mxu0 0
        %1361 = vmatmul.mubr.bf16.gmra.mrb[0].mxu0 %v676
        %v1362 = vpop.f32.mrb[0].mxu0
        %v1363 = vadd.f32 %v564, %v1362
        %v1364 = vpop.f32.mrb[0].mxu0
        %v1365 = vpop.f32.mrb[0].mxu0
        %v1366 = vadd.f32 %v569, %v1365
        %v1367 = vpop.f32.mrb[0].mxu0
        %1368 = vmatprep.mubr.bf16.mxu0 0
        %1369 = vmatmul.mubr.bf16.gmra.mrb[0].mxu0 %v679
        %v1370 = vpop.f32.mrb[0].mxu0
        %v1371 = vadd.f32 %v574, %v1370
        %v1372 = vpop.f32.mrb[0].mxu0
        %v1373 = vpop.f32.mrb[0].mxu0
        %v1374 = vadd.f32 %v579, %v1373
        %v1375 = vpop.f32.mrb[0].mxu0
        %1376 = vmatprep.mubr.bf16.mxu0 0
        %1377 = vmatmul.mubr.bf16.gmra.mrb[0].mxu0 %v682
        %v1378 = vpop.f32.mrb[0].mxu0
        %v1379 = vadd.f32 %v584, %v1378
        %v1380 = vpop.f32.mrb[0].mxu0
        %v1381 = vpop.f32.mrb[0].mxu0
        %v1382 = vadd.f32 %v589, %v1381
        %v1383 = vpop.f32.mrb[0].mxu0
        %1384 = vmatprep.mubr.bf16.mxu0 0
        %1385 = vmatmul.mubr.bf16.gmra.mrb[0].mxu0 %v685
        %v1386 = vpop.f32.mrb[0].mxu0
        %v1387 = vadd.f32 %v594, %v1386
        %v1388 = vpop.f32.mrb[0].mxu0
        %v1389 = vpop.f32.mrb[0].mxu0
        %v1390 = vadd.f32 %v599, %v1389
        %v1391 = vpop.f32.mrb[0].mxu0
        %1392 = vmatprep.mubr.bf16.mxu0 0
        %1393 = vmatmul.mubr.bf16.gmra.mrb[0].mxu0 %v688
        %v1394 = vpop.f32.mrb[0].mxu0
        %v1395 = vadd.f32 %v604, %v1394
        %v1396 = vpop.f32.mrb[0].mxu0
        %v1397 = vpop.f32.mrb[0].mxu0
        %v1398 = vadd.f32 %v609, %v1397
        %v1399 = vpop.f32.mrb[0].mxu0
        %1400 = vmatprep.mubr.bf16.mxu0 0
        %1401 = vmatmul.mubr.bf16.gmra.mrb[0].mxu0 %v691
        %v1402 = vpop.f32.mrb[0].mxu0
        %v1403 = vadd.f32 %v614, %v1402
        %v1404 = vpop.f32.mrb[0].mxu0
        %v1405 = vpop.f32.mrb[0].mxu0
        %v1406 = vadd.f32 %v619, %v1405
        %v1407 = vpop.f32.mrb[0].mxu0
        %1408 = vmatprep.mubr.bf16.mxu0 0
        %1409 = vmatmul.mubr.bf16.gmra.mrb[0].mxu0 %v694
        %v1410 = vpop.f32.mrb[0].mxu0
        %v1411 = vadd.f32 %v624, %v1410
        %v1412 = vpop.f32.mrb[0].mxu0
        %v1413 = vpop.f32.mrb[0].mxu0
        %v1414 = vadd.f32 %v629, %v1413
        %v1415 = vpop.f32.mrb[0].mxu0
        %1416 = vdwg.mxu0
        %v1417 = vmax.f32 %v1355, 0.0
        %v1418 = vmax.f32 %v1358, 0.0
        %v1419 = vmax.f32 %v1363, 0.0
        %v1420 = vmax.f32 %v1366, 0.0
        %v1421 = vmax.f32 %v1371, 0.0
        %v1422 = vmax.f32 %v1374, 0.0
        %v1423 = vmax.f32 %v1379, 0.0
        %v1424 = vmax.f32 %v1382, 0.0
        %v1425 = vmax.f32 %v1387, 0.0
        %v1426 = vmax.f32 %v1390, 0.0
        %v1427 = vmax.f32 %v1395, 0.0
        %v1428 = vmax.f32 %v1398, 0.0
        %v1429 = vmax.f32 %v1403, 0.0
        %v1430 = vmax.f32 %v1406, 0.0
        %v1431 = vmax.f32 %v1411, 0.0
        %v1432 = vmax.f32 %v1414, 0.0
        %v1433 = vld [vmem:[%s479 + $0x4] sm:$0x1]
        %v1434 = vlaneseq
        %v1435 = vshrl.u32 %v1434, 7
        %v1436 = vsub.s32 0, %v1435
        %v1437 = vrot.slane %v1433, %v1436
        %v1438 = vmul.f32 %v1437, %v1417
        %v1439 = vmul.f32 %v1437, %v1418
        %v1440 = vmul.f32 %v1437, %v1419
        %v1441 = vmul.f32 %v1437, %v1420
        %v1442 = vmul.f32 %v1437, %v1421
        %v1443 = vmul.f32 %v1437, %v1422
        %v1444 = vmul.f32 %v1437, %v1423
        %v1445 = vmul.f32 %v1437, %v1424
        %v1446 = vmul.f32 %v1437, %v1425
        %v1447 = vmul.f32 %v1437, %v1426
        %v1448 = vmul.f32 %v1437, %v1427
        %v1449 = vmul.f32 %v1437, %v1428
        %v1450 = vmul.f32 %v1437, %v1429
        %v1451 = vmul.f32 %v1437, %v1430
        %v1452 = vmul.f32 %v1437, %v1431
        %v1453 = vmul.f32 %v1437, %v1432
        %v1454 = vadd.f32 %v1299, %v1438
        %v1455 = vadd.f32 %v1300, %v1439
        %v1456 = vadd.f32 %v1301, %v1440
        %v1457 = vadd.f32 %v1302, %v1441
        %v1458 = vadd.f32 %v1303, %v1442
        %v1459 = vadd.f32 %v1304, %v1443
        %v1460 = vadd.f32 %v1305, %v1444
        %v1461 = vadd.f32 %v1306, %v1445
        %v1462 = vadd.f32 %v1307, %v1446
        %v1463 = vadd.f32 %v1308, %v1447
        %v1464 = vadd.f32 %v1309, %v1448
        %v1465 = vadd.f32 %v1310, %v1449
        %v1466 = vadd.f32 %v1311, %v1450
        %v1467 = vadd.f32 %v1312, %v1451
        %v1468 = vadd.f32 %v1313, %v1452
        %v1469 = vadd.f32 %v1314, %v1453
        %s1470 = scalar_lea.vmem %s472, 10 [#allocation3]
        %v1471 = vld [vmem:[%s1470] sm:$0x3]
        %v1473 = vsel %vm696, %v1471, 0
        %1475 = vmatprep.subr.bf16.mxu0 0
        %1476 = vmatpush1.bf16.msra.mxu0 %v1473
        %1477 = vmatprep.subr.bf16.mxu0 0
        %1478 = vmatpush1.bf16.msra.mxu0 0
        %1479 = vmatprep.subr.bf16.mxu0 0
        %1480 = vmatpush1.bf16.msra.mxu0 0
        %1481 = vmatprep.subr.bf16.mxu0 0
        %1482 = vmatpush1.bf16.msra.mxu0 0
        %1483 = vmatprep.subr.bf16.mxu0 0
        %1484 = vmatpush1.bf16.msra.mxu0 0
        %1485 = vmatprep.subr.bf16.mxu0 0
        %1486 = vmatpush1.bf16.msra.mxu0 0
        %1487 = vmatprep.subr.bf16.mxu0 0
        %1488 = vmatpush1.bf16.msra.mxu0 0
        %1489 = vmatprep.subr.bf16.mxu0 0
        %1490 = vmatpush1.bf16.msra.mxu0 0
        %1491 = vmatprep.subr.bf16.mxu0 0
        %1492 = vmatpush1.bf16.msra.mxu0 0
        %1493 = vmatprep.subr.bf16.mxu0 0
        %1494 = vmatpush1.bf16.msra.mxu0 0
        %1495 = vmatprep.subr.bf16.mxu0 0
        %1496 = vmatpush1.bf16.msra.mxu0 0
        %1497 = vmatprep.subr.bf16.mxu0 0
        %1498 = vmatpush1.bf16.msra.mxu0 0
        %1499 = vmatprep.subr.bf16.mxu0 0
        %1500 = vmatpush1.bf16.msra.mxu0 0
        %1501 = vmatprep.subr.bf16.mxu0 0
        %1502 = vmatpush1.bf16.msra.mxu0 0
        %1503 = vmatprep.subr.bf16.mxu0 0
        %1504 = vmatpush1.bf16.msra.mxu0 0
        %1505 = vmatprep.subr.bf16.mxu0 0
        %1506 = vmatpush1.bf16.msra.mxu0 0
        %1507 = vmatprep.mubr.bf16.mxu0 0
        %1508 = vmatmul.mubr.bf16.gmra.mrb[0].mxu0 %v673
        %v1509 = vpop.f32.mrb[0].mxu0
        %v1510 = vadd.f32 %v554, %v1509
        %v1511 = vpop.f32.mrb[0].mxu0
        %v1512 = vpop.f32.mrb[0].mxu0
        %v1513 = vadd.f32 %v559, %v1512
        %v1514 = vpop.f32.mrb[0].mxu0
        %1515 = vmatprep.mubr.bf16.mxu0 0
        %1516 = vmatmul.mubr.bf16.gmra.mrb[0].mxu0 %v676
        %v1517 = vpop.f32.mrb[0].mxu0
        %v1518 = vadd.f32 %v564, %v1517
        %v1519 = vpop.f32.mrb[0].mxu0
        %v1520 = vpop.f32.mrb[0].mxu0
        %v1521 = vadd.f32 %v569, %v1520
        %v1522 = vpop.f32.mrb[0].mxu0
        %1523 = vmatprep.mubr.bf16.mxu0 0
        %1524 = vmatmul.mubr.bf16.gmra.mrb[0].mxu0 %v679
        %v1525 = vpop.f32.mrb[0].mxu0
        %v1526 = vadd.f32 %v574, %v1525
        %v1527 = vpop.f32.mrb[0].mxu0
        %v1528 = vpop.f32.mrb[0].mxu0
        %v1529 = vadd.f32 %v579, %v1528
        %v1530 = vpop.f32.mrb[0].mxu0
        %1531 = vmatprep.mubr.bf16.mxu0 0
        %1532 = vmatmul.mubr.bf16.gmra.mrb[0].mxu0 %v682
        %v1533 = vpop.f32.mrb[0].mxu0
        %v1534 = vadd.f32 %v584, %v1533
        %v1535 = vpop.f32.mrb[0].mxu0
        %v1536 = vpop.f32.mrb[0].mxu0
        %v1537 = vadd.f32 %v589, %v1536
        %v1538 = vpop.f32.mrb[0].mxu0
        %1539 = vmatprep.mubr.bf16.mxu0 0
        %1540 = vmatmul.mubr.bf16.gmra.mrb[0].mxu0 %v685
        %v1541 = vpop.f32.mrb[0].mxu0
        %v1542 = vadd.f32 %v594, %v1541
        %v1543 = vpop.f32.mrb[0].mxu0
        %v1544 = vpop.f32.mrb[0].mxu0
        %v1545 = vadd.f32 %v599, %v1544
        %v1546 = vpop.f32.mrb[0].mxu0
        %1547 = vmatprep.mubr.bf16.mxu0 0
        %1548 = vmatmul.mubr.bf16.gmra.mrb[0].mxu0 %v688
        %v1549 = vpop.f32.mrb[0].mxu0
        %v1550 = vadd.f32 %v604, %v1549
        %v1551 = vpop.f32.mrb[0].mxu0
        %v1552 = vpop.f32.mrb[0].mxu0
        %v1553 = vadd.f32 %v609, %v1552
        %v1554 = vpop.f32.mrb[0].mxu0
        %1555 = vmatprep.mubr.bf16.mxu0 0
        %1556 = vmatmul.mubr.bf16.gmra.mrb[0].mxu0 %v691
        %v1557 = vpop.f32.mrb[0].mxu0
        %v1558 = vadd.f32 %v614, %v1557
        %v1559 = vpop.f32.mrb[0].mxu0
        %v1560 = vpop.f32.mrb[0].mxu0
        %v1561 = vadd.f32 %v619, %v1560
        %v1562 = vpop.f32.mrb[0].mxu0
        %1563 = vmatprep.mubr.bf16.mxu0 0
        %1564 = vmatmul.mubr.bf16.gmra.mrb[0].mxu0 %v694
        %v1565 = vpop.f32.mrb[0].mxu0
        %v1566 = vadd.f32 %v624, %v1565
        %v1567 = vpop.f32.mrb[0].mxu0
        %v1568 = vpop.f32.mrb[0].mxu0
        %v1569 = vadd.f32 %v629, %v1568
        %v1570 = vpop.f32.mrb[0].mxu0
        %1571 = vdwg.mxu0
        %v1572 = vmax.f32 %v1510, 0.0
        %v1573 = vmax.f32 %v1513, 0.0
        %v1574 = vmax.f32 %v1518, 0.0
        %v1575 = vmax.f32 %v1521, 0.0
        %v1576 = vmax.f32 %v1526, 0.0
        %v1577 = vmax.f32 %v1529, 0.0
        %v1578 = vmax.f32 %v1534, 0.0
        %v1579 = vmax.f32 %v1537, 0.0
        %v1580 = vmax.f32 %v1542, 0.0
        %v1581 = vmax.f32 %v1545, 0.0
        %v1582 = vmax.f32 %v1550, 0.0
        %v1583 = vmax.f32 %v1553, 0.0
        %v1584 = vmax.f32 %v1558, 0.0
        %v1585 = vmax.f32 %v1561, 0.0
        %v1586 = vmax.f32 %v1566, 0.0
        %v1587 = vmax.f32 %v1569, 0.0
        %v1588 = vld [vmem:[%s479 + $0x5] sm:$0x1]
        %v1589 = vlaneseq
        %v1590 = vshrl.u32 %v1589, 7
        %v1591 = vsub.s32 0, %v1590
        %v1592 = vrot.slane %v1588, %v1591
        %v1593 = vmul.f32 %v1592, %v1572
        %v1594 = vmul.f32 %v1592, %v1573
        %v1595 = vmul.f32 %v1592, %v1574
        %v1596 = vmul.f32 %v1592, %v1575
        %v1597 = vmul.f32 %v1592, %v1576
        %v1598 = vmul.f32 %v1592, %v1577
        %v1599 = vmul.f32 %v1592, %v1578
        %v1600 = vmul.f32 %v1592, %v1579
        %v1601 = vmul.f32 %v1592, %v1580
        %v1602 = vmul.f32 %v1592, %v1581
        %v1603 = vmul.f32 %v1592, %v1582
        %v1604 = vmul.f32 %v1592, %v1583
        %v1605 = vmul.f32 %v1592, %v1584
        %v1606 = vmul.f32 %v1592, %v1585
        %v1607 = vmul.f32 %v1592, %v1586
        %v1608 = vmul.f32 %v1592, %v1587
        %v1609 = vadd.f32 %v1454, %v1593
        %v1610 = vadd.f32 %v1455, %v1594
        %v1611 = vadd.f32 %v1456, %v1595
        %v1612 = vadd.f32 %v1457, %v1596
        %v1613 = vadd.f32 %v1458, %v1597
        %v1614 = vadd.f32 %v1459, %v1598
        %v1615 = vadd.f32 %v1460, %v1599
        %v1616 = vadd.f32 %v1461, %v1600
        %v1617 = vadd.f32 %v1462, %v1601
        %v1618 = vadd.f32 %v1463, %v1602
        %v1619 = vadd.f32 %v1464, %v1603
        %v1620 = vadd.f32 %v1465, %v1604
        %v1621 = vadd.f32 %v1466, %v1605
        %v1622 = vadd.f32 %v1467, %v1606
        %v1623 = vadd.f32 %v1468, %v1607
        %v1624 = vadd.f32 %v1469, %v1608
        %s1625 = scalar_lea.vmem %s472, 12 [#allocation3]
        %v1626 = vld [vmem:[%s1625] sm:$0x3]
        %v1628 = vsel %vm696, %v1626, 0
        %1630 = vmatprep.subr.bf16.mxu0 0
        %1631 = vmatpush1.bf16.msra.mxu0 %v1628
        %1632 = vmatprep.subr.bf16.mxu0 0
        %1633 = vmatpush1.bf16.msra.mxu0 0
        %1634 = vmatprep.subr.bf16.mxu0 0
        %1635 = vmatpush1.bf16.msra.mxu0 0
        %1636 = vmatprep.subr.bf16.mxu0 0
        %1637 = vmatpush1.bf16.msra.mxu0 0
        %1638 = vmatprep.subr.bf16.mxu0 0
        %1639 = vmatpush1.bf16.msra.mxu0 0
        %1640 = vmatprep.subr.bf16.mxu0 0
        %1641 = vmatpush1.bf16.msra.mxu0 0
        %1642 = vmatprep.subr.bf16.mxu0 0
        %1643 = vmatpush1.bf16.msra.mxu0 0
        %1644 = vmatprep.subr.bf16.mxu0 0
        %1645 = vmatpush1.bf16.msra.mxu0 0
        %1646 = vmatprep.subr.bf16.mxu0 0
        %1647 = vmatpush1.bf16.msra.mxu0 0
        %1648 = vmatprep.subr.bf16.mxu0 0
        %1649 = vmatpush1.bf16.msra.mxu0 0
        %1650 = vmatprep.subr.bf16.mxu0 0
        %1651 = vmatpush1.bf16.msra.mxu0 0
        %1652 = vmatprep.subr.bf16.mxu0 0
        %1653 = vmatpush1.bf16.msra.mxu0 0
        %1654 = vmatprep.subr.bf16.mxu0 0
        %1655 = vmatpush1.bf16.msra.mxu0 0
        %1656 = vmatprep.subr.bf16.mxu0 0
        %1657 = vmatpush1.bf16.msra.mxu0 0
        %1658 = vmatprep.subr.bf16.mxu0 0
        %1659 = vmatpush1.bf16.msra.mxu0 0
        %1660 = vmatprep.subr.bf16.mxu0 0
        %1661 = vmatpush1.bf16.msra.mxu0 0
        %1662 = vmatprep.mubr.bf16.mxu0 0
        %1663 = vmatmul.mubr.bf16.gmra.mrb[0].mxu0 %v673
        %v1664 = vpop.f32.mrb[0].mxu0
        %v1665 = vadd.f32 %v554, %v1664
        %v1666 = vpop.f32.mrb[0].mxu0
        %v1667 = vpop.f32.mrb[0].mxu0
        %v1668 = vadd.f32 %v559, %v1667
        %v1669 = vpop.f32.mrb[0].mxu0
        %1670 = vmatprep.mubr.bf16.mxu0 0
        %1671 = vmatmul.mubr.bf16.gmra.mrb[0].mxu0 %v676
        %v1672 = vpop.f32.mrb[0].mxu0
        %v1673 = vadd.f32 %v564, %v1672
        %v1674 = vpop.f32.mrb[0].mxu0
        %v1675 = vpop.f32.mrb[0].mxu0
        %v1676 = vadd.f32 %v569, %v1675
        %v1677 = vpop.f32.mrb[0].mxu0
        %1678 = vmatprep.mubr.bf16.mxu0 0
        %1679 = vmatmul.mubr.bf16.gmra.mrb[0].mxu0 %v679
        %v1680 = vpop.f32.mrb[0].mxu0
        %v1681 = vadd.f32 %v574, %v1680
        %v1682 = vpop.f32.mrb[0].mxu0
        %v1683 = vpop.f32.mrb[0].mxu0
        %v1684 = vadd.f32 %v579, %v1683
        %v1685 = vpop.f32.mrb[0].mxu0
        %1686 = vmatprep.mubr.bf16.mxu0 0
        %1687 = vmatmul.mubr.bf16.gmra.mrb[0].mxu0 %v682
        %v1688 = vpop.f32.mrb[0].mxu0
        %v1689 = vadd.f32 %v584, %v1688
        %v1690 = vpop.f32.mrb[0].mxu0
        %v1691 = vpop.f32.mrb[0].mxu0
        %v1692 = vadd.f32 %v589, %v1691
        %v1693 = vpop.f32.mrb[0].mxu0
        %1694 = vmatprep.mubr.bf16.mxu0 0
        %1695 = vmatmul.mubr.bf16.gmra.mrb[0].mxu0 %v685
        %v1696 = vpop.f32.mrb[0].mxu0
        %v1697 = vadd.f32 %v594, %v1696
        %v1698 = vpop.f32.mrb[0].mxu0
        %v1699 = vpop.f32.mrb[0].mxu0
        %v1700 = vadd.f32 %v599, %v1699
        %v1701 = vpop.f32.mrb[0].mxu0
        %1702 = vmatprep.mubr.bf16.mxu0 0
        %1703 = vmatmul.mubr.bf16.gmra.mrb[0].mxu0 %v688
        %v1704 = vpop.f32.mrb[0].mxu0
        %v1705 = vadd.f32 %v604, %v1704
        %v1706 = vpop.f32.mrb[0].mxu0
        %v1707 = vpop.f32.mrb[0].mxu0
        %v1708 = vadd.f32 %v609, %v1707
        %v1709 = vpop.f32.mrb[0].mxu0
        %1710 = vmatprep.mubr.bf16.mxu0 0
        %1711 = vmatmul.mubr.bf16.gmra.mrb[0].mxu0 %v691
        %v1712 = vpop.f32.mrb[0].mxu0
        %v1713 = vadd.f32 %v614, %v1712
        %v1714 = vpop.f32.mrb[0].mxu0
        %v1715 = vpop.f32.mrb[0].mxu0
        %v1716 = vadd.f32 %v619, %v1715
        %v1717 = vpop.f32.mrb[0].mxu0
        %1718 = vmatprep.mubr.bf16.mxu0 0
        %1719 = vmatmul.mubr.bf16.gmra.mrb[0].mxu0 %v694
        %v1720 = vpop.f32.mrb[0].mxu0
        %v1721 = vadd.f32 %v624, %v1720
        %v1722 = vpop.f32.mrb[0].mxu0
        %v1723 = vpop.f32.mrb[0].mxu0
        %v1724 = vadd.f32 %v629, %v1723
        %v1725 = vpop.f32.mrb[0].mxu0
        %1726 = vdwg.mxu0
        %v1727 = vmax.f32 %v1665, 0.0
        %v1728 = vmax.f32 %v1668, 0.0
        %v1729 = vmax.f32 %v1673, 0.0
        %v1730 = vmax.f32 %v1676, 0.0
        %v1731 = vmax.f32 %v1681, 0.0
        %v1732 = vmax.f32 %v1684, 0.0
        %v1733 = vmax.f32 %v1689, 0.0
        %v1734 = vmax.f32 %v1692, 0.0
        %v1735 = vmax.f32 %v1697, 0.0
        %v1736 = vmax.f32 %v1700, 0.0
        %v1737 = vmax.f32 %v1705, 0.0
        %v1738 = vmax.f32 %v1708, 0.0
        %v1739 = vmax.f32 %v1713, 0.0
        %v1740 = vmax.f32 %v1716, 0.0
        %v1741 = vmax.f32 %v1721, 0.0
        %v1742 = vmax.f32 %v1724, 0.0
        %v1743 = vld [vmem:[%s479 + $0x6] sm:$0x1]
        %v1744 = vlaneseq
        %v1745 = vshrl.u32 %v1744, 7
        %v1746 = vsub.s32 0, %v1745
        %v1747 = vrot.slane %v1743, %v1746
        %v1748 = vmul.f32 %v1747, %v1727
        %v1749 = vmul.f32 %v1747, %v1728
        %v1750 = vmul.f32 %v1747, %v1729
        %v1751 = vmul.f32 %v1747, %v1730
        %v1752 = vmul.f32 %v1747, %v1731
        %v1753 = vmul.f32 %v1747, %v1732
        %v1754 = vmul.f32 %v1747, %v1733
        %v1755 = vmul.f32 %v1747, %v1734
        %v1756 = vmul.f32 %v1747, %v1735
        %v1757 = vmul.f32 %v1747, %v1736
        %v1758 = vmul.f32 %v1747, %v1737
        %v1759 = vmul.f32 %v1747, %v1738
        %v1760 = vmul.f32 %v1747, %v1739
        %v1761 = vmul.f32 %v1747, %v1740
        %v1762 = vmul.f32 %v1747, %v1741
        %v1763 = vmul.f32 %v1747, %v1742
        %v1764 = vadd.f32 %v1609, %v1748
        %v1765 = vadd.f32 %v1610, %v1749
        %v1766 = vadd.f32 %v1611, %v1750
        %v1767 = vadd.f32 %v1612, %v1751
        %v1768 = vadd.f32 %v1613, %v1752
        %v1769 = vadd.f32 %v1614, %v1753
        %v1770 = vadd.f32 %v1615, %v1754
        %v1771 = vadd.f32 %v1616, %v1755
        %v1772 = vadd.f32 %v1617, %v1756
        %v1773 = vadd.f32 %v1618, %v1757
        %v1774 = vadd.f32 %v1619, %v1758
        %v1775 = vadd.f32 %v1620, %v1759
        %v1776 = vadd.f32 %v1621, %v1760
        %v1777 = vadd.f32 %v1622, %v1761
        %v1778 = vadd.f32 %v1623, %v1762
        %v1779 = vadd.f32 %v1624, %v1763
        %s1780 = scalar_lea.vmem %s472, 14 [#allocation3]
        %v1781 = vld [vmem:[%s1780] sm:$0x3]
        %v1783 = vsel %vm696, %v1781, 0
        %1785 = vmatprep.subr.bf16.mxu0 0
        %1786 = vmatpush1.bf16.msra.mxu0 %v1783
        %1787 = vmatprep.subr.bf16.mxu0 0
        %1788 = vmatpush1.bf16.msra.mxu0 0
        %1789 = vmatprep.subr.bf16.mxu0 0
        %1790 = vmatpush1.bf16.msra.mxu0 0
        %1791 = vmatprep.subr.bf16.mxu0 0
        %1792 = vmatpush1.bf16.msra.mxu0 0
        %1793 = vmatprep.subr.bf16.mxu0 0
        %1794 = vmatpush1.bf16.msra.mxu0 0
        %1795 = vmatprep.subr.bf16.mxu0 0
        %1796 = vmatpush1.bf16.msra.mxu0 0
        %1797 = vmatprep.subr.bf16.mxu0 0
        %1798 = vmatpush1.bf16.msra.mxu0 0
        %1799 = vmatprep.subr.bf16.mxu0 0
        %1800 = vmatpush1.bf16.msra.mxu0 0
        %1801 = vmatprep.subr.bf16.mxu0 0
        %1802 = vmatpush1.bf16.msra.mxu0 0
        %1803 = vmatprep.subr.bf16.mxu0 0
        %1804 = vmatpush1.bf16.msra.mxu0 0
        %1805 = vmatprep.subr.bf16.mxu0 0
        %1806 = vmatpush1.bf16.msra.mxu0 0
        %1807 = vmatprep.subr.bf16.mxu0 0
        %1808 = vmatpush1.bf16.msra.mxu0 0
        %1809 = vmatprep.subr.bf16.mxu0 0
        %1810 = vmatpush1.bf16.msra.mxu0 0
        %1811 = vmatprep.subr.bf16.mxu0 0
        %1812 = vmatpush1.bf16.msra.mxu0 0
        %1813 = vmatprep.subr.bf16.mxu0 0
        %1814 = vmatpush1.bf16.msra.mxu0 0
        %1815 = vmatprep.subr.bf16.mxu0 0
        %1816 = vmatpush1.bf16.msra.mxu0 0
        %1817 = vmatprep.mubr.bf16.mxu0 0
        %1818 = vmatmul.mubr.bf16.gmra.mrb[0].mxu0 %v673
        %v1819 = vpop.f32.mrb[0].mxu0
        %v1820 = vadd.f32 %v554, %v1819
        %v1821 = vpop.f32.mrb[0].mxu0
        %v1822 = vpop.f32.mrb[0].mxu0
        %v1823 = vadd.f32 %v559, %v1822
        %v1824 = vpop.f32.mrb[0].mxu0
        %1825 = vmatprep.mubr.bf16.mxu0 0
        %1826 = vmatmul.mubr.bf16.gmra.mrb[0].mxu0 %v676
        %v1827 = vpop.f32.mrb[0].mxu0
        %v1828 = vadd.f32 %v564, %v1827
        %v1829 = vpop.f32.mrb[0].mxu0
        %v1830 = vpop.f32.mrb[0].mxu0
        %v1831 = vadd.f32 %v569, %v1830
        %v1832 = vpop.f32.mrb[0].mxu0
        %1833 = vmatprep.mubr.bf16.mxu0 0
        %1834 = vmatmul.mubr.bf16.gmra.mrb[0].mxu0 %v679
        %v1835 = vpop.f32.mrb[0].mxu0
        %v1836 = vadd.f32 %v574, %v1835
        %v1837 = vpop.f32.mrb[0].mxu0
        %v1838 = vpop.f32.mrb[0].mxu0
        %v1839 = vadd.f32 %v579, %v1838
        %v1840 = vpop.f32.mrb[0].mxu0
        %1841 = vmatprep.mubr.bf16.mxu0 0
        %1842 = vmatmul.mubr.bf16.gmra.mrb[0].mxu0 %v682
        %v1843 = vpop.f32.mrb[0].mxu0
        %v1844 = vadd.f32 %v584, %v1843
        %v1845 = vpop.f32.mrb[0].mxu0
        %v1846 = vpop.f32.mrb[0].mxu0
        %v1847 = vadd.f32 %v589, %v1846
        %v1848 = vpop.f32.mrb[0].mxu0
        %1849 = vmatprep.mubr.bf16.mxu0 0
        %1850 = vmatmul.mubr.bf16.gmra.mrb[0].mxu0 %v685
        %v1851 = vpop.f32.mrb[0].mxu0
        %v1852 = vadd.f32 %v594, %v1851
        %v1853 = vpop.f32.mrb[0].mxu0
        %v1854 = vpop.f32.mrb[0].mxu0
        %v1855 = vadd.f32 %v599, %v1854
        %v1856 = vpop.f32.mrb[0].mxu0
        %1857 = vmatprep.mubr.bf16.mxu0 0
        %1858 = vmatmul.mubr.bf16.gmra.mrb[0].mxu0 %v688
        %v1859 = vpop.f32.mrb[0].mxu0
        %v1860 = vadd.f32 %v604, %v1859
        %v1861 = vpop.f32.mrb[0].mxu0
        %v1862 = vpop.f32.mrb[0].mxu0
        %v1863 = vadd.f32 %v609, %v1862
        %v1864 = vpop.f32.mrb[0].mxu0
        %1865 = vmatprep.mubr.bf16.mxu0 0
        %1866 = vmatmul.mubr.bf16.gmra.mrb[0].mxu0 %v691
        %v1867 = vpop.f32.mrb[0].mxu0
        %v1868 = vadd.f32 %v614, %v1867
        %v1869 = vpop.f32.mrb[0].mxu0
        %v1870 = vpop.f32.mrb[0].mxu0
        %v1871 = vadd.f32 %v619, %v1870
        %v1872 = vpop.f32.mrb[0].mxu0
        %1873 = vmatprep.mubr.bf16.mxu0 0
        %1874 = vmatmul.mubr.bf16.gmra.mrb[0].mxu0 %v694
        %v1875 = vpop.f32.mrb[0].mxu0
        %v1876 = vadd.f32 %v624, %v1875
        %v1877 = vpop.f32.mrb[0].mxu0
        %v1878 = vpop.f32.mrb[0].mxu0
        %v1879 = vadd.f32 %v629, %v1878
        %v1880 = vpop.f32.mrb[0].mxu0
        %1881 = vdwg.mxu0
        %v1882 = vmax.f32 %v1820, 0.0
        %v1883 = vmax.f32 %v1823, 0.0
        %v1884 = vmax.f32 %v1828, 0.0
        %v1885 = vmax.f32 %v1831, 0.0
        %v1886 = vmax.f32 %v1836, 0.0
        %v1887 = vmax.f32 %v1839, 0.0
        %v1888 = vmax.f32 %v1844, 0.0
        %v1889 = vmax.f32 %v1847, 0.0
        %v1890 = vmax.f32 %v1852, 0.0
        %v1891 = vmax.f32 %v1855, 0.0
        %v1892 = vmax.f32 %v1860, 0.0
        %v1893 = vmax.f32 %v1863, 0.0
        %v1894 = vmax.f32 %v1868, 0.0
        %v1895 = vmax.f32 %v1871, 0.0
        %v1896 = vmax.f32 %v1876, 0.0
        %v1897 = vmax.f32 %v1879, 0.0
        %v1898 = vld [vmem:[%s479 + $0x7] sm:$0x1]
        %v1899 = vlaneseq
        %v1900 = vshrl.u32 %v1899, 7
        %v1901 = vsub.s32 0, %v1900
        %v1902 = vrot.slane %v1898, %v1901
        %v1903 = vmul.f32 %v1902, %v1882
        %v1904 = vmul.f32 %v1902, %v1883
        %v1905 = vmul.f32 %v1902, %v1884
        %v1906 = vmul.f32 %v1902, %v1885
        %v1907 = vmul.f32 %v1902, %v1886
        %v1908 = vmul.f32 %v1902, %v1887
        %v1909 = vmul.f32 %v1902, %v1888
        %v1910 = vmul.f32 %v1902, %v1889
        %v1911 = vmul.f32 %v1902, %v1890
        %v1912 = vmul.f32 %v1902, %v1891
        %v1913 = vmul.f32 %v1902, %v1892
        %v1914 = vmul.f32 %v1902, %v1893
        %v1915 = vmul.f32 %v1902, %v1894
        %v1916 = vmul.f32 %v1902, %v1895
        %v1917 = vmul.f32 %v1902, %v1896
        %v1918 = vmul.f32 %v1902, %v1897
        %v1919 = vadd.f32 %v1764, %v1903
        %v1920 = vadd.f32 %v1765, %v1904
        %v1921 = vadd.f32 %v1766, %v1905
        %v1922 = vadd.f32 %v1767, %v1906
        %v1923 = vadd.f32 %v1768, %v1907
        %v1924 = vadd.f32 %v1769, %v1908
        %v1925 = vadd.f32 %v1770, %v1909
        %v1926 = vadd.f32 %v1771, %v1910
        %v1927 = vadd.f32 %v1772, %v1911
        %v1928 = vadd.f32 %v1773, %v1912
        %v1929 = vadd.f32 %v1774, %v1913
        %v1930 = vadd.f32 %v1775, %v1914
        %v1931 = vadd.f32 %v1776, %v1915
        %v1932 = vadd.f32 %v1777, %v1916
        %v1933 = vadd.f32 %v1778, %v1917
        %v1934 = vadd.f32 %v1779, %v1918
        %s1935 = scalar_lea.vmem %s472, 16 [#allocation3]
        %v1936 = vld [vmem:[%s1935] sm:$0x3]
        %v1938 = vsel %vm696, %v1936, 0
        %1940 = vmatprep.subr.bf16.mxu0 0
        %1941 = vmatpush1.bf16.msra.mxu0 %v1938
        %1942 = vmatprep.subr.bf16.mxu0 0
        %1943 = vmatpush1.bf16.msra.mxu0 0
        %1944 = vmatprep.subr.bf16.mxu0 0
        %1945 = vmatpush1.bf16.msra.mxu0 0
        %1946 = vmatprep.subr.bf16.mxu0 0
        %1947 = vmatpush1.bf16.msra.mxu0 0
        %1948 = vmatprep.subr.bf16.mxu0 0
        %1949 = vmatpush1.bf16.msra.mxu0 0
        %1950 = vmatprep.subr.bf16.mxu0 0
        %1951 = vmatpush1.bf16.msra.mxu0 0
        %1952 = vmatprep.subr.bf16.mxu0 0
        %1953 = vmatpush1.bf16.msra.mxu0 0
        %1954 = vmatprep.subr.bf16.mxu0 0
        %1955 = vmatpush1.bf16.msra.mxu0 0
        %1956 = vmatprep.subr.bf16.mxu0 0
        %1957 = vmatpush1.bf16.msra.mxu0 0
        %1958 = vmatprep.subr.bf16.mxu0 0
        %1959 = vmatpush1.bf16.msra.mxu0 0
        %1960 = vmatprep.subr.bf16.mxu0 0
        %1961 = vmatpush1.bf16.msra.mxu0 0
        %1962 = vmatprep.subr.bf16.mxu0 0
        %1963 = vmatpush1.bf16.msra.mxu0 0
        %1964 = vmatprep.subr.bf16.mxu0 0
        %1965 = vmatpush1.bf16.msra.mxu0 0
        %1966 = vmatprep.subr.bf16.mxu0 0
        %1967 = vmatpush1.bf16.msra.mxu0 0
        %1968 = vmatprep.subr.bf16.mxu0 0
        %1969 = vmatpush1.bf16.msra.mxu0 0
        %1970 = vmatprep.subr.bf16.mxu0 0
        %1971 = vmatpush1.bf16.msra.mxu0 0
        %1972 = vmatprep.mubr.bf16.mxu0 0
        %1973 = vmatmul.mubr.bf16.gmra.mrb[0].mxu0 %v673
        %v1974 = vpop.f32.mrb[0].mxu0
        %v1975 = vadd.f32 %v554, %v1974
        %v1976 = vpop.f32.mrb[0].mxu0
        %v1977 = vpop.f32.mrb[0].mxu0
        %v1978 = vadd.f32 %v559, %v1977
        %v1979 = vpop.f32.mrb[0].mxu0
        %1980 = vmatprep.mubr.bf16.mxu0 0
        %1981 = vmatmul.mubr.bf16.gmra.mrb[0].mxu0 %v676
        %v1982 = vpop.f32.mrb[0].mxu0
        %v1983 = vadd.f32 %v564, %v1982
        %v1984 = vpop.f32.mrb[0].mxu0
        %v1985 = vpop.f32.mrb[0].mxu0
        %v1986 = vadd.f32 %v569, %v1985
        %v1987 = vpop.f32.mrb[0].mxu0
        %1988 = vmatprep.mubr.bf16.mxu0 0
        %1989 = vmatmul.mubr.bf16.gmra.mrb[0].mxu0 %v679
        %v1990 = vpop.f32.mrb[0].mxu0
        %v1991 = vadd.f32 %v574, %v1990
        %v1992 = vpop.f32.mrb[0].mxu0
        %v1993 = vpop.f32.mrb[0].mxu0
        %v1994 = vadd.f32 %v579, %v1993
        %v1995 = vpop.f32.mrb[0].mxu0
        %1996 = vmatprep.mubr.bf16.mxu0 0
        %1997 = vmatmul.mubr.bf16.gmra.mrb[0].mxu0 %v682
        %v1998 = vpop.f32.mrb[0].mxu0
        %v1999 = vadd.f32 %v584, %v1998
        %v2000 = vpop.f32.mrb[0].mxu0
        %v2001 = vpop.f32.mrb[0].mxu0
        %v2002 = vadd.f32 %v589, %v2001
        %v2003 = vpop.f32.mrb[0].mxu0
        %2004 = vmatprep.mubr.bf16.mxu0 0
        %2005 = vmatmul.mubr.bf16.gmra.mrb[0].mxu0 %v685
        %v2006 = vpop.f32.mrb[0].mxu0
        %v2007 = vadd.f32 %v594, %v2006
        %v2008 = vpop.f32.mrb[0].mxu0
        %v2009 = vpop.f32.mrb[0].mxu0
        %v2010 = vadd.f32 %v599, %v2009
        %v2011 = vpop.f32.mrb[0].mxu0
        %2012 = vmatprep.mubr.bf16.mxu0 0
        %2013 = vmatmul.mubr.bf16.gmra.mrb[0].mxu0 %v688
        %v2014 = vpop.f32.mrb[0].mxu0
        %v2015 = vadd.f32 %v604, %v2014
        %v2016 = vpop.f32.mrb[0].mxu0
        %v2017 = vpop.f32.mrb[0].mxu0
        %v2018 = vadd.f32 %v609, %v2017
        %v2019 = vpop.f32.mrb[0].mxu0
        %2020 = vmatprep.mubr.bf16.mxu0 0
        %2021 = vmatmul.mubr.bf16.gmra.mrb[0].mxu0 %v691
        %v2022 = vpop.f32.mrb[0].mxu0
        %v2023 = vadd.f32 %v614, %v2022
        %v2024 = vpop.f32.mrb[0].mxu0
        %v2025 = vpop.f32.mrb[0].mxu0
        %v2026 = vadd.f32 %v619, %v2025
        %v2027 = vpop.f32.mrb[0].mxu0
        %2028 = vmatprep.mubr.bf16.mxu0 0
        %2029 = vmatmul.mubr.bf16.gmra.mrb[0].mxu0 %v694
        %v2030 = vpop.f32.mrb[0].mxu0
        %v2031 = vadd.f32 %v624, %v2030
        %v2032 = vpop.f32.mrb[0].mxu0
        %v2033 = vpop.f32.mrb[0].mxu0
        %v2034 = vadd.f32 %v629, %v2033
        %v2035 = vpop.f32.mrb[0].mxu0
        %2036 = vdwg.mxu0
        %v2037 = vmax.f32 %v1975, 0.0
        %v2038 = vmax.f32 %v1978, 0.0
        %v2039 = vmax.f32 %v1983, 0.0
        %v2040 = vmax.f32 %v1986, 0.0
        %v2041 = vmax.f32 %v1991, 0.0
        %v2042 = vmax.f32 %v1994, 0.0
        %v2043 = vmax.f32 %v1999, 0.0
        %v2044 = vmax.f32 %v2002, 0.0
        %v2045 = vmax.f32 %v2007, 0.0
        %v2046 = vmax.f32 %v2010, 0.0
        %v2047 = vmax.f32 %v2015, 0.0
        %v2048 = vmax.f32 %v2018, 0.0
        %v2049 = vmax.f32 %v2023, 0.0
        %v2050 = vmax.f32 %v2026, 0.0
        %v2051 = vmax.f32 %v2031, 0.0
        %v2052 = vmax.f32 %v2034, 0.0
        %v2053 = vld [vmem:[%s479 + $0x8] sm:$0x1]
        %v2054 = vlaneseq
        %v2055 = vshrl.u32 %v2054, 7
        %v2056 = vsub.s32 0, %v2055
        %v2057 = vrot.slane %v2053, %v2056
        %v2058 = vmul.f32 %v2057, %v2037
        %v2059 = vmul.f32 %v2057, %v2038
        %v2060 = vmul.f32 %v2057, %v2039
        %v2061 = vmul.f32 %v2057, %v2040
        %v2062 = vmul.f32 %v2057, %v2041
        %v2063 = vmul.f32 %v2057, %v2042
        %v2064 = vmul.f32 %v2057, %v2043
        %v2065 = vmul.f32 %v2057, %v2044
        %v2066 = vmul.f32 %v2057, %v2045
        %v2067 = vmul.f32 %v2057, %v2046
        %v2068 = vmul.f32 %v2057, %v2047
        %v2069 = vmul.f32 %v2057, %v2048
        %v2070 = vmul.f32 %v2057, %v2049
        %v2071 = vmul.f32 %v2057, %v2050
        %v2072 = vmul.f32 %v2057, %v2051
        %v2073 = vmul.f32 %v2057, %v2052
        %v2074 = vadd.f32 %v1919, %v2058
        %v2075 = vadd.f32 %v1920, %v2059
        %v2076 = vadd.f32 %v1921, %v2060
        %v2077 = vadd.f32 %v1922, %v2061
        %v2078 = vadd.f32 %v1923, %v2062
        %v2079 = vadd.f32 %v1924, %v2063
        %v2080 = vadd.f32 %v1925, %v2064
        %v2081 = vadd.f32 %v1926, %v2065
        %v2082 = vadd.f32 %v1927, %v2066
        %v2083 = vadd.f32 %v1928, %v2067
        %v2084 = vadd.f32 %v1929, %v2068
        %v2085 = vadd.f32 %v1930, %v2069
        %v2086 = vadd.f32 %v1931, %v2070
        %v2087 = vadd.f32 %v1932, %v2071
        %v2088 = vadd.f32 %v1933, %v2072
        %v2089 = vadd.f32 %v1934, %v2073
        %s2090 = scalar_lea.vmem %s472, 18 [#allocation3]
        %v2091 = vld [vmem:[%s2090] sm:$0x3]
        %v2093 = vsel %vm696, %v2091, 0
        %2095 = vmatprep.subr.bf16.mxu0 0
        %2096 = vmatpush1.bf16.msra.mxu0 %v2093
        %2097 = vmatprep.subr.bf16.mxu0 0
        %2098 = vmatpush1.bf16.msra.mxu0 0
        %2099 = vmatprep.subr.bf16.mxu0 0
        %2100 = vmatpush1.bf16.msra.mxu0 0
        %2101 = vmatprep.subr.bf16.mxu0 0
        %2102 = vmatpush1.bf16.msra.mxu0 0
        %2103 = vmatprep.subr.bf16.mxu0 0
        %2104 = vmatpush1.bf16.msra.mxu0 0
        %2105 = vmatprep.subr.bf16.mxu0 0
        %2106 = vmatpush1.bf16.msra.mxu0 0
        %2107 = vmatprep.subr.bf16.mxu0 0
        %2108 = vmatpush1.bf16.msra.mxu0 0
        %2109 = vmatprep.subr.bf16.mxu0 0
        %2110 = vmatpush1.bf16.msra.mxu0 0
        %2111 = vmatprep.subr.bf16.mxu0 0
        %2112 = vmatpush1.bf16.msra.mxu0 0
        %2113 = vmatprep.subr.bf16.mxu0 0
        %2114 = vmatpush1.bf16.msra.mxu0 0
        %2115 = vmatprep.subr.bf16.mxu0 0
        %2116 = vmatpush1.bf16.msra.mxu0 0
        %2117 = vmatprep.subr.bf16.mxu0 0
        %2118 = vmatpush1.bf16.msra.mxu0 0
        %2119 = vmatprep.subr.bf16.mxu0 0
        %2120 = vmatpush1.bf16.msra.mxu0 0
        %2121 = vmatprep.subr.bf16.mxu0 0
        %2122 = vmatpush1.bf16.msra.mxu0 0
        %2123 = vmatprep.subr.bf16.mxu0 0
        %2124 = vmatpush1.bf16.msra.mxu0 0
        %2125 = vmatprep.subr.bf16.mxu0 0
        %2126 = vmatpush1.bf16.msra.mxu0 0
        %2127 = vmatprep.mubr.bf16.mxu0 0
        %2128 = vmatmul.mubr.bf16.gmra.mrb[0].mxu0 %v673
        %v2129 = vpop.f32.mrb[0].mxu0
        %v2130 = vadd.f32 %v554, %v2129
        %v2131 = vpop.f32.mrb[0].mxu0
        %v2132 = vpop.f32.mrb[0].mxu0
        %v2133 = vadd.f32 %v559, %v2132
        %v2134 = vpop.f32.mrb[0].mxu0
        %2135 = vmatprep.mubr.bf16.mxu0 0
        %2136 = vmatmul.mubr.bf16.gmra.mrb[0].mxu0 %v676
        %v2137 = vpop.f32.mrb[0].mxu0
        %v2138 = vadd.f32 %v564, %v2137
        %v2139 = vpop.f32.mrb[0].mxu0
        %v2140 = vpop.f32.mrb[0].mxu0
        %v2141 = vadd.f32 %v569, %v2140
        %v2142 = vpop.f32.mrb[0].mxu0
        %2143 = vmatprep.mubr.bf16.mxu0 0
        %2144 = vmatmul.mubr.bf16.gmra.mrb[0].mxu0 %v679
        %v2145 = vpop.f32.mrb[0].mxu0
        %v2146 = vadd.f32 %v574, %v2145
        %v2147 = vpop.f32.mrb[0].mxu0
        %v2148 = vpop.f32.mrb[0].mxu0
        %v2149 = vadd.f32 %v579, %v2148
        %v2150 = vpop.f32.mrb[0].mxu0
        %2151 = vmatprep.mubr.bf16.mxu0 0
        %2152 = vmatmul.mubr.bf16.gmra.mrb[0].mxu0 %v682
        %v2153 = vpop.f32.mrb[0].mxu0
        %v2154 = vadd.f32 %v584, %v2153
        %v2155 = vpop.f32.mrb[0].mxu0
        %v2156 = vpop.f32.mrb[0].mxu0
        %v2157 = vadd.f32 %v589, %v2156
        %v2158 = vpop.f32.mrb[0].mxu0
        %2159 = vmatprep.mubr.bf16.mxu0 0
        %2160 = vmatmul.mubr.bf16.gmra.mrb[0].mxu0 %v685
        %v2161 = vpop.f32.mrb[0].mxu0
        %v2162 = vadd.f32 %v594, %v2161
        %v2163 = vpop.f32.mrb[0].mxu0
        %v2164 = vpop.f32.mrb[0].mxu0
        %v2165 = vadd.f32 %v599, %v2164
        %v2166 = vpop.f32.mrb[0].mxu0
        %2167 = vmatprep.mubr.bf16.mxu0 0
        %2168 = vmatmul.mubr.bf16.gmra.mrb[0].mxu0 %v688
        %v2169 = vpop.f32.mrb[0].mxu0
        %v2170 = vadd.f32 %v604, %v2169
        %v2171 = vpop.f32.mrb[0].mxu0
        %v2172 = vpop.f32.mrb[0].mxu0
        %v2173 = vadd.f32 %v609, %v2172
        %v2174 = vpop.f32.mrb[0].mxu0
        %2175 = vmatprep.mubr.bf16.mxu0 0
        %2176 = vmatmul.mubr.bf16.gmra.mrb[0].mxu0 %v691
        %v2177 = vpop.f32.mrb[0].mxu0
        %v2178 = vadd.f32 %v614, %v2177
        %v2179 = vpop.f32.mrb[0].mxu0
        %v2180 = vpop.f32.mrb[0].mxu0
        %v2181 = vadd.f32 %v619, %v2180
        %v2182 = vpop.f32.mrb[0].mxu0
        %2183 = vmatprep.mubr.bf16.mxu0 0
        %2184 = vmatmul.mubr.bf16.gmra.mrb[0].mxu0 %v694
        %v2185 = vpop.f32.mrb[0].mxu0
        %v2186 = vadd.f32 %v624, %v2185
        %v2187 = vpop.f32.mrb[0].mxu0
        %v2188 = vpop.f32.mrb[0].mxu0
        %v2189 = vadd.f32 %v629, %v2188
        %v2190 = vpop.f32.mrb[0].mxu0
        %2191 = vdwg.mxu0
        %v2192 = vmax.f32 %v2130, 0.0
        %v2193 = vmax.f32 %v2133, 0.0
        %v2194 = vmax.f32 %v2138, 0.0
        %v2195 = vmax.f32 %v2141, 0.0
        %v2196 = vmax.f32 %v2146, 0.0
        %v2197 = vmax.f32 %v2149, 0.0
        %v2198 = vmax.f32 %v2154, 0.0
        %v2199 = vmax.f32 %v2157, 0.0
        %v2200 = vmax.f32 %v2162, 0.0
        %v2201 = vmax.f32 %v2165, 0.0
        %v2202 = vmax.f32 %v2170, 0.0
        %v2203 = vmax.f32 %v2173, 0.0
        %v2204 = vmax.f32 %v2178, 0.0
        %v2205 = vmax.f32 %v2181, 0.0
        %v2206 = vmax.f32 %v2186, 0.0
        %v2207 = vmax.f32 %v2189, 0.0
        %v2208 = vld [vmem:[%s479 + $0x9] sm:$0x1]
        %v2209 = vlaneseq
        %v2210 = vshrl.u32 %v2209, 7
        %v2211 = vsub.s32 0, %v2210
        %v2212 = vrot.slane %v2208, %v2211
        %v2213 = vmul.f32 %v2212, %v2192
        %v2214 = vmul.f32 %v2212, %v2193
        %v2215 = vmul.f32 %v2212, %v2194
        %v2216 = vmul.f32 %v2212, %v2195
        %v2217 = vmul.f32 %v2212, %v2196
        %v2218 = vmul.f32 %v2212, %v2197
        %v2219 = vmul.f32 %v2212, %v2198
        %v2220 = vmul.f32 %v2212, %v2199
        %v2221 = vmul.f32 %v2212, %v2200
        %v2222 = vmul.f32 %v2212, %v2201
        %v2223 = vmul.f32 %v2212, %v2202
        %v2224 = vmul.f32 %v2212, %v2203
        %v2225 = vmul.f32 %v2212, %v2204
        %v2226 = vmul.f32 %v2212, %v2205
        %v2227 = vmul.f32 %v2212, %v2206
        %v2228 = vmul.f32 %v2212, %v2207
        %v2229 = vadd.f32 %v2074, %v2213
        %v2230 = vadd.f32 %v2075, %v2214
        %v2231 = vadd.f32 %v2076, %v2215
        %v2232 = vadd.f32 %v2077, %v2216
        %v2233 = vadd.f32 %v2078, %v2217
        %v2234 = vadd.f32 %v2079, %v2218
        %v2235 = vadd.f32 %v2080, %v2219
        %v2236 = vadd.f32 %v2081, %v2220
        %v2237 = vadd.f32 %v2082, %v2221
        %v2238 = vadd.f32 %v2083, %v2222
        %v2239 = vadd.f32 %v2084, %v2223
        %v2240 = vadd.f32 %v2085, %v2224
        %v2241 = vadd.f32 %v2086, %v2225
        %v2242 = vadd.f32 %v2087, %v2226
        %v2243 = vadd.f32 %v2088, %v2227
        %v2244 = vadd.f32 %v2089, %v2228
        %s2245 = scalar_lea.vmem %s472, 20 [#allocation3]
        %v2246 = vld [vmem:[%s2245] sm:$0x3]
        %v2248 = vsel %vm696, %v2246, 0
        %2250 = vmatprep.subr.bf16.mxu0 0
        %2251 = vmatpush1.bf16.msra.mxu0 %v2248
        %2252 = vmatprep.subr.bf16.mxu0 0
        %2253 = vmatpush1.bf16.msra.mxu0 0
        %2254 = vmatprep.subr.bf16.mxu0 0
        %2255 = vmatpush1.bf16.msra.mxu0 0
        %2256 = vmatprep.subr.bf16.mxu0 0
        %2257 = vmatpush1.bf16.msra.mxu0 0
        %2258 = vmatprep.subr.bf16.mxu0 0
        %2259 = vmatpush1.bf16.msra.mxu0 0
        %2260 = vmatprep.subr.bf16.mxu0 0
        %2261 = vmatpush1.bf16.msra.mxu0 0
        %2262 = vmatprep.subr.bf16.mxu0 0
        %2263 = vmatpush1.bf16.msra.mxu0 0
        %2264 = vmatprep.subr.bf16.mxu0 0
        %2265 = vmatpush1.bf16.msra.mxu0 0
        %2266 = vmatprep.subr.bf16.mxu0 0
        %2267 = vmatpush1.bf16.msra.mxu0 0
        %2268 = vmatprep.subr.bf16.mxu0 0
        %2269 = vmatpush1.bf16.msra.mxu0 0
        %2270 = vmatprep.subr.bf16.mxu0 0
        %2271 = vmatpush1.bf16.msra.mxu0 0
        %2272 = vmatprep.subr.bf16.mxu0 0
        %2273 = vmatpush1.bf16.msra.mxu0 0
        %2274 = vmatprep.subr.bf16.mxu0 0
        %2275 = vmatpush1.bf16.msra.mxu0 0
        %2276 = vmatprep.subr.bf16.mxu0 0
        %2277 = vmatpush1.bf16.msra.mxu0 0
        %2278 = vmatprep.subr.bf16.mxu0 0
        %2279 = vmatpush1.bf16.msra.mxu0 0
        %2280 = vmatprep.subr.bf16.mxu0 0
        %2281 = vmatpush1.bf16.msra.mxu0 0
        %2282 = vmatprep.mubr.bf16.mxu0 0
        %2283 = vmatmul.mubr.bf16.gmra.mrb[0].mxu0 %v673
        %v2284 = vpop.f32.mrb[0].mxu0
        %v2285 = vadd.f32 %v554, %v2284
        %v2286 = vpop.f32.mrb[0].mxu0
        %v2287 = vpop.f32.mrb[0].mxu0
        %v2288 = vadd.f32 %v559, %v2287
        %v2289 = vpop.f32.mrb[0].mxu0
        %2290 = vmatprep.mubr.bf16.mxu0 0
        %2291 = vmatmul.mubr.bf16.gmra.mrb[0].mxu0 %v676
        %v2292 = vpop.f32.mrb[0].mxu0
        %v2293 = vadd.f32 %v564, %v2292
        %v2294 = vpop.f32.mrb[0].mxu0
        %v2295 = vpop.f32.mrb[0].mxu0
        %v2296 = vadd.f32 %v569, %v2295
        %v2297 = vpop.f32.mrb[0].mxu0
        %2298 = vmatprep.mubr.bf16.mxu0 0
        %2299 = vmatmul.mubr.bf16.gmra.mrb[0].mxu0 %v679
        %v2300 = vpop.f32.mrb[0].mxu0
        %v2301 = vadd.f32 %v574, %v2300
        %v2302 = vpop.f32.mrb[0].mxu0
        %v2303 = vpop.f32.mrb[0].mxu0
        %v2304 = vadd.f32 %v579, %v2303
        %v2305 = vpop.f32.mrb[0].mxu0
        %2306 = vmatprep.mubr.bf16.mxu0 0
        %2307 = vmatmul.mubr.bf16.gmra.mrb[0].mxu0 %v682
        %v2308 = vpop.f32.mrb[0].mxu0
        %v2309 = vadd.f32 %v584, %v2308
        %v2310 = vpop.f32.mrb[0].mxu0
        %v2311 = vpop.f32.mrb[0].mxu0
        %v2312 = vadd.f32 %v589, %v2311
        %v2313 = vpop.f32.mrb[0].mxu0
        %2314 = vmatprep.mubr.bf16.mxu0 0
        %2315 = vmatmul.mubr.bf16.gmra.mrb[0].mxu0 %v685
        %v2316 = vpop.f32.mrb[0].mxu0
        %v2317 = vadd.f32 %v594, %v2316
        %v2318 = vpop.f32.mrb[0].mxu0
        %v2319 = vpop.f32.mrb[0].mxu0
        %v2320 = vadd.f32 %v599, %v2319
        %v2321 = vpop.f32.mrb[0].mxu0
        %2322 = vmatprep.mubr.bf16.mxu0 0
        %2323 = vmatmul.mubr.bf16.gmra.mrb[0].mxu0 %v688
        %v2324 = vpop.f32.mrb[0].mxu0
        %v2325 = vadd.f32 %v604, %v2324
        %v2326 = vpop.f32.mrb[0].mxu0
        %v2327 = vpop.f32.mrb[0].mxu0
        %v2328 = vadd.f32 %v609, %v2327
        %v2329 = vpop.f32.mrb[0].mxu0
        %2330 = vmatprep.mubr.bf16.mxu0 0
        %2331 = vmatmul.mubr.bf16.gmra.mrb[0].mxu0 %v691
        %v2332 = vpop.f32.mrb[0].mxu0
        %v2333 = vadd.f32 %v614, %v2332
        %v2334 = vpop.f32.mrb[0].mxu0
        %v2335 = vpop.f32.mrb[0].mxu0
        %v2336 = vadd.f32 %v619, %v2335
        %v2337 = vpop.f32.mrb[0].mxu0
        %2338 = vmatprep.mubr.bf16.mxu0 0
        %2339 = vmatmul.mubr.bf16.gmra.mrb[0].mxu0 %v694
        %v2340 = vpop.f32.mrb[0].mxu0
        %v2341 = vadd.f32 %v624, %v2340
        %v2342 = vpop.f32.mrb[0].mxu0
        %v2343 = vpop.f32.mrb[0].mxu0
        %v2344 = vadd.f32 %v629, %v2343
        %v2345 = vpop.f32.mrb[0].mxu0
        %2346 = vdwg.mxu0
        %v2347 = vmax.f32 %v2285, 0.0
        %v2348 = vmax.f32 %v2288, 0.0
        %v2349 = vmax.f32 %v2293, 0.0
        %v2350 = vmax.f32 %v2296, 0.0
        %v2351 = vmax.f32 %v2301, 0.0
        %v2352 = vmax.f32 %v2304, 0.0
        %v2353 = vmax.f32 %v2309, 0.0
        %v2354 = vmax.f32 %v2312, 0.0
        %v2355 = vmax.f32 %v2317, 0.0
        %v2356 = vmax.f32 %v2320, 0.0
        %v2357 = vmax.f32 %v2325, 0.0
        %v2358 = vmax.f32 %v2328, 0.0
        %v2359 = vmax.f32 %v2333, 0.0
        %v2360 = vmax.f32 %v2336, 0.0
        %v2361 = vmax.f32 %v2341, 0.0
        %v2362 = vmax.f32 %v2344, 0.0
        %v2363 = vld [vmem:[%s479 + $0xa] sm:$0x1]
        %v2364 = vlaneseq
        %v2365 = vshrl.u32 %v2364, 7
        %v2366 = vsub.s32 0, %v2365
        %v2367 = vrot.slane %v2363, %v2366
        %v2368 = vmul.f32 %v2367, %v2347
        %v2369 = vmul.f32 %v2367, %v2348
        %v2370 = vmul.f32 %v2367, %v2349
        %v2371 = vmul.f32 %v2367, %v2350
        %v2372 = vmul.f32 %v2367, %v2351
        %v2373 = vmul.f32 %v2367, %v2352
        %v2374 = vmul.f32 %v2367, %v2353
        %v2375 = vmul.f32 %v2367, %v2354
        %v2376 = vmul.f32 %v2367, %v2355
        %v2377 = vmul.f32 %v2367, %v2356
        %v2378 = vmul.f32 %v2367, %v2357
        %v2379 = vmul.f32 %v2367, %v2358
        %v2380 = vmul.f32 %v2367, %v2359
        %v2381 = vmul.f32 %v2367, %v2360
        %v2382 = vmul.f32 %v2367, %v2361
        %v2383 = vmul.f32 %v2367, %v2362
        %v2384 = vadd.f32 %v2229, %v2368
        %v2385 = vadd.f32 %v2230, %v2369
        %v2386 = vadd.f32 %v2231, %v2370
        %v2387 = vadd.f32 %v2232, %v2371
        %v2388 = vadd.f32 %v2233, %v2372
        %v2389 = vadd.f32 %v2234, %v2373
        %v2390 = vadd.f32 %v2235, %v2374
        %v2391 = vadd.f32 %v2236, %v2375
        %v2392 = vadd.f32 %v2237, %v2376
        %v2393 = vadd.f32 %v2238, %v2377
        %v2394 = vadd.f32 %v2239, %v2378
        %v2395 = vadd.f32 %v2240, %v2379
        %v2396 = vadd.f32 %v2241, %v2380
        %v2397 = vadd.f32 %v2242, %v2381
        %v2398 = vadd.f32 %v2243, %v2382
        %v2399 = vadd.f32 %v2244, %v2383
        %s2400 = scalar_lea.vmem %s472, 22 [#allocation3]
        %v2401 = vld [vmem:[%s2400] sm:$0x3]
        %v2403 = vsel %vm696, %v2401, 0
        %2405 = vmatprep.subr.bf16.mxu0 0
        %2406 = vmatpush1.bf16.msra.mxu0 %v2403
        %2407 = vmatprep.subr.bf16.mxu0 0
        %2408 = vmatpush1.bf16.msra.mxu0 0
        %2409 = vmatprep.subr.bf16.mxu0 0
        %2410 = vmatpush1.bf16.msra.mxu0 0
        %2411 = vmatprep.subr.bf16.mxu0 0
        %2412 = vmatpush1.bf16.msra.mxu0 0
        %2413 = vmatprep.subr.bf16.mxu0 0
        %2414 = vmatpush1.bf16.msra.mxu0 0
        %2415 = vmatprep.subr.bf16.mxu0 0
        %2416 = vmatpush1.bf16.msra.mxu0 0
        %2417 = vmatprep.subr.bf16.mxu0 0
        %2418 = vmatpush1.bf16.msra.mxu0 0
        %2419 = vmatprep.subr.bf16.mxu0 0
        %2420 = vmatpush1.bf16.msra.mxu0 0
        %2421 = vmatprep.subr.bf16.mxu0 0
        %2422 = vmatpush1.bf16.msra.mxu0 0
        %2423 = vmatprep.subr.bf16.mxu0 0
        %2424 = vmatpush1.bf16.msra.mxu0 0
        %2425 = vmatprep.subr.bf16.mxu0 0
        %2426 = vmatpush1.bf16.msra.mxu0 0
        %2427 = vmatprep.subr.bf16.mxu0 0
        %2428 = vmatpush1.bf16.msra.mxu0 0
        %2429 = vmatprep.subr.bf16.mxu0 0
        %2430 = vmatpush1.bf16.msra.mxu0 0
        %2431 = vmatprep.subr.bf16.mxu0 0
        %2432 = vmatpush1.bf16.msra.mxu0 0
        %2433 = vmatprep.subr.bf16.mxu0 0
        %2434 = vmatpush1.bf16.msra.mxu0 0
        %2435 = vmatprep.subr.bf16.mxu0 0
        %2436 = vmatpush1.bf16.msra.mxu0 0
        %2437 = vmatprep.mubr.bf16.mxu0 0
        %2438 = vmatmul.mubr.bf16.gmra.mrb[0].mxu0 %v673
        %v2439 = vpop.f32.mrb[0].mxu0
        %v2440 = vadd.f32 %v554, %v2439
        %v2441 = vpop.f32.mrb[0].mxu0
        %v2442 = vpop.f32.mrb[0].mxu0
        %v2443 = vadd.f32 %v559, %v2442
        %v2444 = vpop.f32.mrb[0].mxu0
        %2445 = vmatprep.mubr.bf16.mxu0 0
        %2446 = vmatmul.mubr.bf16.gmra.mrb[0].mxu0 %v676
        %v2447 = vpop.f32.mrb[0].mxu0
        %v2448 = vadd.f32 %v564, %v2447
        %v2449 = vpop.f32.mrb[0].mxu0
        %v2450 = vpop.f32.mrb[0].mxu0
        %v2451 = vadd.f32 %v569, %v2450
        %v2452 = vpop.f32.mrb[0].mxu0
        %2453 = vmatprep.mubr.bf16.mxu0 0
        %2454 = vmatmul.mubr.bf16.gmra.mrb[0].mxu0 %v679
        %v2455 = vpop.f32.mrb[0].mxu0
        %v2456 = vadd.f32 %v574, %v2455
        %v2457 = vpop.f32.mrb[0].mxu0
        %v2458 = vpop.f32.mrb[0].mxu0
        %v2459 = vadd.f32 %v579, %v2458
        %v2460 = vpop.f32.mrb[0].mxu0
        %2461 = vmatprep.mubr.bf16.mxu0 0
        %2462 = vmatmul.mubr.bf16.gmra.mrb[0].mxu0 %v682
        %v2463 = vpop.f32.mrb[0].mxu0
        %v2464 = vadd.f32 %v584, %v2463
        %v2465 = vpop.f32.mrb[0].mxu0
        %v2466 = vpop.f32.mrb[0].mxu0
        %v2467 = vadd.f32 %v589, %v2466
        %v2468 = vpop.f32.mrb[0].mxu0
        %2469 = vmatprep.mubr.bf16.mxu0 0
        %2470 = vmatmul.mubr.bf16.gmra.mrb[0].mxu0 %v685
        %v2471 = vpop.f32.mrb[0].mxu0
        %v2472 = vadd.f32 %v594, %v2471
        %v2473 = vpop.f32.mrb[0].mxu0
        %v2474 = vpop.f32.mrb[0].mxu0
        %v2475 = vadd.f32 %v599, %v2474
        %v2476 = vpop.f32.mrb[0].mxu0
        %2477 = vmatprep.mubr.bf16.mxu0 0
        %2478 = vmatmul.mubr.bf16.gmra.mrb[0].mxu0 %v688
        %v2479 = vpop.f32.mrb[0].mxu0
        %v2480 = vadd.f32 %v604, %v2479
        %v2481 = vpop.f32.mrb[0].mxu0
        %v2482 = vpop.f32.mrb[0].mxu0
        %v2483 = vadd.f32 %v609, %v2482
        %v2484 = vpop.f32.mrb[0].mxu0
        %2485 = vmatprep.mubr.bf16.mxu0 0
        %2486 = vmatmul.mubr.bf16.gmra.mrb[0].mxu0 %v691
        %v2487 = vpop.f32.mrb[0].mxu0
        %v2488 = vadd.f32 %v614, %v2487
        %v2489 = vpop.f32.mrb[0].mxu0
        %v2490 = vpop.f32.mrb[0].mxu0
        %v2491 = vadd.f32 %v619, %v2490
        %v2492 = vpop.f32.mrb[0].mxu0
        %2493 = vmatprep.mubr.bf16.mxu0 0
        %2494 = vmatmul.mubr.bf16.gmra.mrb[0].mxu0 %v694
        %v2495 = vpop.f32.mrb[0].mxu0
        %v2496 = vadd.f32 %v624, %v2495
        %v2497 = vpop.f32.mrb[0].mxu0
        %v2498 = vpop.f32.mrb[0].mxu0
        %v2499 = vadd.f32 %v629, %v2498
        %v2500 = vpop.f32.mrb[0].mxu0
        %2501 = vdwg.mxu0
        %v2502 = vmax.f32 %v2440, 0.0
        %v2503 = vmax.f32 %v2443, 0.0
        %v2504 = vmax.f32 %v2448, 0.0
        %v2505 = vmax.f32 %v2451, 0.0
        %v2506 = vmax.f32 %v2456, 0.0
        %v2507 = vmax.f32 %v2459, 0.0
        %v2508 = vmax.f32 %v2464, 0.0
        %v2509 = vmax.f32 %v2467, 0.0
        %v2510 = vmax.f32 %v2472, 0.0
        %v2511 = vmax.f32 %v2475, 0.0
        %v2512 = vmax.f32 %v2480, 0.0
        %v2513 = vmax.f32 %v2483, 0.0
        %v2514 = vmax.f32 %v2488, 0.0
        %v2515 = vmax.f32 %v2491, 0.0
        %v2516 = vmax.f32 %v2496, 0.0
        %v2517 = vmax.f32 %v2499, 0.0
        %v2518 = vld [vmem:[%s479 + $0xb] sm:$0x1]
        %v2519 = vlaneseq
        %v2520 = vshrl.u32 %v2519, 7
        %v2521 = vsub.s32 0, %v2520
        %v2522 = vrot.slane %v2518, %v2521
        %v2523 = vmul.f32 %v2522, %v2502
        %v2524 = vmul.f32 %v2522, %v2503
        %v2525 = vmul.f32 %v2522, %v2504
        %v2526 = vmul.f32 %v2522, %v2505
        %v2527 = vmul.f32 %v2522, %v2506
        %v2528 = vmul.f32 %v2522, %v2507
        %v2529 = vmul.f32 %v2522, %v2508
        %v2530 = vmul.f32 %v2522, %v2509
        %v2531 = vmul.f32 %v2522, %v2510
        %v2532 = vmul.f32 %v2522, %v2511
        %v2533 = vmul.f32 %v2522, %v2512
        %v2534 = vmul.f32 %v2522, %v2513
        %v2535 = vmul.f32 %v2522, %v2514
        %v2536 = vmul.f32 %v2522, %v2515
        %v2537 = vmul.f32 %v2522, %v2516
        %v2538 = vmul.f32 %v2522, %v2517
        %v2539 = vadd.f32 %v2384, %v2523
        %v2540 = vadd.f32 %v2385, %v2524
        %v2541 = vadd.f32 %v2386, %v2525
        %v2542 = vadd.f32 %v2387, %v2526
        %v2543 = vadd.f32 %v2388, %v2527
        %v2544 = vadd.f32 %v2389, %v2528
        %v2545 = vadd.f32 %v2390, %v2529
        %v2546 = vadd.f32 %v2391, %v2530
        %v2547 = vadd.f32 %v2392, %v2531
        %v2548 = vadd.f32 %v2393, %v2532
        %v2549 = vadd.f32 %v2394, %v2533
        %v2550 = vadd.f32 %v2395, %v2534
        %v2551 = vadd.f32 %v2396, %v2535
        %v2552 = vadd.f32 %v2397, %v2536
        %v2553 = vadd.f32 %v2398, %v2537
        %v2554 = vadd.f32 %v2399, %v2538
        %s2555 = scalar_lea.vmem %s472, 24 [#allocation3]
        %v2556 = vld [vmem:[%s2555] sm:$0x3]
        %v2558 = vsel %vm696, %v2556, 0
        %2560 = vmatprep.subr.bf16.mxu0 0
        %2561 = vmatpush1.bf16.msra.mxu0 %v2558
        %2562 = vmatprep.subr.bf16.mxu0 0
        %2563 = vmatpush1.bf16.msra.mxu0 0
        %2564 = vmatprep.subr.bf16.mxu0 0
        %2565 = vmatpush1.bf16.msra.mxu0 0
        %2566 = vmatprep.subr.bf16.mxu0 0
        %2567 = vmatpush1.bf16.msra.mxu0 0
        %2568 = vmatprep.subr.bf16.mxu0 0
        %2569 = vmatpush1.bf16.msra.mxu0 0
        %2570 = vmatprep.subr.bf16.mxu0 0
        %2571 = vmatpush1.bf16.msra.mxu0 0
        %2572 = vmatprep.subr.bf16.mxu0 0
        %2573 = vmatpush1.bf16.msra.mxu0 0
        %2574 = vmatprep.subr.bf16.mxu0 0
        %2575 = vmatpush1.bf16.msra.mxu0 0
        %2576 = vmatprep.subr.bf16.mxu0 0
        %2577 = vmatpush1.bf16.msra.mxu0 0
        %2578 = vmatprep.subr.bf16.mxu0 0
        %2579 = vmatpush1.bf16.msra.mxu0 0
        %2580 = vmatprep.subr.bf16.mxu0 0
        %2581 = vmatpush1.bf16.msra.mxu0 0
        %2582 = vmatprep.subr.bf16.mxu0 0
        %2583 = vmatpush1.bf16.msra.mxu0 0
        %2584 = vmatprep.subr.bf16.mxu0 0
        %2585 = vmatpush1.bf16.msra.mxu0 0
        %2586 = vmatprep.subr.bf16.mxu0 0
        %2587 = vmatpush1.bf16.msra.mxu0 0
        %2588 = vmatprep.subr.bf16.mxu0 0
        %2589 = vmatpush1.bf16.msra.mxu0 0
        %2590 = vmatprep.subr.bf16.mxu0 0
        %2591 = vmatpush1.bf16.msra.mxu0 0
        %2592 = vmatprep.mubr.bf16.mxu0 0
        %2593 = vmatmul.mubr.bf16.gmra.mrb[0].mxu0 %v673
        %v2594 = vpop.f32.mrb[0].mxu0
        %v2595 = vadd.f32 %v554, %v2594
        %v2596 = vpop.f32.mrb[0].mxu0
        %v2597 = vpop.f32.mrb[0].mxu0
        %v2598 = vadd.f32 %v559, %v2597
        %v2599 = vpop.f32.mrb[0].mxu0
        %2600 = vmatprep.mubr.bf16.mxu0 0
        %2601 = vmatmul.mubr.bf16.gmra.mrb[0].mxu0 %v676
        %v2602 = vpop.f32.mrb[0].mxu0
        %v2603 = vadd.f32 %v564, %v2602
        %v2604 = vpop.f32.mrb[0].mxu0
        %v2605 = vpop.f32.mrb[0].mxu0
        %v2606 = vadd.f32 %v569, %v2605
        %v2607 = vpop.f32.mrb[0].mxu0
        %2608 = vmatprep.mubr.bf16.mxu0 0
        %2609 = vmatmul.mubr.bf16.gmra.mrb[0].mxu0 %v679
        %v2610 = vpop.f32.mrb[0].mxu0
        %v2611 = vadd.f32 %v574, %v2610
        %v2612 = vpop.f32.mrb[0].mxu0
        %v2613 = vpop.f32.mrb[0].mxu0
        %v2614 = vadd.f32 %v579, %v2613
        %v2615 = vpop.f32.mrb[0].mxu0
        %2616 = vmatprep.mubr.bf16.mxu0 0
        %2617 = vmatmul.mubr.bf16.gmra.mrb[0].mxu0 %v682
        %v2618 = vpop.f32.mrb[0].mxu0
        %v2619 = vadd.f32 %v584, %v2618
        %v2620 = vpop.f32.mrb[0].mxu0
        %v2621 = vpop.f32.mrb[0].mxu0
        %v2622 = vadd.f32 %v589, %v2621
        %v2623 = vpop.f32.mrb[0].mxu0
        %2624 = vmatprep.mubr.bf16.mxu0 0
        %2625 = vmatmul.mubr.bf16.gmra.mrb[0].mxu0 %v685
        %v2626 = vpop.f32.mrb[0].mxu0
        %v2627 = vadd.f32 %v594, %v2626
        %v2628 = vpop.f32.mrb[0].mxu0
        %v2629 = vpop.f32.mrb[0].mxu0
        %v2630 = vadd.f32 %v599, %v2629
        %v2631 = vpop.f32.mrb[0].mxu0
        %2632 = vmatprep.mubr.bf16.mxu0 0
        %2633 = vmatmul.mubr.bf16.gmra.mrb[0].mxu0 %v688
        %v2634 = vpop.f32.mrb[0].mxu0
        %v2635 = vadd.f32 %v604, %v2634
        %v2636 = vpop.f32.mrb[0].mxu0
        %v2637 = vpop.f32.mrb[0].mxu0
        %v2638 = vadd.f32 %v609, %v2637
        %v2639 = vpop.f32.mrb[0].mxu0
        %2640 = vmatprep.mubr.bf16.mxu0 0
        %2641 = vmatmul.mubr.bf16.gmra.mrb[0].mxu0 %v691
        %v2642 = vpop.f32.mrb[0].mxu0
        %v2643 = vadd.f32 %v614, %v2642
        %v2644 = vpop.f32.mrb[0].mxu0
        %v2645 = vpop.f32.mrb[0].mxu0
        %v2646 = vadd.f32 %v619, %v2645
        %v2647 = vpop.f32.mrb[0].mxu0
        %2648 = vmatprep.mubr.bf16.mxu0 0
        %2649 = vmatmul.mubr.bf16.gmra.mrb[0].mxu0 %v694
        %v2650 = vpop.f32.mrb[0].mxu0
        %v2651 = vadd.f32 %v624, %v2650
        %v2652 = vpop.f32.mrb[0].mxu0
        %v2653 = vpop.f32.mrb[0].mxu0
        %v2654 = vadd.f32 %v629, %v2653
        %v2655 = vpop.f32.mrb[0].mxu0
        %2656 = vdwg.mxu0
        %v2657 = vmax.f32 %v2595, 0.0
        %v2658 = vmax.f32 %v2598, 0.0
        %v2659 = vmax.f32 %v2603, 0.0
        %v2660 = vmax.f32 %v2606, 0.0
        %v2661 = vmax.f32 %v2611, 0.0
        %v2662 = vmax.f32 %v2614, 0.0
        %v2663 = vmax.f32 %v2619, 0.0
        %v2664 = vmax.f32 %v2622, 0.0
        %v2665 = vmax.f32 %v2627, 0.0
        %v2666 = vmax.f32 %v2630, 0.0
        %v2667 = vmax.f32 %v2635, 0.0
        %v2668 = vmax.f32 %v2638, 0.0
        %v2669 = vmax.f32 %v2643, 0.0
        %v2670 = vmax.f32 %v2646, 0.0
        %v2671 = vmax.f32 %v2651, 0.0
        %v2672 = vmax.f32 %v2654, 0.0
        %v2673 = vld [vmem:[%s479 + $0xc] sm:$0x1]
        %v2674 = vlaneseq
        %v2675 = vshrl.u32 %v2674, 7
        %v2676 = vsub.s32 0, %v2675
        %v2677 = vrot.slane %v2673, %v2676
        %v2678 = vmul.f32 %v2677, %v2657
        %v2679 = vmul.f32 %v2677, %v2658
        %v2680 = vmul.f32 %v2677, %v2659
        %v2681 = vmul.f32 %v2677, %v2660
        %v2682 = vmul.f32 %v2677, %v2661
        %v2683 = vmul.f32 %v2677, %v2662
        %v2684 = vmul.f32 %v2677, %v2663
        %v2685 = vmul.f32 %v2677, %v2664
        %v2686 = vmul.f32 %v2677, %v2665
        %v2687 = vmul.f32 %v2677, %v2666
        %v2688 = vmul.f32 %v2677, %v2667
        %v2689 = vmul.f32 %v2677, %v2668
        %v2690 = vmul.f32 %v2677, %v2669
        %v2691 = vmul.f32 %v2677, %v2670
        %v2692 = vmul.f32 %v2677, %v2671
        %v2693 = vmul.f32 %v2677, %v2672
        %v2694 = vadd.f32 %v2539, %v2678
        %v2695 = vadd.f32 %v2540, %v2679
        %v2696 = vadd.f32 %v2541, %v2680
        %v2697 = vadd.f32 %v2542, %v2681
        %v2698 = vadd.f32 %v2543, %v2682
        %v2699 = vadd.f32 %v2544, %v2683
        %v2700 = vadd.f32 %v2545, %v2684
        %v2701 = vadd.f32 %v2546, %v2685
        %v2702 = vadd.f32 %v2547, %v2686
        %v2703 = vadd.f32 %v2548, %v2687
        %v2704 = vadd.f32 %v2549, %v2688
        %v2705 = vadd.f32 %v2550, %v2689
        %v2706 = vadd.f32 %v2551, %v2690
        %v2707 = vadd.f32 %v2552, %v2691
        %v2708 = vadd.f32 %v2553, %v2692
        %v2709 = vadd.f32 %v2554, %v2693
        %s2710 = scalar_lea.vmem %s472, 26 [#allocation3]
        %v2711 = vld [vmem:[%s2710] sm:$0x3]
        %v2713 = vsel %vm696, %v2711, 0
        %2715 = vmatprep.subr.bf16.mxu0 0
        %2716 = vmatpush1.bf16.msra.mxu0 %v2713
        %2717 = vmatprep.subr.bf16.mxu0 0
        %2718 = vmatpush1.bf16.msra.mxu0 0
        %2719 = vmatprep.subr.bf16.mxu0 0
        %2720 = vmatpush1.bf16.msra.mxu0 0
        %2721 = vmatprep.subr.bf16.mxu0 0
        %2722 = vmatpush1.bf16.msra.mxu0 0
        %2723 = vmatprep.subr.bf16.mxu0 0
        %2724 = vmatpush1.bf16.msra.mxu0 0
        %2725 = vmatprep.subr.bf16.mxu0 0
        %2726 = vmatpush1.bf16.msra.mxu0 0
        %2727 = vmatprep.subr.bf16.mxu0 0
        %2728 = vmatpush1.bf16.msra.mxu0 0
        %2729 = vmatprep.subr.bf16.mxu0 0
        %2730 = vmatpush1.bf16.msra.mxu0 0
        %2731 = vmatprep.subr.bf16.mxu0 0
        %2732 = vmatpush1.bf16.msra.mxu0 0
        %2733 = vmatprep.subr.bf16.mxu0 0
        %2734 = vmatpush1.bf16.msra.mxu0 0
        %2735 = vmatprep.subr.bf16.mxu0 0
        %2736 = vmatpush1.bf16.msra.mxu0 0
        %2737 = vmatprep.subr.bf16.mxu0 0
        %2738 = vmatpush1.bf16.msra.mxu0 0
        %2739 = vmatprep.subr.bf16.mxu0 0
        %2740 = vmatpush1.bf16.msra.mxu0 0
        %2741 = vmatprep.subr.bf16.mxu0 0
        %2742 = vmatpush1.bf16.msra.mxu0 0
        %2743 = vmatprep.subr.bf16.mxu0 0
        %2744 = vmatpush1.bf16.msra.mxu0 0
        %2745 = vmatprep.subr.bf16.mxu0 0
        %2746 = vmatpush1.bf16.msra.mxu0 0
        %2747 = vmatprep.mubr.bf16.mxu0 0
        %2748 = vmatmul.mubr.bf16.gmra.mrb[0].mxu0 %v673
        %v2749 = vpop.f32.mrb[0].mxu0
        %v2750 = vadd.f32 %v554, %v2749
        %v2751 = vpop.f32.mrb[0].mxu0
        %v2752 = vpop.f32.mrb[0].mxu0
        %v2753 = vadd.f32 %v559, %v2752
        %v2754 = vpop.f32.mrb[0].mxu0
        %2755 = vmatprep.mubr.bf16.mxu0 0
        %2756 = vmatmul.mubr.bf16.gmra.mrb[0].mxu0 %v676
        %v2757 = vpop.f32.mrb[0].mxu0
        %v2758 = vadd.f32 %v564, %v2757
        %v2759 = vpop.f32.mrb[0].mxu0
        %v2760 = vpop.f32.mrb[0].mxu0
        %v2761 = vadd.f32 %v569, %v2760
        %v2762 = vpop.f32.mrb[0].mxu0
        %2763 = vmatprep.mubr.bf16.mxu0 0
        %2764 = vmatmul.mubr.bf16.gmra.mrb[0].mxu0 %v679
        %v2765 = vpop.f32.mrb[0].mxu0
        %v2766 = vadd.f32 %v574, %v2765
        %v2767 = vpop.f32.mrb[0].mxu0
        %v2768 = vpop.f32.mrb[0].mxu0
        %v2769 = vadd.f32 %v579, %v2768
        %v2770 = vpop.f32.mrb[0].mxu0
        %2771 = vmatprep.mubr.bf16.mxu0 0
        %2772 = vmatmul.mubr.bf16.gmra.mrb[0].mxu0 %v682
        %v2773 = vpop.f32.mrb[0].mxu0
        %v2774 = vadd.f32 %v584, %v2773
        %v2775 = vpop.f32.mrb[0].mxu0
        %v2776 = vpop.f32.mrb[0].mxu0
        %v2777 = vadd.f32 %v589, %v2776
        %v2778 = vpop.f32.mrb[0].mxu0
        %2779 = vmatprep.mubr.bf16.mxu0 0
        %2780 = vmatmul.mubr.bf16.gmra.mrb[0].mxu0 %v685
        %v2781 = vpop.f32.mrb[0].mxu0
        %v2782 = vadd.f32 %v594, %v2781
        %v2783 = vpop.f32.mrb[0].mxu0
        %v2784 = vpop.f32.mrb[0].mxu0
        %v2785 = vadd.f32 %v599, %v2784
        %v2786 = vpop.f32.mrb[0].mxu0
        %2787 = vmatprep.mubr.bf16.mxu0 0
        %2788 = vmatmul.mubr.bf16.gmra.mrb[0].mxu0 %v688
        %v2789 = vpop.f32.mrb[0].mxu0
        %v2790 = vadd.f32 %v604, %v2789
        %v2791 = vpop.f32.mrb[0].mxu0
        %v2792 = vpop.f32.mrb[0].mxu0
        %v2793 = vadd.f32 %v609, %v2792
        %v2794 = vpop.f32.mrb[0].mxu0
        %2795 = vmatprep.mubr.bf16.mxu0 0
        %2796 = vmatmul.mubr.bf16.gmra.mrb[0].mxu0 %v691
        %v2797 = vpop.f32.mrb[0].mxu0
        %v2798 = vadd.f32 %v614, %v2797
        %v2799 = vpop.f32.mrb[0].mxu0
        %v2800 = vpop.f32.mrb[0].mxu0
        %v2801 = vadd.f32 %v619, %v2800
        %v2802 = vpop.f32.mrb[0].mxu0
        %2803 = vmatprep.mubr.bf16.mxu0 0
        %2804 = vmatmul.mubr.bf16.gmra.mrb[0].mxu0 %v694
        %v2805 = vpop.f32.mrb[0].mxu0
        %v2806 = vadd.f32 %v624, %v2805
        %v2807 = vpop.f32.mrb[0].mxu0
        %v2808 = vpop.f32.mrb[0].mxu0
        %v2809 = vadd.f32 %v629, %v2808
        %v2810 = vpop.f32.mrb[0].mxu0
        %2811 = vdwg.mxu0
        %v2812 = vmax.f32 %v2750, 0.0
        %v2813 = vmax.f32 %v2753, 0.0
        %v2814 = vmax.f32 %v2758, 0.0
        %v2815 = vmax.f32 %v2761, 0.0
        %v2816 = vmax.f32 %v2766, 0.0
        %v2817 = vmax.f32 %v2769, 0.0
        %v2818 = vmax.f32 %v2774, 0.0
        %v2819 = vmax.f32 %v2777, 0.0
        %v2820 = vmax.f32 %v2782, 0.0
        %v2821 = vmax.f32 %v2785, 0.0
        %v2822 = vmax.f32 %v2790, 0.0
        %v2823 = vmax.f32 %v2793, 0.0
        %v2824 = vmax.f32 %v2798, 0.0
        %v2825 = vmax.f32 %v2801, 0.0
        %v2826 = vmax.f32 %v2806, 0.0
        %v2827 = vmax.f32 %v2809, 0.0
        %v2828 = vld [vmem:[%s479 + $0xd] sm:$0x1]
        %v2829 = vlaneseq
        %v2830 = vshrl.u32 %v2829, 7
        %v2831 = vsub.s32 0, %v2830
        %v2832 = vrot.slane %v2828, %v2831
        %v2833 = vmul.f32 %v2832, %v2812
        %v2834 = vmul.f32 %v2832, %v2813
        %v2835 = vmul.f32 %v2832, %v2814
        %v2836 = vmul.f32 %v2832, %v2815
        %v2837 = vmul.f32 %v2832, %v2816
        %v2838 = vmul.f32 %v2832, %v2817
        %v2839 = vmul.f32 %v2832, %v2818
        %v2840 = vmul.f32 %v2832, %v2819
        %v2841 = vmul.f32 %v2832, %v2820
        %v2842 = vmul.f32 %v2832, %v2821
        %v2843 = vmul.f32 %v2832, %v2822
        %v2844 = vmul.f32 %v2832, %v2823
        %v2845 = vmul.f32 %v2832, %v2824
        %v2846 = vmul.f32 %v2832, %v2825
        %v2847 = vmul.f32 %v2832, %v2826
        %v2848 = vmul.f32 %v2832, %v2827
        %v2849 = vadd.f32 %v2694, %v2833
        %v2850 = vadd.f32 %v2695, %v2834
        %v2851 = vadd.f32 %v2696, %v2835
        %v2852 = vadd.f32 %v2697, %v2836
        %v2853 = vadd.f32 %v2698, %v2837
        %v2854 = vadd.f32 %v2699, %v2838
        %v2855 = vadd.f32 %v2700, %v2839
        %v2856 = vadd.f32 %v2701, %v2840
        %v2857 = vadd.f32 %v2702, %v2841
        %v2858 = vadd.f32 %v2703, %v2842
        %v2859 = vadd.f32 %v2704, %v2843
        %v2860 = vadd.f32 %v2705, %v2844
        %v2861 = vadd.f32 %v2706, %v2845
        %v2862 = vadd.f32 %v2707, %v2846
        %v2863 = vadd.f32 %v2708, %v2847
        %v2864 = vadd.f32 %v2709, %v2848
        %s2865 = scalar_lea.vmem %s472, 28 [#allocation3]
        %v2866 = vld [vmem:[%s2865] sm:$0x3]
        %v2868 = vsel %vm696, %v2866, 0
        %2870 = vmatprep.subr.bf16.mxu0 0
        %2871 = vmatpush1.bf16.msra.mxu0 %v2868
        %2872 = vmatprep.subr.bf16.mxu0 0
        %2873 = vmatpush1.bf16.msra.mxu0 0
        %2874 = vmatprep.subr.bf16.mxu0 0
        %2875 = vmatpush1.bf16.msra.mxu0 0
        %2876 = vmatprep.subr.bf16.mxu0 0
        %2877 = vmatpush1.bf16.msra.mxu0 0
        %2878 = vmatprep.subr.bf16.mxu0 0
        %2879 = vmatpush1.bf16.msra.mxu0 0
        %2880 = vmatprep.subr.bf16.mxu0 0
        %2881 = vmatpush1.bf16.msra.mxu0 0
        %2882 = vmatprep.subr.bf16.mxu0 0
        %2883 = vmatpush1.bf16.msra.mxu0 0
        %2884 = vmatprep.subr.bf16.mxu0 0
        %2885 = vmatpush1.bf16.msra.mxu0 0
        %2886 = vmatprep.subr.bf16.mxu0 0
        %2887 = vmatpush1.bf16.msra.mxu0 0
        %2888 = vmatprep.subr.bf16.mxu0 0
        %2889 = vmatpush1.bf16.msra.mxu0 0
        %2890 = vmatprep.subr.bf16.mxu0 0
        %2891 = vmatpush1.bf16.msra.mxu0 0
        %2892 = vmatprep.subr.bf16.mxu0 0
        %2893 = vmatpush1.bf16.msra.mxu0 0
        %2894 = vmatprep.subr.bf16.mxu0 0
        %2895 = vmatpush1.bf16.msra.mxu0 0
        %2896 = vmatprep.subr.bf16.mxu0 0
        %2897 = vmatpush1.bf16.msra.mxu0 0
        %2898 = vmatprep.subr.bf16.mxu0 0
        %2899 = vmatpush1.bf16.msra.mxu0 0
        %2900 = vmatprep.subr.bf16.mxu0 0
        %2901 = vmatpush1.bf16.msra.mxu0 0
        %2902 = vmatprep.mubr.bf16.mxu0 0
        %2903 = vmatmul.mubr.bf16.gmra.mrb[0].mxu0 %v673
        %v2904 = vpop.f32.mrb[0].mxu0
        %v2905 = vadd.f32 %v554, %v2904
        %v2906 = vpop.f32.mrb[0].mxu0
        %v2907 = vpop.f32.mrb[0].mxu0
        %v2908 = vadd.f32 %v559, %v2907
        %v2909 = vpop.f32.mrb[0].mxu0
        %2910 = vmatprep.mubr.bf16.mxu0 0
        %2911 = vmatmul.mubr.bf16.gmra.mrb[0].mxu0 %v676
        %v2912 = vpop.f32.mrb[0].mxu0
        %v2913 = vadd.f32 %v564, %v2912
        %v2914 = vpop.f32.mrb[0].mxu0
        %v2915 = vpop.f32.mrb[0].mxu0
        %v2916 = vadd.f32 %v569, %v2915
        %v2917 = vpop.f32.mrb[0].mxu0
        %2918 = vmatprep.mubr.bf16.mxu0 0
        %2919 = vmatmul.mubr.bf16.gmra.mrb[0].mxu0 %v679
        %v2920 = vpop.f32.mrb[0].mxu0
        %v2921 = vadd.f32 %v574, %v2920
        %v2922 = vpop.f32.mrb[0].mxu0
        %v2923 = vpop.f32.mrb[0].mxu0
        %v2924 = vadd.f32 %v579, %v2923
        %v2925 = vpop.f32.mrb[0].mxu0
        %2926 = vmatprep.mubr.bf16.mxu0 0
        %2927 = vmatmul.mubr.bf16.gmra.mrb[0].mxu0 %v682
        %v2928 = vpop.f32.mrb[0].mxu0
        %v2929 = vadd.f32 %v584, %v2928
        %v2930 = vpop.f32.mrb[0].mxu0
        %v2931 = vpop.f32.mrb[0].mxu0
        %v2932 = vadd.f32 %v589, %v2931
        %v2933 = vpop.f32.mrb[0].mxu0
        %2934 = vmatprep.mubr.bf16.mxu0 0
        %2935 = vmatmul.mubr.bf16.gmra.mrb[0].mxu0 %v685
        %v2936 = vpop.f32.mrb[0].mxu0
        %v2937 = vadd.f32 %v594, %v2936
        %v2938 = vpop.f32.mrb[0].mxu0
        %v2939 = vpop.f32.mrb[0].mxu0
        %v2940 = vadd.f32 %v599, %v2939
        %v2941 = vpop.f32.mrb[0].mxu0
        %2942 = vmatprep.mubr.bf16.mxu0 0
        %2943 = vmatmul.mubr.bf16.gmra.mrb[0].mxu0 %v688
        %v2944 = vpop.f32.mrb[0].mxu0
        %v2945 = vadd.f32 %v604, %v2944
        %v2946 = vpop.f32.mrb[0].mxu0
        %v2947 = vpop.f32.mrb[0].mxu0
        %v2948 = vadd.f32 %v609, %v2947
        %v2949 = vpop.f32.mrb[0].mxu0
        %2950 = vmatprep.mubr.bf16.mxu0 0
        %2951 = vmatmul.mubr.bf16.gmra.mrb[0].mxu0 %v691
        %v2952 = vpop.f32.mrb[0].mxu0
        %v2953 = vadd.f32 %v614, %v2952
        %v2954 = vpop.f32.mrb[0].mxu0
        %v2955 = vpop.f32.mrb[0].mxu0
        %v2956 = vadd.f32 %v619, %v2955
        %v2957 = vpop.f32.mrb[0].mxu0
        %2958 = vmatprep.mubr.bf16.mxu0 0
        %2959 = vmatmul.mubr.bf16.gmra.mrb[0].mxu0 %v694
        %v2960 = vpop.f32.mrb[0].mxu0
        %v2961 = vadd.f32 %v624, %v2960
        %v2962 = vpop.f32.mrb[0].mxu0
        %v2963 = vpop.f32.mrb[0].mxu0
        %v2964 = vadd.f32 %v629, %v2963
        %v2965 = vpop.f32.mrb[0].mxu0
        %2966 = vdwg.mxu0
        %v2967 = vmax.f32 %v2905, 0.0
        %v2968 = vmax.f32 %v2908, 0.0
        %v2969 = vmax.f32 %v2913, 0.0
        %v2970 = vmax.f32 %v2916, 0.0
        %v2971 = vmax.f32 %v2921, 0.0
        %v2972 = vmax.f32 %v2924, 0.0
        %v2973 = vmax.f32 %v2929, 0.0
        %v2974 = vmax.f32 %v2932, 0.0
        %v2975 = vmax.f32 %v2937, 0.0
        %v2976 = vmax.f32 %v2940, 0.0
        %v2977 = vmax.f32 %v2945, 0.0
        %v2978 = vmax.f32 %v2948, 0.0
        %v2979 = vmax.f32 %v2953, 0.0
        %v2980 = vmax.f32 %v2956, 0.0
        %v2981 = vmax.f32 %v2961, 0.0
        %v2982 = vmax.f32 %v2964, 0.0
        %v2983 = vld [vmem:[%s479 + $0xe] sm:$0x1]
        %v2984 = vlaneseq
        %v2985 = vshrl.u32 %v2984, 7
        %v2986 = vsub.s32 0, %v2985
        %v2987 = vrot.slane %v2983, %v2986
        %v2988 = vmul.f32 %v2987, %v2967
        %v2989 = vmul.f32 %v2987, %v2968
        %v2990 = vmul.f32 %v2987, %v2969
        %v2991 = vmul.f32 %v2987, %v2970
        %v2992 = vmul.f32 %v2987, %v2971
        %v2993 = vmul.f32 %v2987, %v2972
        %v2994 = vmul.f32 %v2987, %v2973
        %v2995 = vmul.f32 %v2987, %v2974
        %v2996 = vmul.f32 %v2987, %v2975
        %v2997 = vmul.f32 %v2987, %v2976
        %v2998 = vmul.f32 %v2987, %v2977
        %v2999 = vmul.f32 %v2987, %v2978
        %v3000 = vmul.f32 %v2987, %v2979
        %v3001 = vmul.f32 %v2987, %v2980
        %v3002 = vmul.f32 %v2987, %v2981
        %v3003 = vmul.f32 %v2987, %v2982
        %v3004 = vadd.f32 %v2849, %v2988
        %v3005 = vadd.f32 %v2850, %v2989
        %v3006 = vadd.f32 %v2851, %v2990
        %v3007 = vadd.f32 %v2852, %v2991
        %v3008 = vadd.f32 %v2853, %v2992
        %v3009 = vadd.f32 %v2854, %v2993
        %v3010 = vadd.f32 %v2855, %v2994
        %v3011 = vadd.f32 %v2856, %v2995
        %v3012 = vadd.f32 %v2857, %v2996
        %v3013 = vadd.f32 %v2858, %v2997
        %v3014 = vadd.f32 %v2859, %v2998
        %v3015 = vadd.f32 %v2860, %v2999
        %v3016 = vadd.f32 %v2861, %v3000
        %v3017 = vadd.f32 %v2862, %v3001
        %v3018 = vadd.f32 %v2863, %v3002
        %v3019 = vadd.f32 %v2864, %v3003
        %s3020 = scalar_lea.vmem %s472, 30 [#allocation3]
        %v3021 = vld [vmem:[%s3020] sm:$0x3]
        %v3023 = vsel %vm696, %v3021, 0
        %3025 = vmatprep.subr.bf16.mxu0 0
        %3026 = vmatpush1.bf16.msra.mxu0 %v3023
        %3027 = vmatprep.subr.bf16.mxu0 0
        %3028 = vmatpush1.bf16.msra.mxu0 0
        %3029 = vmatprep.subr.bf16.mxu0 0
        %3030 = vmatpush1.bf16.msra.mxu0 0
        %3031 = vmatprep.subr.bf16.mxu0 0
        %3032 = vmatpush1.bf16.msra.mxu0 0
        %3033 = vmatprep.subr.bf16.mxu0 0
        %3034 = vmatpush1.bf16.msra.mxu0 0
        %3035 = vmatprep.subr.bf16.mxu0 0
        %3036 = vmatpush1.bf16.msra.mxu0 0
        %3037 = vmatprep.subr.bf16.mxu0 0
        %3038 = vmatpush1.bf16.msra.mxu0 0
        %3039 = vmatprep.subr.bf16.mxu0 0
        %3040 = vmatpush1.bf16.msra.mxu0 0
        %3041 = vmatprep.subr.bf16.mxu0 0
        %3042 = vmatpush1.bf16.msra.mxu0 0
        %3043 = vmatprep.subr.bf16.mxu0 0
        %3044 = vmatpush1.bf16.msra.mxu0 0
        %3045 = vmatprep.subr.bf16.mxu0 0
        %3046 = vmatpush1.bf16.msra.mxu0 0
        %3047 = vmatprep.subr.bf16.mxu0 0
        %3048 = vmatpush1.bf16.msra.mxu0 0
        %3049 = vmatprep.subr.bf16.mxu0 0
        %3050 = vmatpush1.bf16.msra.mxu0 0
        %3051 = vmatprep.subr.bf16.mxu0 0
        %3052 = vmatpush1.bf16.msra.mxu0 0
        %3053 = vmatprep.subr.bf16.mxu0 0
        %3054 = vmatpush1.bf16.msra.mxu0 0
        %3055 = vmatprep.subr.bf16.mxu0 0
        %3056 = vmatpush1.bf16.msra.mxu0 0
        %3057 = vmatprep.mubr.bf16.mxu0 0
        %3058 = vmatmul.mubr.bf16.gmra.mrb[0].mxu0 %v673
        %v3059 = vpop.f32.mrb[0].mxu0
        %v3060 = vadd.f32 %v554, %v3059
        %v3061 = vpop.f32.mrb[0].mxu0
        %v3062 = vpop.f32.mrb[0].mxu0
        %v3063 = vadd.f32 %v559, %v3062
        %v3064 = vpop.f32.mrb[0].mxu0
        %3065 = vmatprep.mubr.bf16.mxu0 0
        %3066 = vmatmul.mubr.bf16.gmra.mrb[0].mxu0 %v676
        %v3067 = vpop.f32.mrb[0].mxu0
        %v3068 = vadd.f32 %v564, %v3067
        %v3069 = vpop.f32.mrb[0].mxu0
        %v3070 = vpop.f32.mrb[0].mxu0
        %v3071 = vadd.f32 %v569, %v3070
        %v3072 = vpop.f32.mrb[0].mxu0
        %3073 = vmatprep.mubr.bf16.mxu0 0
        %3074 = vmatmul.mubr.bf16.gmra.mrb[0].mxu0 %v679
        %v3075 = vpop.f32.mrb[0].mxu0
        %v3076 = vadd.f32 %v574, %v3075
        %v3077 = vpop.f32.mrb[0].mxu0
        %v3078 = vpop.f32.mrb[0].mxu0
        %v3079 = vadd.f32 %v579, %v3078
        %v3080 = vpop.f32.mrb[0].mxu0
        %3081 = vmatprep.mubr.bf16.mxu0 0
        %3082 = vmatmul.mubr.bf16.gmra.mrb[0].mxu0 %v682
        %v3083 = vpop.f32.mrb[0].mxu0
        %v3084 = vadd.f32 %v584, %v3083
        %v3085 = vpop.f32.mrb[0].mxu0
        %v3086 = vpop.f32.mrb[0].mxu0
        %v3087 = vadd.f32 %v589, %v3086
        %v3088 = vpop.f32.mrb[0].mxu0
        %3089 = vmatprep.mubr.bf16.mxu0 0
        %3090 = vmatmul.mubr.bf16.gmra.mrb[0].mxu0 %v685
        %v3091 = vpop.f32.mrb[0].mxu0
        %v3092 = vadd.f32 %v594, %v3091
        %v3093 = vpop.f32.mrb[0].mxu0
        %v3094 = vpop.f32.mrb[0].mxu0
        %v3095 = vadd.f32 %v599, %v3094
        %v3096 = vpop.f32.mrb[0].mxu0
        %3097 = vmatprep.mubr.bf16.mxu0 0
        %3098 = vmatmul.mubr.bf16.gmra.mrb[0].mxu0 %v688
        %v3099 = vpop.f32.mrb[0].mxu0
        %v3100 = vadd.f32 %v604, %v3099
        %v3101 = vpop.f32.mrb[0].mxu0
        %v3102 = vpop.f32.mrb[0].mxu0
        %v3103 = vadd.f32 %v609, %v3102
        %v3104 = vpop.f32.mrb[0].mxu0
        %3105 = vmatprep.mubr.bf16.mxu0 0
        %3106 = vmatmul.mubr.bf16.gmra.mrb[0].mxu0 %v691
        %v3107 = vpop.f32.mrb[0].mxu0
        %v3108 = vadd.f32 %v614, %v3107
        %v3109 = vpop.f32.mrb[0].mxu0
        %v3110 = vpop.f32.mrb[0].mxu0
        %v3111 = vadd.f32 %v619, %v3110
        %v3112 = vpop.f32.mrb[0].mxu0
        %3113 = vmatprep.mubr.bf16.mxu0 0
        %3114 = vmatmul.mubr.bf16.gmra.mrb[0].mxu0 %v694
        %v3115 = vpop.f32.mrb[0].mxu0
        %v3116 = vadd.f32 %v624, %v3115
        %v3117 = vpop.f32.mrb[0].mxu0
        %v3118 = vpop.f32.mrb[0].mxu0
        %v3119 = vadd.f32 %v629, %v3118
        %v3120 = vpop.f32.mrb[0].mxu0
        %3121 = vdwg.mxu0
        %v3122 = vmax.f32 %v3060, 0.0
        %v3123 = vmax.f32 %v3063, 0.0
        %v3124 = vmax.f32 %v3068, 0.0
        %v3125 = vmax.f32 %v3071, 0.0
        %v3126 = vmax.f32 %v3076, 0.0
        %v3127 = vmax.f32 %v3079, 0.0
        %v3128 = vmax.f32 %v3084, 0.0
        %v3129 = vmax.f32 %v3087, 0.0
        %v3130 = vmax.f32 %v3092, 0.0
        %v3131 = vmax.f32 %v3095, 0.0
        %v3132 = vmax.f32 %v3100, 0.0
        %v3133 = vmax.f32 %v3103, 0.0
        %v3134 = vmax.f32 %v3108, 0.0
        %v3135 = vmax.f32 %v3111, 0.0
        %v3136 = vmax.f32 %v3116, 0.0
        %v3137 = vmax.f32 %v3119, 0.0
        %v3138 = vld [vmem:[%s479 + $0xf] sm:$0x1]
        %v3139 = vlaneseq
        %v3140 = vshrl.u32 %v3139, 7
        %v3141 = vsub.s32 0, %v3140
        %v3142 = vrot.slane %v3138, %v3141
        %v3143 = vmul.f32 %v3142, %v3122
        %v3144 = vmul.f32 %v3142, %v3123
        %v3145 = vmul.f32 %v3142, %v3124
        %v3146 = vmul.f32 %v3142, %v3125
        %v3147 = vmul.f32 %v3142, %v3126
        %v3148 = vmul.f32 %v3142, %v3127
        %v3149 = vmul.f32 %v3142, %v3128
        %v3150 = vmul.f32 %v3142, %v3129
        %v3151 = vmul.f32 %v3142, %v3130
        %v3152 = vmul.f32 %v3142, %v3131
        %v3153 = vmul.f32 %v3142, %v3132
        %v3154 = vmul.f32 %v3142, %v3133
        %v3155 = vmul.f32 %v3142, %v3134
        %v3156 = vmul.f32 %v3142, %v3135
        %v3157 = vmul.f32 %v3142, %v3136
        %v3158 = vmul.f32 %v3142, %v3137
        %v3159 = vadd.f32 %v3004, %v3143
        %v3160 = vadd.f32 %v3005, %v3144
        %v3161 = vadd.f32 %v3006, %v3145
        %v3162 = vadd.f32 %v3007, %v3146
        %v3163 = vadd.f32 %v3008, %v3147
        %v3164 = vadd.f32 %v3009, %v3148
        %v3165 = vadd.f32 %v3010, %v3149
        %v3166 = vadd.f32 %v3011, %v3150
        %v3167 = vadd.f32 %v3012, %v3151
        %v3168 = vadd.f32 %v3013, %v3152
        %v3169 = vadd.f32 %v3014, %v3153
        %v3170 = vadd.f32 %v3015, %v3154
        %v3171 = vadd.f32 %v3016, %v3155
        %v3172 = vadd.f32 %v3017, %v3156
        %v3173 = vadd.f32 %v3018, %v3157
        %v3174 = vadd.f32 %v3019, %v3158
        %v3175 = vld [vmem:[%s4] sm:$0xf]
        %v3176 = vld [vmem:[%s4 + $0x4] sm:$0xf]
        %v3177 = vld [vmem:[%s4 + $0x8] sm:$0xf]
        %v3178 = vld [vmem:[%s4 + $0xc] sm:$0xf]
        %v3179 = vld [vmem:[%s4 + $0x10] sm:$0xf]
        %v3180 = vld [vmem:[%s4 + $0x14] sm:$0xf]
        %v3181 = vld [vmem:[%s4 + $0x18] sm:$0xf]
        %v3182 = vld [vmem:[%s4 + $0x1c] sm:$0xf]
        %v3183 = vld [vmem:[%s4 + $0x20] sm:$0xf]
        %v3184 = vld [vmem:[%s4 + $0x24] sm:$0xf]
        %v3185 = vld [vmem:[%s4 + $0x28] sm:$0xf]
        %v3186 = vld [vmem:[%s4 + $0x2c] sm:$0xf]
        %v3187 = vld [vmem:[%s4 + $0x30] sm:$0xf]
        %v3188 = vld [vmem:[%s4 + $0x34] sm:$0xf]
        %v3189 = vld [vmem:[%s4 + $0x38] sm:$0xf]
        %v3190 = vld [vmem:[%s4 + $0x3c] sm:$0xf]
        %v3191 = vpack.c.bf16 %v3160, %v3159
        %v3192 = vpack.c.bf16 %v3162, %v3161
        %v3193 = vpack.c.bf16 %v3164, %v3163
        %v3194 = vpack.c.bf16 %v3166, %v3165
        %v3195 = vpack.c.bf16 %v3168, %v3167
        %v3196 = vpack.c.bf16 %v3170, %v3169
        %v3197 = vpack.c.bf16 %v3172, %v3171
        %v3198 = vpack.c.bf16 %v3174, %v3173
        %v3199 = vld [vmem:[%s5] sm:$0xff]
        %v3200 = vld [vmem:[%s5 + $0x8] sm:$0xff]
        %v3201 = vld [vmem:[%s5 + $0x10] sm:$0xff]
        %v3202 = vld [vmem:[%s5 + $0x18] sm:$0xff]
        %v3203 = vld [vmem:[%s5 + $0x20] sm:$0xff]
        %v3204 = vld [vmem:[%s5 + $0x28] sm:$0xff]
        %v3205 = vld [vmem:[%s5 + $0x30] sm:$0xff]
        %v3206 = vld [vmem:[%s5 + $0x38] sm:$0xff]
        %v3207 = vld [vmem:[%s5 + $0x40] sm:$0xff]
        %v3208 = vld [vmem:[%s5 + $0x48] sm:$0xff]
        %v3209 = vld [vmem:[%s5 + $0x50] sm:$0xff]
        %v3210 = vld [vmem:[%s5 + $0x58] sm:$0xff]
        %v3211 = vld [vmem:[%s5 + $0x60] sm:$0xff]
        %v3212 = vld [vmem:[%s5 + $0x68] sm:$0xff]
        %v3213 = vld [vmem:[%s5 + $0x70] sm:$0xff]
        %v3214 = vld [vmem:[%s5 + $0x78] sm:$0xff]
        %3216 = vset.pattern.permute.xlu0 0
        %3217 = vperm.xlu0 %3216, %v3199
        %v3218 = vpop.permute.xlu0 %3217
        %3221 = vset.pattern.permute.xlu0 0
        %3222 = vperm.xlu0 %3221, %v3200
        %v3223 = vpop.permute.xlu0 %3222
        %3226 = vset.pattern.permute.xlu0 0
        %3227 = vperm.xlu0 %3226, %v3201
        %v3228 = vpop.permute.xlu0 %3227
        %3231 = vset.pattern.permute.xlu0 0
        %3232 = vperm.xlu0 %3231, %v3202
        %v3233 = vpop.permute.xlu0 %3232
        %3236 = vset.pattern.permute.xlu0 0
        %3237 = vperm.xlu0 %3236, %v3203
        %v3238 = vpop.permute.xlu0 %3237
        %3241 = vset.pattern.permute.xlu0 0
        %3242 = vperm.xlu0 %3241, %v3204
        %v3243 = vpop.permute.xlu0 %3242
        %3246 = vset.pattern.permute.xlu0 0
        %3247 = vperm.xlu0 %3246, %v3205
        %v3248 = vpop.permute.xlu0 %3247
        %3251 = vset.pattern.permute.xlu0 0
        %3252 = vperm.xlu0 %3251, %v3206
        %v3253 = vpop.permute.xlu0 %3252
        %3256 = vset.pattern.permute.xlu0 0
        %3257 = vperm.xlu0 %3256, %v3207
        %v3258 = vpop.permute.xlu0 %3257
        %3261 = vset.pattern.permute.xlu0 0
        %3262 = vperm.xlu0 %3261, %v3208
        %v3263 = vpop.permute.xlu0 %3262
        %3266 = vset.pattern.permute.xlu0 0
        %3267 = vperm.xlu0 %3266, %v3209
        %v3268 = vpop.permute.xlu0 %3267
        %3271 = vset.pattern.permute.xlu0 0
        %3272 = vperm.xlu0 %3271, %v3210
        %v3273 = vpop.permute.xlu0 %3272
        %3276 = vset.pattern.permute.xlu0 0
        %3277 = vperm.xlu0 %3276, %v3211
        %v3278 = vpop.permute.xlu0 %3277
        %3281 = vset.pattern.permute.xlu0 0
        %3282 = vperm.xlu0 %3281, %v3212
        %v3283 = vpop.permute.xlu0 %3282
        %3286 = vset.pattern.permute.xlu0 0
        %3287 = vperm.xlu0 %3286, %v3213
        %v3288 = vpop.permute.xlu0 %3287
        %3291 = vset.pattern.permute.xlu0 0
        %3292 = vperm.xlu0 %3291, %v3214
        %v3293 = vpop.permute.xlu0 %3292
        %v3311 = vunpack.c.l.b16 %v3175
        %v3312 = vunpack.c.l.b16 %v3176
        %v3313 = vunpack.c.l.b16 %v3177
        %v3314 = vunpack.c.l.b16 %v3178
        %v3315 = vunpack.c.l.b16 %v3179
        %v3316 = vunpack.c.l.b16 %v3180
        %v3317 = vunpack.c.l.b16 %v3181
        %v3318 = vunpack.c.l.b16 %v3182
        %v3319 = vunpack.c.l.b16 %v3183
        %v3320 = vunpack.c.l.b16 %v3184
        %v3321 = vunpack.c.l.b16 %v3185
        %v3322 = vunpack.c.l.b16 %v3186
        %v3323 = vunpack.c.l.b16 %v3187
        %v3324 = vunpack.c.l.b16 %v3188
        %v3325 = vunpack.c.l.b16 %v3189
        %v3326 = vunpack.c.l.b16 %v3190
        %v3327 = vpack.c.b16 %v3312, %v3311
        %v3328 = vpack.c.b16 %v3314, %v3313
        %v3329 = vpack.c.b16 %v3316, %v3315
        %v3330 = vpack.c.b16 %v3318, %v3317
        %v3331 = vpack.c.b16 %v3320, %v3319
        %v3332 = vpack.c.b16 %v3322, %v3321
        %v3333 = vpack.c.b16 %v3324, %v3323
        %v3334 = vpack.c.b16 %v3326, %v3325
        %3343 = vmatprep.subr.bf16.mxu0 0
        %3344 = vmatpush1.bf16.msra.mxu0 %v3191
        %3345 = vmatprep.subr.bf16.mxu0 0
        %3346 = vmatpush1.bf16.msra.mxu0 %v3192
        %3347 = vmatprep.subr.bf16.mxu0 0
        %3348 = vmatpush1.bf16.msra.mxu0 %v3193
        %3349 = vmatprep.subr.bf16.mxu0 0
        %3350 = vmatpush1.bf16.msra.mxu0 %v3194
        %3351 = vmatprep.subr.bf16.mxu0 0
        %3352 = vmatpush1.bf16.msra.mxu0 %v3195
        %3353 = vmatprep.subr.bf16.mxu0 0
        %3354 = vmatpush1.bf16.msra.mxu0 %v3196
        %3355 = vmatprep.subr.bf16.mxu0 0
        %3356 = vmatpush1.bf16.msra.mxu0 %v3197
        %3357 = vmatprep.subr.bf16.mxu0 0
        %3358 = vmatpush1.bf16.msra.mxu0 %v3198
        %3359 = vmatprep.subr.bf16.mxu0 0
        %3360 = vmatpush1.bf16.msra.mxu0 0
        %3361 = vmatprep.subr.bf16.mxu0 0
        %3362 = vmatpush1.bf16.msra.mxu0 0
        %3363 = vmatprep.subr.bf16.mxu0 0
        %3364 = vmatpush1.bf16.msra.mxu0 0
        %3365 = vmatprep.subr.bf16.mxu0 0
        %3366 = vmatpush1.bf16.msra.mxu0 0
        %3367 = vmatprep.subr.bf16.mxu0 0
        %3368 = vmatpush1.bf16.msra.mxu0 0
        %3369 = vmatprep.subr.bf16.mxu0 0
        %3370 = vmatpush1.bf16.msra.mxu0 0
        %3371 = vmatprep.subr.bf16.mxu0 0
        %3372 = vmatpush1.bf16.msra.mxu0 0
        %3373 = vmatprep.subr.bf16.mxu0 0
        %3374 = vmatpush1.bf16.msra.mxu0 0
        %3375 = vmatprep.mubr.bf16.mxu0 0
        %3376 = vmatmul.mubr.bf16.gmra.mrb[0].mxu0 %v3327
        %v3377 = vpop.f32.mrb[0].mxu0
        %v3378 = vadd.f32 %v3218, %v3377
        %v3379 = vpop.f32.mrb[0].mxu0
        %v3380 = vpop.f32.mrb[0].mxu0
        %v3381 = vadd.f32 %v3223, %v3380
        %v3382 = vpop.f32.mrb[0].mxu0
        %3383 = vmatprep.mubr.bf16.mxu0 0
        %3384 = vmatmul.mubr.bf16.gmra.mrb[0].mxu0 %v3328
        %v3385 = vpop.f32.mrb[0].mxu0
        %v3386 = vadd.f32 %v3228, %v3385
        %v3387 = vpop.f32.mrb[0].mxu0
        %v3388 = vpop.f32.mrb[0].mxu0
        %v3389 = vadd.f32 %v3233, %v3388
        %v3390 = vpop.f32.mrb[0].mxu0
        %3391 = vmatprep.mubr.bf16.mxu0 0
        %3392 = vmatmul.mubr.bf16.gmra.mrb[0].mxu0 %v3329
        %v3393 = vpop.f32.mrb[0].mxu0
        %v3394 = vadd.f32 %v3238, %v3393
        %v3395 = vpop.f32.mrb[0].mxu0
        %v3396 = vpop.f32.mrb[0].mxu0
        %v3397 = vadd.f32 %v3243, %v3396
        %v3398 = vpop.f32.mrb[0].mxu0
        %3399 = vmatprep.mubr.bf16.mxu0 0
        %3400 = vmatmul.mubr.bf16.gmra.mrb[0].mxu0 %v3330
        %v3401 = vpop.f32.mrb[0].mxu0
        %v3402 = vadd.f32 %v3248, %v3401
        %v3403 = vpop.f32.mrb[0].mxu0
        %v3404 = vpop.f32.mrb[0].mxu0
        %v3405 = vadd.f32 %v3253, %v3404
        %v3406 = vpop.f32.mrb[0].mxu0
        %3407 = vmatprep.mubr.bf16.mxu0 0
        %3408 = vmatmul.mubr.bf16.gmra.mrb[0].mxu0 %v3331
        %v3409 = vpop.f32.mrb[0].mxu0
        %v3410 = vadd.f32 %v3258, %v3409
        %v3411 = vpop.f32.mrb[0].mxu0
        %v3412 = vpop.f32.mrb[0].mxu0
        %v3413 = vadd.f32 %v3263, %v3412
        %v3414 = vpop.f32.mrb[0].mxu0
        %3415 = vmatprep.mubr.bf16.mxu0 0
        %3416 = vmatmul.mubr.bf16.gmra.mrb[0].mxu0 %v3332
        %v3417 = vpop.f32.mrb[0].mxu0
        %v3418 = vadd.f32 %v3268, %v3417
        %v3419 = vpop.f32.mrb[0].mxu0
        %v3420 = vpop.f32.mrb[0].mxu0
        %v3421 = vadd.f32 %v3273, %v3420
        %v3422 = vpop.f32.mrb[0].mxu0
        %3423 = vmatprep.mubr.bf16.mxu0 0
        %3424 = vmatmul.mubr.bf16.gmra.mrb[0].mxu0 %v3333
        %v3425 = vpop.f32.mrb[0].mxu0
        %v3426 = vadd.f32 %v3278, %v3425
        %v3427 = vpop.f32.mrb[0].mxu0
        %v3428 = vpop.f32.mrb[0].mxu0
        %v3429 = vadd.f32 %v3283, %v3428
        %v3430 = vpop.f32.mrb[0].mxu0
        %3431 = vmatprep.mubr.bf16.mxu0 0
        %3432 = vmatmul.mubr.bf16.gmra.mrb[0].mxu0 %v3334
        %v3433 = vpop.f32.mrb[0].mxu0
        %v3434 = vadd.f32 %v3288, %v3433
        %v3435 = vpop.f32.mrb[0].mxu0
        %v3436 = vpop.f32.mrb[0].mxu0
        %v3437 = vadd.f32 %v3293, %v3436
        %v3438 = vpop.f32.mrb[0].mxu0
        %3439 = vdwg.mxu0
        %v3440 = vmax.f32 %v3378, 0.0
        %v3441 = vmax.f32 %v3381, 0.0
        %v3442 = vmax.f32 %v3386, 0.0
        %v3443 = vmax.f32 %v3389, 0.0
        %v3444 = vmax.f32 %v3394, 0.0
        %v3445 = vmax.f32 %v3397, 0.0
        %v3446 = vmax.f32 %v3402, 0.0
        %v3447 = vmax.f32 %v3405, 0.0
        %v3448 = vmax.f32 %v3410, 0.0
        %v3449 = vmax.f32 %v3413, 0.0
        %v3450 = vmax.f32 %v3418, 0.0
        %v3451 = vmax.f32 %v3421, 0.0
        %v3452 = vmax.f32 %v3426, 0.0
        %v3453 = vmax.f32 %v3429, 0.0
        %v3454 = vmax.f32 %v3434, 0.0
        %v3455 = vmax.f32 %v3437, 0.0
        %v3456 = vld [vmem:[%s6] sm:$0xf]
        %v3457 = vld [vmem:[%s6 + $0x4] sm:$0xf]
        %v3458 = vld [vmem:[%s6 + $0x8] sm:$0xf]
        %v3459 = vld [vmem:[%s6 + $0xc] sm:$0xf]
        %v3460 = vld [vmem:[%s6 + $0x10] sm:$0xf]
        %v3461 = vld [vmem:[%s6 + $0x14] sm:$0xf]
        %v3462 = vld [vmem:[%s6 + $0x18] sm:$0xf]
        %v3463 = vld [vmem:[%s6 + $0x1c] sm:$0xf]
        %v3464 = vld [vmem:[%s6 + $0x20] sm:$0xf]
        %v3465 = vld [vmem:[%s6 + $0x24] sm:$0xf]
        %v3466 = vld [vmem:[%s6 + $0x28] sm:$0xf]
        %v3467 = vld [vmem:[%s6 + $0x2c] sm:$0xf]
        %v3468 = vld [vmem:[%s6 + $0x30] sm:$0xf]
        %v3469 = vld [vmem:[%s6 + $0x34] sm:$0xf]
        %v3470 = vld [vmem:[%s6 + $0x38] sm:$0xf]
        %v3471 = vld [vmem:[%s6 + $0x3c] sm:$0xf]
        %v3472 = vpack.c.bf16 %v3441, %v3440
        %v3473 = vpack.c.bf16 %v3443, %v3442
        %v3474 = vpack.c.bf16 %v3445, %v3444
        %v3475 = vpack.c.bf16 %v3447, %v3446
        %v3476 = vpack.c.bf16 %v3449, %v3448
        %v3477 = vpack.c.bf16 %v3451, %v3450
        %v3478 = vpack.c.bf16 %v3453, %v3452
        %v3479 = vpack.c.bf16 %v3455, %v3454
        %v3480 = vld [vmem:[%s7] sm:$0xff]
        %v3481 = vld [vmem:[%s7 + $0x8] sm:$0xff]
        %v3482 = vld [vmem:[%s7 + $0x10] sm:$0xff]
        %v3483 = vld [vmem:[%s7 + $0x18] sm:$0xff]
        %v3484 = vld [vmem:[%s7 + $0x20] sm:$0xff]
        %v3485 = vld [vmem:[%s7 + $0x28] sm:$0xff]
        %v3486 = vld [vmem:[%s7 + $0x30] sm:$0xff]
        %v3487 = vld [vmem:[%s7 + $0x38] sm:$0xff]
        %v3488 = vld [vmem:[%s7 + $0x40] sm:$0xff]
        %v3489 = vld [vmem:[%s7 + $0x48] sm:$0xff]
        %v3490 = vld [vmem:[%s7 + $0x50] sm:$0xff]
        %v3491 = vld [vmem:[%s7 + $0x58] sm:$0xff]
        %v3492 = vld [vmem:[%s7 + $0x60] sm:$0xff]
        %v3493 = vld [vmem:[%s7 + $0x68] sm:$0xff]
        %v3494 = vld [vmem:[%s7 + $0x70] sm:$0xff]
        %v3495 = vld [vmem:[%s7 + $0x78] sm:$0xff]
        %3497 = vset.pattern.permute.xlu0 0
        %3498 = vperm.xlu0 %3497, %v3480
        %v3499 = vpop.permute.xlu0 %3498
        %3502 = vset.pattern.permute.xlu0 0
        %3503 = vperm.xlu0 %3502, %v3481
        %v3504 = vpop.permute.xlu0 %3503
        %3507 = vset.pattern.permute.xlu0 0
        %3508 = vperm.xlu0 %3507, %v3482
        %v3509 = vpop.permute.xlu0 %3508
        %3512 = vset.pattern.permute.xlu0 0
        %3513 = vperm.xlu0 %3512, %v3483
        %v3514 = vpop.permute.xlu0 %3513
        %3517 = vset.pattern.permute.xlu0 0
        %3518 = vperm.xlu0 %3517, %v3484
        %v3519 = vpop.permute.xlu0 %3518
        %3522 = vset.pattern.permute.xlu0 0
        %3523 = vperm.xlu0 %3522, %v3485
        %v3524 = vpop.permute.xlu0 %3523
        %3527 = vset.pattern.permute.xlu0 0
        %3528 = vperm.xlu0 %3527, %v3486
        %v3529 = vpop.permute.xlu0 %3528
        %3532 = vset.pattern.permute.xlu0 0
        %3533 = vperm.xlu0 %3532, %v3487
        %v3534 = vpop.permute.xlu0 %3533
        %3537 = vset.pattern.permute.xlu0 0
        %3538 = vperm.xlu0 %3537, %v3488
        %v3539 = vpop.permute.xlu0 %3538
        %3542 = vset.pattern.permute.xlu0 0
        %3543 = vperm.xlu0 %3542, %v3489
        %v3544 = vpop.permute.xlu0 %3543
        %3547 = vset.pattern.permute.xlu0 0
        %3548 = vperm.xlu0 %3547, %v3490
        %v3549 = vpop.permute.xlu0 %3548
        %3552 = vset.pattern.permute.xlu0 0
        %3553 = vperm.xlu0 %3552, %v3491
        %v3554 = vpop.permute.xlu0 %3553
        %3557 = vset.pattern.permute.xlu0 0
        %3558 = vperm.xlu0 %3557, %v3492
        %v3559 = vpop.permute.xlu0 %3558
        %3562 = vset.pattern.permute.xlu0 0
        %3563 = vperm.xlu0 %3562, %v3493
        %v3564 = vpop.permute.xlu0 %3563
        %3567 = vset.pattern.permute.xlu0 0
        %3568 = vperm.xlu0 %3567, %v3494
        %v3569 = vpop.permute.xlu0 %3568
        %3572 = vset.pattern.permute.xlu0 0
        %3573 = vperm.xlu0 %3572, %v3495
        %v3574 = vpop.permute.xlu0 %3573
        %v3592 = vunpack.c.l.b16 %v3456
        %v3593 = vunpack.c.l.b16 %v3457
        %v3594 = vunpack.c.l.b16 %v3458
        %v3595 = vunpack.c.l.b16 %v3459
        %v3596 = vunpack.c.l.b16 %v3460
        %v3597 = vunpack.c.l.b16 %v3461
        %v3598 = vunpack.c.l.b16 %v3462
        %v3599 = vunpack.c.l.b16 %v3463
        %v3600 = vunpack.c.l.b16 %v3464
        %v3601 = vunpack.c.l.b16 %v3465
        %v3602 = vunpack.c.l.b16 %v3466
        %v3603 = vunpack.c.l.b16 %v3467
        %v3604 = vunpack.c.l.b16 %v3468
        %v3605 = vunpack.c.l.b16 %v3469
        %v3606 = vunpack.c.l.b16 %v3470
        %v3607 = vunpack.c.l.b16 %v3471
        %v3608 = vpack.c.b16 %v3593, %v3592
        %v3609 = vpack.c.b16 %v3595, %v3594
        %v3610 = vpack.c.b16 %v3597, %v3596
        %v3611 = vpack.c.b16 %v3599, %v3598
        %v3612 = vpack.c.b16 %v3601, %v3600
        %v3613 = vpack.c.b16 %v3603, %v3602
        %v3614 = vpack.c.b16 %v3605, %v3604
        %v3615 = vpack.c.b16 %v3607, %v3606
        %3624 = vmatprep.subr.bf16.mxu0 0
        %3625 = vmatpush1.bf16.msra.mxu0 %v3472
        %3626 = vmatprep.subr.bf16.mxu0 0
        %3627 = vmatpush1.bf16.msra.mxu0 %v3473
        %3628 = vmatprep.subr.bf16.mxu0 0
        %3629 = vmatpush1.bf16.msra.mxu0 %v3474
        %3630 = vmatprep.subr.bf16.mxu0 0
        %3631 = vmatpush1.bf16.msra.mxu0 %v3475
        %3632 = vmatprep.subr.bf16.mxu0 0
        %3633 = vmatpush1.bf16.msra.mxu0 %v3476
        %3634 = vmatprep.subr.bf16.mxu0 0
        %3635 = vmatpush1.bf16.msra.mxu0 %v3477
        %3636 = vmatprep.subr.bf16.mxu0 0
        %3637 = vmatpush1.bf16.msra.mxu0 %v3478
        %3638 = vmatprep.subr.bf16.mxu0 0
        %3639 = vmatpush1.bf16.msra.mxu0 %v3479
        %3640 = vmatprep.subr.bf16.mxu0 0
        %3641 = vmatpush1.bf16.msra.mxu0 0
        %3642 = vmatprep.subr.bf16.mxu0 0
        %3643 = vmatpush1.bf16.msra.mxu0 0
        %3644 = vmatprep.subr.bf16.mxu0 0
        %3645 = vmatpush1.bf16.msra.mxu0 0
        %3646 = vmatprep.subr.bf16.mxu0 0
        %3647 = vmatpush1.bf16.msra.mxu0 0
        %3648 = vmatprep.subr.bf16.mxu0 0
        %3649 = vmatpush1.bf16.msra.mxu0 0
        %3650 = vmatprep.subr.bf16.mxu0 0
        %3651 = vmatpush1.bf16.msra.mxu0 0
        %3652 = vmatprep.subr.bf16.mxu0 0
        %3653 = vmatpush1.bf16.msra.mxu0 0
        %3654 = vmatprep.subr.bf16.mxu0 0
        %3655 = vmatpush1.bf16.msra.mxu0 0
        %3656 = vmatprep.mubr.bf16.mxu0 0
        %3657 = vmatmul.mubr.bf16.gmra.mrb[0].mxu0 %v3608
        %v3658 = vpop.f32.mrb[0].mxu0
        %v3659 = vadd.f32 %v3499, %v3658
        %v3660 = vpop.f32.mrb[0].mxu0
        %v3661 = vpop.f32.mrb[0].mxu0
        %v3662 = vadd.f32 %v3504, %v3661
        %v3663 = vpop.f32.mrb[0].mxu0
        %3664 = vmatprep.mubr.bf16.mxu0 0
        %3665 = vmatmul.mubr.bf16.gmra.mrb[0].mxu0 %v3609
        %v3666 = vpop.f32.mrb[0].mxu0
        %v3667 = vadd.f32 %v3509, %v3666
        %v3668 = vpop.f32.mrb[0].mxu0
        %v3669 = vpop.f32.mrb[0].mxu0
        %v3670 = vadd.f32 %v3514, %v3669
        %v3671 = vpop.f32.mrb[0].mxu0
        %3672 = vmatprep.mubr.bf16.mxu0 0
        %3673 = vmatmul.mubr.bf16.gmra.mrb[0].mxu0 %v3610
        %v3674 = vpop.f32.mrb[0].mxu0
        %v3675 = vadd.f32 %v3519, %v3674
        %v3676 = vpop.f32.mrb[0].mxu0
        %v3677 = vpop.f32.mrb[0].mxu0
        %v3678 = vadd.f32 %v3524, %v3677
        %v3679 = vpop.f32.mrb[0].mxu0
        %3680 = vmatprep.mubr.bf16.mxu0 0
        %3681 = vmatmul.mubr.bf16.gmra.mrb[0].mxu0 %v3611
        %v3682 = vpop.f32.mrb[0].mxu0
        %v3683 = vadd.f32 %v3529, %v3682
        %v3684 = vpop.f32.mrb[0].mxu0
        %v3685 = vpop.f32.mrb[0].mxu0
        %v3686 = vadd.f32 %v3534, %v3685
        %v3687 = vpop.f32.mrb[0].mxu0
        %3688 = vmatprep.mubr.bf16.mxu0 0
        %3689 = vmatmul.mubr.bf16.gmra.mrb[0].mxu0 %v3612
        %v3690 = vpop.f32.mrb[0].mxu0
        %v3691 = vadd.f32 %v3539, %v3690
        %v3692 = vpop.f32.mrb[0].mxu0
        %v3693 = vpop.f32.mrb[0].mxu0
        %v3694 = vadd.f32 %v3544, %v3693
        %v3695 = vpop.f32.mrb[0].mxu0
        %3696 = vmatprep.mubr.bf16.mxu0 0
        %3697 = vmatmul.mubr.bf16.gmra.mrb[0].mxu0 %v3613
        %v3698 = vpop.f32.mrb[0].mxu0
        %v3699 = vadd.f32 %v3549, %v3698
        %v3700 = vpop.f32.mrb[0].mxu0
        %v3701 = vpop.f32.mrb[0].mxu0
        %v3702 = vadd.f32 %v3554, %v3701
        %v3703 = vpop.f32.mrb[0].mxu0
        %3704 = vmatprep.mubr.bf16.mxu0 0
        %3705 = vmatmul.mubr.bf16.gmra.mrb[0].mxu0 %v3614
        %v3706 = vpop.f32.mrb[0].mxu0
        %v3707 = vadd.f32 %v3559, %v3706
        %v3708 = vpop.f32.mrb[0].mxu0
        %v3709 = vpop.f32.mrb[0].mxu0
        %v3710 = vadd.f32 %v3564, %v3709
        %v3711 = vpop.f32.mrb[0].mxu0
        %3712 = vmatprep.mubr.bf16.mxu0 0
        %3713 = vmatmul.mubr.bf16.gmra.mrb[0].mxu0 %v3615
        %v3714 = vpop.f32.mrb[0].mxu0
        %v3715 = vadd.f32 %v3569, %v3714
        %v3716 = vpop.f32.mrb[0].mxu0
        %v3717 = vpop.f32.mrb[0].mxu0
        %v3718 = vadd.f32 %v3574, %v3717
        %v3719 = vpop.f32.mrb[0].mxu0
        %3720 = vdwg.mxu0
        %v3721 = vmax.f32 %v3659, 0.0
        %v3722 = vmax.f32 %v3662, 0.0
        %v3723 = vmax.f32 %v3667, 0.0
        %v3724 = vmax.f32 %v3670, 0.0
        %v3725 = vmax.f32 %v3675, 0.0
        %v3726 = vmax.f32 %v3678, 0.0
        %v3727 = vmax.f32 %v3683, 0.0
        %v3728 = vmax.f32 %v3686, 0.0
        %v3729 = vmax.f32 %v3691, 0.0
        %v3730 = vmax.f32 %v3694, 0.0
        %v3731 = vmax.f32 %v3699, 0.0
        %v3732 = vmax.f32 %v3702, 0.0
        %v3733 = vmax.f32 %v3707, 0.0
        %v3734 = vmax.f32 %v3710, 0.0
        %v3735 = vmax.f32 %v3715, 0.0
        %v3736 = vmax.f32 %v3718, 0.0
        %v3737 = vld [vmem:[%s8] sm:$0xff]
        %v3738 = vld [vmem:[%s8 + $0x8] sm:$0xff]
        %v3739 = vld [vmem:[%s8 + $0x10] sm:$0xff]
        %v3740 = vld [vmem:[%s8 + $0x18] sm:$0xff]
        %v3741 = vld [vmem:[%s8 + $0x20] sm:$0xff]
        %v3742 = vld [vmem:[%s8 + $0x28] sm:$0xff]
        %v3743 = vld [vmem:[%s8 + $0x30] sm:$0xff]
        %v3744 = vld [vmem:[%s8 + $0x38] sm:$0xff]
        %v3745 = vld [vmem:[%s8 + $0x40] sm:$0xff]
        %v3746 = vld [vmem:[%s8 + $0x48] sm:$0xff]
        %v3747 = vld [vmem:[%s8 + $0x50] sm:$0xff]
        %v3748 = vld [vmem:[%s8 + $0x58] sm:$0xff]
        %v3749 = vld [vmem:[%s8 + $0x60] sm:$0xff]
        %v3750 = vld [vmem:[%s8 + $0x68] sm:$0xff]
        %v3751 = vld [vmem:[%s8 + $0x70] sm:$0xff]
        %v3752 = vld [vmem:[%s8 + $0x78] sm:$0xff]
        %3754 = vset.pattern.permute.xlu0 0
        %3755 = vperm.xlu0 %3754, %v3737
        %v3756 = vpop.permute.xlu0 %3755
        %3759 = vset.pattern.permute.xlu0 0
        %3760 = vperm.xlu0 %3759, %v3738
        %v3761 = vpop.permute.xlu0 %3760
        %3764 = vset.pattern.permute.xlu0 0
        %3765 = vperm.xlu0 %3764, %v3739
        %v3766 = vpop.permute.xlu0 %3765
        %3769 = vset.pattern.permute.xlu0 0
        %3770 = vperm.xlu0 %3769, %v3740
        %v3771 = vpop.permute.xlu0 %3770
        %3774 = vset.pattern.permute.xlu0 0
        %3775 = vperm.xlu0 %3774, %v3741
        %v3776 = vpop.permute.xlu0 %3775
        %3779 = vset.pattern.permute.xlu0 0
        %3780 = vperm.xlu0 %3779, %v3742
        %v3781 = vpop.permute.xlu0 %3780
        %3784 = vset.pattern.permute.xlu0 0
        %3785 = vperm.xlu0 %3784, %v3743
        %v3786 = vpop.permute.xlu0 %3785
        %3789 = vset.pattern.permute.xlu0 0
        %3790 = vperm.xlu0 %3789, %v3744
        %v3791 = vpop.permute.xlu0 %3790
        %3794 = vset.pattern.permute.xlu0 0
        %3795 = vperm.xlu0 %3794, %v3745
        %v3796 = vpop.permute.xlu0 %3795
        %3799 = vset.pattern.permute.xlu0 0
        %3800 = vperm.xlu0 %3799, %v3746
        %v3801 = vpop.permute.xlu0 %3800
        %3804 = vset.pattern.permute.xlu0 0
        %3805 = vperm.xlu0 %3804, %v3747
        %v3806 = vpop.permute.xlu0 %3805
        %3809 = vset.pattern.permute.xlu0 0
        %3810 = vperm.xlu0 %3809, %v3748
        %v3811 = vpop.permute.xlu0 %3810
        %3814 = vset.pattern.permute.xlu0 0
        %3815 = vperm.xlu0 %3814, %v3749
        %v3816 = vpop.permute.xlu0 %3815
        %3819 = vset.pattern.permute.xlu0 0
        %3820 = vperm.xlu0 %3819, %v3750
        %v3821 = vpop.permute.xlu0 %3820
        %3824 = vset.pattern.permute.xlu0 0
        %3825 = vperm.xlu0 %3824, %v3751
        %v3826 = vpop.permute.xlu0 %3825
        %3829 = vset.pattern.permute.xlu0 0
        %3830 = vperm.xlu0 %3829, %v3752
        %v3831 = vpop.permute.xlu0 %3830
        %v3833 = vmul.f32 %v3721, %v3756
        %v3834 = vmul.f32 %v3722, %v3761
        %v3835 = vmul.f32 %v3723, %v3766
        %v3836 = vmul.f32 %v3724, %v3771
        %v3837 = vmul.f32 %v3725, %v3776
        %v3838 = vmul.f32 %v3726, %v3781
        %v3839 = vmul.f32 %v3727, %v3786
        %v3840 = vmul.f32 %v3728, %v3791
        %v3841 = vmul.f32 %v3729, %v3796
        %v3842 = vmul.f32 %v3730, %v3801
        %v3843 = vmul.f32 %v3731, %v3806
        %v3844 = vmul.f32 %v3732, %v3811
        %v3845 = vmul.f32 %v3733, %v3816
        %v3846 = vmul.f32 %v3734, %v3821
        %v3847 = vmul.f32 %v3735, %v3826
        %v3848 = vmul.f32 %v3736, %v3831
        %v3849 = vadd.f32 %v3833, %v3834
        %v3850 = vadd.f32 %v3849, %v3835
        %v3851 = vadd.f32 %v3850, %v3836
        %v3852 = vadd.f32 %v3851, %v3837
        %v3853 = vadd.f32 %v3852, %v3838
        %v3854 = vadd.f32 %v3853, %v3839
        %v3855 = vadd.f32 %v3854, %v3840
        %v3856 = vadd.f32 %v3855, %v3841
        %v3857 = vadd.f32 %v3856, %v3842
        %v3858 = vadd.f32 %v3857, %v3843
        %v3859 = vadd.f32 %v3858, %v3844
        %v3860 = vadd.f32 %v3859, %v3845
        %v3861 = vadd.f32 %v3860, %v3846
        %v3862 = vadd.f32 %v3861, %v3847
        %v3863 = vadd.f32 %v3862, %v3848
        %v3864 = vrot.slane %v3863, 4
        %v3865 = vadd.f32 %v3863, %v3864
        %v3866 = vrot.slane %v3865, 2
        %v3867 = vadd.f32 %v3865, %v3866
        %v3868 = vrot.slane %v3867, 1
        %v3869 = vadd.f32 %v3867, %v3868
        %s3870 = sld [smem:[#allocation2]]
        %v3871 = vstv %s3870
        %v3872 = vadd.f32 %v3869, %v3871
        %v3873 = vxor.u32 %v3872, 2147483648
        %v3874 = vmul.f32 %v3873, 1.442695
        %v3875 = vpow.pop %v3874
        %v3876 = vadd.f32 %v3875, 1.0
        %v3877 = vrcp.pop %v3876
        %v3878 = vmul.f32 1.0, %v3877
        %3879 = vst [vmem:[%s516] sm:$0x1] %v3878
        %s3880 = sand.u32 %s253, 1
        %s3881 = scalar_lea.sflag [#allocation6], %s3880
        %s3882 = sand.u32 %s253, 1
        %s3883 = scalar_lea.vmem [#allocation5], %s3882
        // Predicated region
        $region140: #{tpu_custom_call.1} parent=130 // pred_check
          %p3884 = pneg %p263
        $region141: #{tpu_custom_call.1} parent=130 // pred_check_branch
          %3886 = sbr.rel (%p3884) target = $region143
        $region142: #{tpu_custom_call.1} parent=130 // pred_region
          %s3888 = ssub.s32 16, 16
          %3889 = vsyncadd %s3881, %s3888
          %s3890 = smul.addr %s25, 16
          %s3891 = scalar_lea.hbm %s10, %s3890
          %s3893 = sshll.u32 %s3883, 4
          %s3894 = int_to_ptr.vmem [resolvable:$true] %s3893
          %3896 = dma.vmem_to_hbm [thread:$0]  %s3894, 16, %s3891, %s3881
        $region143: #{tpu_custom_call.1} parent=130 // pred_fallthru
          _
      $region131: #{tpu_custom_call.1} parent=5 // pred_fallthru
        _
      %p3897 = scmp.le.s32.totalorder 2, %s20
      // Predicated region
      $region144: #{tpu_custom_call.1} parent=5 // pred_check
        %p3898 = pneg %p3897
      $region145: #{tpu_custom_call.1} parent=5 // pred_check_branch
        %3900 = sbr.rel (%p3898) target = $region147
      $region146: #{tpu_custom_call.1} parent=5 // pred_region
        %s3901 = ssub.s32 %s20, 2
        // Predicated region
        $region148: #{tpu_custom_call.1} parent=146 // pred_check
          %p3902 = pneg %p269
        $region149: #{tpu_custom_call.1} parent=146 // pred_check_branch
          %3904 = sbr.rel (%p3902) target = $region151
        $region150: #{tpu_custom_call.1} parent=146 // pred_region
          %s3905 = sand.u32 %s254, 1
          %s3906 = scalar_lea.sflag [#allocation6], %s3905
          %s3907 = sand.u32 %s254, 1
          %s3908 = scalar_lea.vmem [#allocation5], %s3907
          %3909 = dma.done %s3906, 16
        $region151: #{tpu_custom_call.1} parent=146 // pred_fallthru
          _
      $region147: #{tpu_custom_call.1} parent=5 // pred_fallthru
        _
    $region6: #{tpu_custom_call.1} parent=1 // loop_footer
      %s24 = sadd.s32 1, %s20
    $region7: #{tpu_custom_call.1} parent=1 // loop_footer_branch
      %19 = sbr.rel target = $region3
    $region8: #{tpu_custom_call.1} parent=1 // loop_exit
      _
    %3910 = vsyncpa [#allocation6], 1
    %s3911 = scalar_lea.sflag [#allocation6], 1
    %3912 = vsyncpa %s3911, 1

</llo_original>
